<compile_context>
chip_gen: v7x
topology: tpu7x:2x2x1
jax: 0.10.0
libtpu: 0.0.40
codegen_flags: <defaults>
</compile_context>

<pallas_src>
import functools

import jax
import jax.numpy as jnp
import numpy as np
from jax import lax
from jax.experimental import pallas as pl
from jax.experimental.pallas import tpu as pltpu


# ----------------------------- tiling constants ------------------------------

LANE = 128   # feature dim padded to a multiple of this
TM = 256     # node-row tile (fills the 256x256 MXU on v6e/v7x)
TE = 256     # edge-row tile


def _ceil_to(x, m):
    return (x + m - 1) // m * m


def _pad2d(a, rows, cols):
    return jnp.pad(a, ((0, rows - a.shape[0]), (0, cols - a.shape[1])))


def _pad1d(a, n):
    return jnp.pad(a, (0, n - a.shape[0]))


# ----------------------------- Pallas kernel ---------------------------------

def _gin_layer_kernel(ts_ref, tc_ref, hvs_ref, ldst_ref, msg_ref,
                      w1_ref, b1_ref, w2_ref, b2_ref,
                      h_out_ref, acc_sc, *, relu_out):
    """Fused GIN layer for one node tile.

    grid = (node_tiles i ["parallel"], edge_tiles j ["arbitrary"/reduction]).
    j runs only over this node tile's own bucketed edge tiles (data-dependent
    index_map via scalar-prefetched offsets ts / counts tc).  The scatter-add
    is a one-hot matmul whose one-hot is built in-kernel from int32 local
    destination indices (no dense (N, E) matrix in HBM).
    """
    i = pl.program_id(0)
    j = pl.program_id(1)

    @pl.when(j == 0)
    def _():
        # (1 + eps) * (h + vne[batch])  -- precomputed/folded in the wrapper
        acc_sc[...] = hvs_ref[...]

    @pl.when(j < tc_ref[i])
    def _():
        msg = jnp.maximum(msg_ref[...], 0.0)                 # relu(x_src + bond), bf16
        ld_blk = ldst_ref[...]                               # (1, 8, TE) int32
        ld = ld_blk[0, 0:1, :]                               # (1, TE) local dst in [0, TM)
        rows = lax.broadcasted_iota(jnp.int32, (TM, TE), 0)  # (TM, TE)
        onehot = (ld == rows).astype(jnp.bfloat16)           # exact 0/1 in bf16
        acc_sc[...] += jnp.dot(onehot, msg,
                               preferred_element_type=jnp.float32)

    @pl.when(j == pl.num_programs(1) - 1)
    def _():
        # GIN MLP with both BatchNorms (eval) folded into w/b, then optional relu.
        t = jnp.dot(acc_sc[...], w1_ref[...],
                    preferred_element_type=jnp.float32) + b1_ref[...]
        t = jnp.maximum(t, 0.0)
        y = jnp.dot(t, w2_ref[...],
                    preferred_element_type=jnp.float32) + b2_ref[...]
        if relu_out:
            y = jnp.maximum(y, 0.0)
        h_out_ref[...] = y


# ----------------------------- Pallas wrapper ---------------------------------

def gin_layer(hv_scaled_p, ldst_buf, msg_buf, tile_start, tile_count,
              w1f_p, b1f_p, w2f_p, b2f_p, *, relu_out, nj_grid):
    Np, Dp = hv_scaled_p.shape
    ni = Np // TM
    nj_total = ldst_buf.shape[0]

    def _edge_tile(i, j, ts, tc):
        # clamp so padded / skipped iterations never index out of bounds
        t = ts[i] + jnp.minimum(j, jnp.maximum(tc[i] - 1, 0))
        return jnp.minimum(t, nj_total - 1)

    grid_spec = pltpu.PrefetchScalarGridSpec(
        num_scalar_prefetch=2,                      # tile_start, tile_count -> SMEM
        grid=(ni, nj_grid),
        in_specs=[
            pl.BlockSpec((TM, Dp), lambda i, j, ts, tc: (i, 0)),                 # (1+eps)*hv
            pl.BlockSpec((1, 8, TE),
                         lambda i, j, ts, tc: (_edge_tile(i, j, ts, tc), 0, 0)),  # local dst
            pl.BlockSpec((TE, Dp),
                         lambda i, j, ts, tc: (_edge_tile(i, j, ts, tc), 0)),     # messages (bf16)
            pl.BlockSpec((Dp, Dp), lambda i, j, ts, tc: (0, 0)),                  # w1 (BN folded)
            pl.BlockSpec((1, Dp), lambda i, j, ts, tc: (0, 0)),                   # b1
            pl.BlockSpec((Dp, Dp), lambda i, j, ts, tc: (0, 0)),                  # w2 (BN folded)
            pl.BlockSpec((1, Dp), lambda i, j, ts, tc: (0, 0)),                   # b2
        ],
        out_specs=pl.BlockSpec((TM, Dp), lambda i, j, ts, tc: (i, 0)),
        scratch_shapes=[pltpu.VMEM((TM, Dp), jnp.float32)],
    )
    return pl.pallas_call(
        functools.partial(_gin_layer_kernel, relu_out=relu_out),
        grid_spec=grid_spec,
        out_shape=jax.ShapeDtypeStruct((Np, Dp), jnp.float32),
        compiler_params=pltpu.CompilerParams(
            dimension_semantics=("parallel", "arbitrary")),
    )(tile_start, tile_count, hv_scaled_p, ldst_buf, msg_buf,
      w1f_p, b1f_p, w2f_p, b2f_p)


# ----------------------------- edge bucketing (glue, once per call) ------------

def _bucket_edges(dst, src, N, E, ni):
    """Sort edges by destination node tile and lay them out in a compact,
    per-tile-padded slot buffer.  Returns SMEM offset/count tables and per-slot
    source-node / edge indices plus local-destination indices."""
    nj_total = (E + TE - 1) // TE + ni          # static upper bound on used tiles
    ns = nj_total * TE

    dst_tile = dst // TM                                        # (E,)
    order = jnp.argsort(dst_tile).astype(jnp.int32)
    counts = jax.ops.segment_sum(jnp.ones((E,), jnp.int32), dst_tile,
                                 num_segments=ni)               # (ni,)
    tiles_per = (counts + TE - 1) // TE
    tile_start = (jnp.cumsum(tiles_per) - tiles_per).astype(jnp.int32)
    row_start = jnp.cumsum(counts) - counts

    sorted_tile = dst_tile[order]
    rank = jnp.arange(E, dtype=jnp.int32) - row_start[sorted_tile]
    pos = tile_start[sorted_tile] * TE + rank                   # slot per edge

    src_slot = jnp.full((ns,), N, jnp.int32).at[pos].set(src[order])   # pad -> zero row
    eid_slot = jnp.full((ns,), E, jnp.int32).at[pos].set(order)        # pad -> zero row
    local_dst = dst[order] - sorted_tile * TM
    ldst_flat = jnp.zeros((ns,), jnp.int32).at[pos].set(local_dst)
    ldst_buf = jnp.broadcast_to(ldst_flat.reshape(nj_total, 1, TE),
                                (nj_total, 8, TE))
    return (tile_start, tiles_per.astype(jnp.int32),
            src_slot, eid_slot, ldst_buf, nj_total)


# ----------------------------- BN folding helpers -----------------------------

def _bn_scale_shift(gamma, beta, mean=0.0, var=1.0, eps=1e-5):
    # BatchNorm1d eval with running stats (assumed mean=0, var=1 here).
    scale = gamma / jnp.sqrt(var + eps)
    shift = beta - mean * scale
    return scale, shift


def _fold_linear_bn(w, b, scale, shift):
    # BN(x @ w + b) == x @ (w * scale) + (b * scale + shift)
    return w * scale[None, :], b * scale + shift


# ----------------------------- parameters -------------------------------------

def init_params(key, emb_dim, num_layers, num_atom_feats, atom_vocab,
                num_bond_feats, bond_vocab):
    state = {"key": key}

    def dense(shape, scale=0.1):
        state["key"], sub = jax.random.split(state["key"])
        return scale * jax.random.normal(sub, shape, jnp.float32)

    D = emb_dim
    params = {
        "atom_emb": dense((num_atom_feats, atom_vocab, D)),
        "vn_emb": jnp.zeros((1, D), jnp.float32),   # init constant 0 (as in ref)
        "convs": [],
        "batch_norms": [],
        "vn_mlps": [],
    }
    for _ in range(num_layers):
        params["convs"].append({
            "bond_emb": dense((num_bond_feats, bond_vocab, D)),
            "eps": jnp.zeros((1,), jnp.float32),            # GIN eps init 0
            "w1": dense((D, D)), "b1": dense((D,)),
            "bn_gamma": 1.0 + dense((D,)), "bn_beta": dense((D,)),
            "w2": dense((D, D)), "b2": dense((D,)),
        })
        params["batch_norms"].append({
            "gamma": 1.0 + dense((D,)), "beta": dense((D,)),
        })
    for _ in range(num_layers - 1):
        params["vn_mlps"].append({
            "w1": dense((D, D)), "b1": dense((D,)),
            "bn1_gamma": 1.0 + dense((D,)), "bn1_beta": dense((D,)),
            "w2": dense((D, D)), "b2": dense((D,)),
            "bn2_gamma": 1.0 + dense((D,)), "bn2_beta": dense((D,)),
        })
    return params


# ----------------------------- forward pass ------------------------------------

def gnn_node_virtualnode_forward(params, x_feat, edge_index, edge_attr, batch,
                                 num_graphs, num_layers, residual=False,
                                 JK="last", max_edge_tiles=None):
    hp = lax.Precision.HIGHEST
    D = params["atom_emb"].shape[-1]
    N = x_feat.shape[0]
    E = edge_attr.shape[0]

    Dp = _ceil_to(D, LANE)
    Np = _ceil_to(N, TM)
    ni = Np // TM
    # static bound on edge tiles per node tile (like max_seqlen in attention)
    if max_edge_tiles is not None:
        nj_grid = max(1, int(max_edge_tiles))
    else:
        nj_grid = max(1, (E + TE - 1) // TE)

    src, dst = edge_index[0], edge_index[1]
    (tile_start, tile_count, src_slot, eid_slot, ldst_buf, _) = \
        _bucket_edges(dst, src, N, E, ni)

    # ---- AtomEncoder (embedding gathers = glue) ----
    h = jnp.zeros((N, D), jnp.float32)
    for f in range(x_feat.shape[1]):
        h = h + params["atom_emb"][f][x_feat[:, f]]

    vne = jnp.broadcast_to(params["vn_emb"], (num_graphs, D))   # starts at zero
    h_cur = h
    sum_acc = jnp.zeros((N, D), jnp.float32) if JK == "sum" else None

    for layer in range(num_layers):
        cp = params["convs"][layer]

        # h_list[layer] = h + virtualnode_embedding[batch]  (cheap XLA gather/add)
        hv = h_cur + vne[batch]                                  # (N, D)

        # ---- BondEncoder (glue) + per-slot messages (edge path read once) ----
        e_emb = jnp.zeros((E, D), jnp.float32)
        for f in range(edge_attr.shape[1]):
            e_emb = e_emb + cp["bond_emb"][f][edge_attr[:, f]]
        hv_ext = jnp.concatenate([hv, jnp.zeros((1, D), jnp.float32)], axis=0)
        ee_ext = jnp.concatenate([e_emb, jnp.zeros((1, D), jnp.float32)], axis=0)
        msg = hv_ext[src_slot] + ee_ext[eid_slot]                # (NS, D); pads -> 0
        msg_buf = _pad2d(msg, msg.shape[0], Dp).astype(jnp.bfloat16)

        # ---- fold BatchNorms (eval) into the linear weights, pad to lanes ----
        sc1, sh1 = _bn_scale_shift(cp["bn_gamma"], cp["bn_beta"])
        w1f, b1f = _fold_linear_bn(cp["w1"], cp["b1"], sc1, sh1)
        bn = params["batch_norms"][layer]
        sc2, sh2 = _bn_scale_shift(bn["gamma"], bn["beta"])
        w2f, b2f = _fold_linear_bn(cp["w2"], cp["b2"], sc2, sh2)

        hv_scaled_p = _pad2d((1.0 + cp["eps"][0]) * hv, Np, Dp)  # eps folded in
        relu_out = (layer != num_layers - 1)
        h_new_p = gin_layer(
            hv_scaled_p, ldst_buf, msg_buf, tile_start, tile_count,
            _pad2d(w1f, Dp, Dp), _pad1d(b1f, Dp).reshape(1, Dp),
            _pad2d(w2f, Dp, Dp), _pad1d(b2f, Dp).reshape(1, Dp),
            relu_out=relu_out, nj_grid=nj_grid)
        h_new = h_new_p[:N, :D]     # drop padded rows/cols (they hold bias garbage)

        if residual:
            h_new = h_new + hv
        if JK == "sum":
            sum_acc = sum_acc + hv

        # ---- virtual-node update (tiny (G, D) matmuls -> plain JAX) ----
        if layer < num_layers - 1:
            pooled = jax.ops.segment_sum(hv, batch, num_segments=num_graphs)
            mp = params["vn_mlps"][layer]
            s1, t1 = _bn_scale_shift(mp["bn1_gamma"], mp["bn1_beta"])
            vw1, vb1 = _fold_linear_bn(mp["w1"], mp["b1"], s1, t1)
            s2, t2 = _bn_scale_shift(mp["bn2_gamma"], mp["bn2_beta"])
            vw2, vb2 = _fold_linear_bn(mp["w2"], mp["b2"], s2, t2)
            tmp = pooled + vne
            v = jnp.maximum(jnp.dot(tmp, vw1, precision=hp) + vb1, 0.0)
            v = jnp.maximum(jnp.dot(v, vw2, precision=hp) + vb2, 0.0)
            vne = vne + v if residual else v

        h_cur = h_new

    return h_cur if JK == "last" else sum_acc + h_cur


# ----------------------------- pure-JAX reference ------------------------------

def reference_forward(params, x_feat, edge_index, edge_attr, batch,
                      num_graphs, num_layers, residual=False, JK="last"):
    hp = lax.Precision.HIGHEST
    D = params["atom_emb"].shape[-1]
    N = x_feat.shape[0]
    h = jnp.zeros((N, D), jnp.float32)
    for f in range(x_feat.shape[1]):
        h = h + params["atom_emb"][f][x_feat[:, f]]
    vne = jnp.broadcast_to(params["vn_emb"], (num_graphs, D))
    src, dst = edge_index[0], edge_index[1]
    h_list = [h]
    for layer in range(num_layers):
        cp = params["convs"][layer]
        h_c = h_list[layer] + vne[batch]
        h_list[layer] = h_c
        e_emb = jnp.zeros((edge_attr.shape[0], D), jnp.float32)
        for f in range(edge_attr.shape[1]):
            e_emb = e_emb + cp["bond_emb"][f][edge_attr[:, f]]
        msg = jnp.maximum(h_c[src] + e_emb, 0.0)
        aggr = jnp.zeros((N, D), jnp.float32).at[dst].add(msg)
        pre = (1.0 + cp["eps"][0]) * h_c + aggr
        sc1, sh1 = _bn_scale_shift(cp["bn_gamma"], cp["bn_beta"])
        t = jnp.maximum((jnp.dot(pre, cp["w1"], precision=hp) + cp["b1"]) * sc1 + sh1, 0.0)
        bn = params["batch_norms"][layer]
        sc2, sh2 = _bn_scale_shift(bn["gamma"], bn["beta"])
        y = (jnp.dot(t, cp["w2"], precision=hp) + cp["b2"]) * sc2 + sh2
        if layer != num_layers - 1:
            y = jnp.maximum(y, 0.0)
        if residual:
            y = y + h_c
        h_list.append(y)
        if layer < num_layers - 1:
            pooled = jnp.zeros((num_graphs, D), jnp.float32).at[batch].add(h_c)
            tmp = pooled + vne
            mp = params["vn_mlps"][layer]
            s1, t1 = _bn_scale_shift(mp["bn1_gamma"], mp["bn1_beta"])
            v = jnp.maximum((jnp.dot(tmp, mp["w1"], precision=hp) + mp["b1"]) * s1 + t1, 0.0)
            s2, t2 = _bn_scale_shift(mp["bn2_gamma"], mp["bn2_beta"])
            v = jnp.maximum((jnp.dot(v, mp["w2"], precision=hp) + mp["b2"]) * s2 + t2, 0.0)
            vne = vne + v if residual else v
    if JK == "last":
        return h_list[-1]
    out = h_list[0]
    for l in range(1, num_layers + 1):
        out = out + h_list[l]
    return out


# ----------------------------- main ---------------------------------------------

if __name__ == "__main__":
    N, E, G, D, L = 12, 24, 2, 32, 2
    NUM_ATOM_FEATS, ATOM_VOCAB = 3, 8
    NUM_BOND_FEATS, BOND_VOCAB = 3, 4

    key = jax.random.PRNGKey(0)
    key, kp = jax.random.split(key)
    params = init_params(kp, D, L, NUM_ATOM_FEATS, ATOM_VOCAB,
                         NUM_BOND_FEATS, BOND_VOCAB)

    ks = jax.random.split(key, 6)
    # two graphs: nodes 0..5 in graph 0, nodes 6..11 in graph 1
    batch = jnp.array([0] * (N // 2) + [1] * (N // 2), dtype=jnp.int32)
    src = jnp.concatenate([jax.random.randint(ks[0], (E // 2,), 0, N // 2),
                           jax.random.randint(ks[1], (E // 2,), N // 2, N)])
    dst = jnp.concatenate([jax.random.randint(ks[2], (E // 2,), 0, N // 2),
                           jax.random.randint(ks[3], (E // 2,), N // 2, N)])
    edge_index = jnp.stack([src, dst]).astype(jnp.int32)                 # (2, E)
    edge_attr = jax.random.randint(ks[4], (E, NUM_BOND_FEATS), 0, BOND_VOCAB)
    x_feat = jax.random.randint(ks[5], (N, NUM_ATOM_FEATS), 0, ATOM_VOCAB)

    # host-side static bound: max number of TE-edge tiles any node tile owns
    ni_host = _ceil_to(N, TM) // TM
    cnt = np.bincount(np.asarray(dst) // TM, minlength=ni_host)
    max_edge_tiles = int(max(1, np.max((cnt + TE - 1) // TE)))

    fwd = jax.jit(functools.partial(gnn_node_virtualnode_forward,
                                    num_graphs=G, num_layers=L,
                                    residual=False, JK="last",
                                    max_edge_tiles=max_edge_tiles))
    node_repr = jax.block_until_ready(
        fwd(params, x_feat, edge_index, edge_attr, batch))
    assert node_repr.shape == (N, D)

    ref = reference_forward(params, x_feat, edge_index, edge_attr, batch,
                            num_graphs=G, num_layers=L,
                            residual=False, JK="last")
    np.testing.assert_allclose(np.asarray(node_repr), np.asarray(ref),
                               rtol=2e-2, atol=2e-2)
    print("KERNEL_OK")
</pallas_src>

<mosaic_0001>
module attributes {stable_mosaic.version = 11 : i64} {
  func.func @_gin_layer_kernel(%arg0: i32, %arg1: i32, %arg2: memref<1xi32, #tpu.memory_space<smem>>, %arg3: memref<1xi32, #tpu.memory_space<smem>>, %arg4: memref<256x128xf32, #tpu.memory_space<vmem>>, %arg5: memref<1x8x256xi32, #tpu.memory_space<vmem>>, %arg6: memref<256x128xbf16, #tpu.memory_space<vmem>>, %arg7: memref<128x128xf32, #tpu.memory_space<vmem>>, %arg8: memref<1x128xf32, #tpu.memory_space<vmem>>, %arg9: memref<128x128xf32, #tpu.memory_space<vmem>>, %arg10: memref<1x128xf32, #tpu.memory_space<vmem>>, %arg11: memref<256x128xf32, #tpu.memory_space<vmem>>, %arg12: memref<256x128xf32, #tpu.memory_space<vmem>>) attributes {dimension_semantics = [#tpu.dimension_semantics<parallel>, #tpu.dimension_semantics<arbitrary>], iteration_bounds = array<i64: 1, 1>, scalar_prefetch = 2 : i64, scratch_operands = 1 : i64, tpu.core_type = #tpu.core_type<tc>, window_params = [{transform_indices = @transform_0, window_bounds = array<i64: 256, 128>}, {transform_indices = @transform_1, window_bounds = array<i64: 1, 8, 256>}, {transform_indices = @transform_2, window_bounds = array<i64: 256, 128>}, {pipeline_mode = #tpu.pipeline_mode<synchronous>, transform_indices = @transform_3, window_bounds = array<i64: 128, 128>}, {pipeline_mode = #tpu.pipeline_mode<synchronous>, transform_indices = @transform_4, window_bounds = array<i64: 1, 128>}, {pipeline_mode = #tpu.pipeline_mode<synchronous>, transform_indices = @transform_5, window_bounds = array<i64: 128, 128>}, {pipeline_mode = #tpu.pipeline_mode<synchronous>, transform_indices = @transform_6, window_bounds = array<i64: 1, 128>}, {transform_indices = @transform_7, window_bounds = array<i64: 256, 128>}]} {
    %c0_i32 = arith.constant 0 : i32
    %0 = arith.cmpi eq, %arg1, %c0_i32 : i32
    %1 = arith.extui %0 : i1 to i32
    %c0_i32_0 = arith.constant 0 : i32
    %2 = arith.cmpi ne, %1, %c0_i32_0 : i32
    scf.if %2 {
      %c0 = arith.constant 0 : index
      %c0_4 = arith.constant 0 : index
      %11 = vector.load %arg4[%c0, %c0_4] : memref<256x128xf32, #tpu.memory_space<vmem>>, vector<256x128xf32>
      %c0_5 = arith.constant 0 : index
      %c0_6 = arith.constant 0 : index
      %12 = vector.load %arg12[%c0_5, %c0_6] : memref<256x128xf32, #tpu.memory_space<vmem>>, vector<256x128xf32>
      tpu.vector_store %arg12[%c0_5, %c0_6], %11 {strides = array<i32>} : memref<256x128xf32, #tpu.memory_space<vmem>>, vector<256x128xf32>,
    } else {
    }
    %3 = arith.index_cast %arg0 : i32 to index
    %4 = memref.load %arg3[%3] : memref<1xi32, #tpu.memory_space<smem>>
    %5 = arith.cmpi slt, %arg1, %4 : i32
    %6 = arith.extui %5 : i1 to i32
    %c0_i32_1 = arith.constant 0 : i32
    %7 = arith.cmpi ne, %6, %c0_i32_1 : i32
    scf.if %7 {
      %c0 = arith.constant 0 : index
      %c0_4 = arith.constant 0 : index
      %11 = vector.load %arg6[%c0, %c0_4] : memref<256x128xbf16, #tpu.memory_space<vmem>>, vector<256x128xbf16>
      %cst = arith.constant 0.000000e+00 : bf16
      %12 = vector.broadcast %cst : bf16 to vector<256x128xbf16>
      %13 = arith.maximumf %11, %12 : vector<256x128xbf16>
      %c0_5 = arith.constant 0 : index
      %c0_6 = arith.constant 0 : index
      %c0_7 = arith.constant 0 : index
      %14 = vector.load %arg5[%c0_5, %c0_6, %c0_7] : memref<1x8x256xi32, #tpu.memory_space<vmem>>, vector<1x8x256xi32>
      %15 = vector.extract_strided_slice %14 {offsets = [0, 0, 0], sizes = [1, 1, 256], strides = [1, 1, 1]} : vector<1x8x256xi32> to vector<1x1x256xi32>
      %16 = vector.shape_cast %15 : vector<1x1x256xi32> to vector<1x256xi32>
      %17 = tpu.iota {dimensions = array<i32: 0>} : vector<256x256xi32>
      %18 = vector.broadcast %16 : vector<1x256xi32> to vector<256x256xi32>
      %19 = arith.cmpi eq, %18, %17 : vector<256x256xi32>
      %20 = arith.extui %19 : vector<256x256xi1> to vector<256x256xi32>
      %21 = arith.sitofp %20 : vector<256x256xi32> to vector<256x256xf32>
      %22 = arith.truncf %21 : vector<256x256xf32> to vector<256x256xbf16>
      %c0_8 = arith.constant 0 : index
      %c0_9 = arith.constant 0 : index
      %23 = vector.load %arg12[%c0_8, %c0_9] : memref<256x128xf32, #tpu.memory_space<vmem>>, vector<256x128xf32>
      %cst_10 = arith.constant dense<0.000000e+00> : vector<256x128xf32>
      %24 = tpu.matmul %22, %13, %cst_10 {dimension_numbers = #tpu.dot_dimension_numbers<[1], [0], [0], [1], [0, 0, 1, 1], [], []>} : vector<256x256xbf16>, vector<256x128xbf16>, vector<256x128xf32> -> vector<256x128xf32>
      %25 = arith.addf %23, %24 : vector<256x128xf32>
      %c0_11 = arith.constant 0 : index
      %c0_12 = arith.constant 0 : index
      %26 = vector.load %arg12[%c0_11, %c0_12] : memref<256x128xf32, #tpu.memory_space<vmem>>, vector<256x128xf32>
      tpu.vector_store %arg12[%c0_11, %c0_12], %25 {strides = array<i32>} : memref<256x128xf32, #tpu.memory_space<vmem>>, vector<256x128xf32>,
    } else {
    }
    %c0_i32_2 = arith.constant 0 : i32
    %8 = arith.cmpi eq, %arg1, %c0_i32_2 : i32
    %9 = arith.extui %8 : i1 to i32
    %c0_i32_3 = arith.constant 0 : i32
    %10 = arith.cmpi ne, %9, %c0_i32_3 : i32
    scf.if %10 {
      %c0 = arith.constant 0 : index
      %c0_4 = arith.constant 0 : index
      %11 = vector.load %arg12[%c0, %c0_4] : memref<256x128xf32, #tpu.memory_space<vmem>>, vector<256x128xf32>
      %c0_5 = arith.constant 0 : index
      %c0_6 = arith.constant 0 : index
      %12 = vector.load %arg7[%c0_5, %c0_6] : memref<128x128xf32, #tpu.memory_space<vmem>>, vector<128x128xf32>
      %cst = arith.constant dense<0.000000e+00> : vector<256x128xf32>
      %13 = tpu.matmul %11, %12, %cst {dimension_numbers = #tpu.dot_dimension_numbers<[1], [0], [0], [1], [0, 0, 1, 1], [], []>} : vector<256x128xf32>, vector<128x128xf32>, vector<256x128xf32> -> vector<256x128xf32>
      %c0_7 = arith.constant 0 : index
      %c0_8 = arith.constant 0 : index
      %14 = vector.load %arg8[%c0_7, %c0_8] : memref<1x128xf32, #tpu.memory_space<vmem>>, vector<1x128xf32>
      %15 = vector.broadcast %14 : vector<1x128xf32> to vector<256x128xf32>
      %16 = arith.addf %13, %15 : vector<256x128xf32>
      %cst_9 = arith.constant 0.000000e+00 : f32
      %17 = vector.broadcast %cst_9 : f32 to vector<256x128xf32>
      %18 = arith.maximumf %16, %17 : vector<256x128xf32>
      %c0_10 = arith.constant 0 : index
      %c0_11 = arith.constant 0 : index
      %19 = vector.load %arg9[%c0_10, %c0_11] : memref<128x128xf32, #tpu.memory_space<vmem>>, vector<128x128xf32>
      %cst_12 = arith.constant dense<0.000000e+00> : vector<256x128xf32>
      %20 = tpu.matmul %18, %19, %cst_12 {dimension_numbers = #tpu.dot_dimension_numbers<[1], [0], [0], [1], [0, 0, 1, 1], [], []>} : vector<256x128xf32>, vector<128x128xf32>, vector<256x128xf32> -> vector<256x128xf32>
      %c0_13 = arith.constant 0 : index
      %c0_14 = arith.constant 0 : index
      %21 = vector.load %arg10[%c0_13, %c0_14] : memref<1x128xf32, #tpu.memory_space<vmem>>, vector<1x128xf32>
      %22 = vector.broadcast %21 : vector<1x128xf32> to vector<256x128xf32>
      %23 = arith.addf %20, %22 : vector<256x128xf32>
      %cst_15 = arith.constant 0.000000e+00 : f32
      %24 = vector.broadcast %cst_15 : f32 to vector<256x128xf32>
      %25 = arith.maximumf %23, %24 : vector<256x128xf32>
      %c0_16 = arith.constant 0 : index
      %c0_17 = arith.constant 0 : index
      %26 = vector.load %arg11[%c0_16, %c0_17] : memref<256x128xf32, #tpu.memory_space<vmem>>, vector<256x128xf32>
      tpu.vector_store %arg11[%c0_16, %c0_17], %25 {strides = array<i32>} : memref<256x128xf32, #tpu.memory_space<vmem>>, vector<256x128xf32>,
    } else {
    }
    return
  }
  func.func @transform_0(%arg0: i32, %arg1: i32, %arg2: memref<1xi32, #tpu.memory_space<smem>>, %arg3: memref<1xi32, #tpu.memory_space<smem>>) -> (i32, i32) {
    %c0_i32 = arith.constant 0 : i32
    %c0_i32_0 = arith.constant 0 : i32
    return %arg0, %c0_i32 : i32, i32
  }
  func.func @transform_1(%arg0: i32, %arg1: i32, %arg2: memref<1xi32, #tpu.memory_space<smem>>, %arg3: memref<1xi32, #tpu.memory_space<smem>>) -> (i32, i32, i32) {
    %0 = arith.index_cast %arg0 : i32 to index
    %1 = memref.load %arg2[%0] : memref<1xi32, #tpu.memory_space<smem>>
    %2 = arith.index_cast %arg0 : i32 to index
    %3 = memref.load %arg3[%2] : memref<1xi32, #tpu.memory_space<smem>>
    %c1_i32 = arith.constant 1 : i32
    %4 = arith.subi %3, %c1_i32 : i32
    %c0_i32 = arith.constant 0 : i32
    %5 = arith.maxsi %4, %c0_i32 : i32
    %6 = arith.minsi %arg1, %5 : i32
    %7 = arith.addi %1, %6 : i32
    %c1_i32_0 = arith.constant 1 : i32
    %8 = arith.minsi %7, %c1_i32_0 : i32
    %c0_i32_1 = arith.constant 0 : i32
    %c0_i32_2 = arith.constant 0 : i32
    %c0_i32_3 = arith.constant 0 : i32
    return %8, %c0_i32_1, %c0_i32_2 : i32, i32, i32
  }
  func.func @transform_2(%arg0: i32, %arg1: i32, %arg2: memref<1xi32, #tpu.memory_space<smem>>, %arg3: memref<1xi32, #tpu.memory_space<smem>>) -> (i32, i32) {
    %0 = arith.index_cast %arg0 : i32 to index
    %1 = memref.load %arg2[%0] : memref<1xi32, #tpu.memory_space<smem>>
    %2 = arith.index_cast %arg0 : i32 to index
    %3 = memref.load %arg3[%2] : memref<1xi32, #tpu.memory_space<smem>>
    %c1_i32 = arith.constant 1 : i32
    %4 = arith.subi %3, %c1_i32 : i32
    %c0_i32 = arith.constant 0 : i32
    %5 = arith.maxsi %4, %c0_i32 : i32
    %6 = arith.minsi %arg1, %5 : i32
    %7 = arith.addi %1, %6 : i32
    %c1_i32_0 = arith.constant 1 : i32
    %8 = arith.minsi %7, %c1_i32_0 : i32
    %c0_i32_1 = arith.constant 0 : i32
    %c0_i32_2 = arith.constant 0 : i32
    return %8, %c0_i32_1 : i32, i32
  }
  func.func @transform_3(%arg0: i32, %arg1: i32, %arg2: memref<1xi32, #tpu.memory_space<smem>>, %arg3: memref<1xi32, #tpu.memory_space<smem>>) -> (i32, i32) {
    %c0_i32 = arith.constant 0 : i32
    %c0_i32_0 = arith.constant 0 : i32
    %c0_i32_1 = arith.constant 0 : i32
    return %c0_i32, %c0_i32_0 : i32, i32
  }
  func.func @transform_4(%arg0: i32, %arg1: i32, %arg2: memref<1xi32, #tpu.memory_space<smem>>, %arg3: memref<1xi32, #tpu.memory_space<smem>>) -> (i32, i32) {
    %c0_i32 = arith.constant 0 : i32
    %c0_i32_0 = arith.constant 0 : i32
    %c0_i32_1 = arith.constant 0 : i32
    return %c0_i32, %c0_i32_0 : i32, i32
  }
  func.func @transform_5(%arg0: i32, %arg1: i32, %arg2: memref<1xi32, #tpu.memory_space<smem>>, %arg3: memref<1xi32, #tpu.memory_space<smem>>) -> (i32, i32) {
    %c0_i32 = arith.constant 0 : i32
    %c0_i32_0 = arith.constant 0 : i32
    %c0_i32_1 = arith.constant 0 : i32
    return %c0_i32, %c0_i32_0 : i32, i32
  }
  func.func @transform_6(%arg0: i32, %arg1: i32, %arg2: memref<1xi32, #tpu.memory_space<smem>>, %arg3: memref<1xi32, #tpu.memory_space<smem>>) -> (i32, i32) {
    %c0_i32 = arith.constant 0 : i32
    %c0_i32_0 = arith.constant 0 : i32
    %c0_i32_1 = arith.constant 0 : i32
    return %c0_i32, %c0_i32_0 : i32, i32
  }
  func.func @transform_7(%arg0: i32, %arg1: i32, %arg2: memref<1xi32, #tpu.memory_space<smem>>, %arg3: memref<1xi32, #tpu.memory_space<smem>>) -> (i32, i32) {
    %c0_i32 = arith.constant 0 : i32
    %c0_i32_0 = arith.constant 0 : i32
    return %arg0, %c0_i32 : i32, i32
  }
}

module attributes {stable_mosaic.version = 11 : i64} {
  func.func @_gin_layer_kernel(%arg0: i32, %arg1: i32, %arg2: memref<1xi32, #tpu.memory_space<smem>>, %arg3: memref<1xi32, #tpu.memory_space<smem>>, %arg4: memref<256x128xf32, #tpu.memory_space<vmem>>, %arg5: memref<1x8x256xi32, #tpu.memory_space<vmem>>, %arg6: memref<256x128xbf16, #tpu.memory_space<vmem>>, %arg7: memref<128x128xf32, #tpu.memory_space<vmem>>, %arg8: memref<1x128xf32, #tpu.memory_space<vmem>>, %arg9: memref<128x128xf32, #tpu.memory_space<vmem>>, %arg10: memref<1x128xf32, #tpu.memory_space<vmem>>, %arg11: memref<256x128xf32, #tpu.memory_space<vmem>>, %arg12: memref<256x128xf32, #tpu.memory_space<vmem>>) attributes {dimension_semantics = [#tpu.dimension_semantics<parallel>, #tpu.dimension_semantics<arbitrary>], iteration_bounds = array<i64: 1, 1>, scalar_prefetch = 2 : i64, scratch_operands = 1 : i64, tpu.core_type = #tpu.core_type<tc>, window_params = [{transform_indices = @transform_0, window_bounds = array<i64: 256, 128>}, {transform_indices = @transform_1, window_bounds = array<i64: 1, 8, 256>}, {transform_indices = @transform_2, window_bounds = array<i64: 256, 128>}, {pipeline_mode = #tpu.pipeline_mode<synchronous>, transform_indices = @transform_3, window_bounds = array<i64: 128, 128>}, {pipeline_mode = #tpu.pipeline_mode<synchronous>, transform_indices = @transform_4, window_bounds = array<i64: 1, 128>}, {pipeline_mode = #tpu.pipeline_mode<synchronous>, transform_indices = @transform_5, window_bounds = array<i64: 128, 128>}, {pipeline_mode = #tpu.pipeline_mode<synchronous>, transform_indices = @transform_6, window_bounds = array<i64: 1, 128>}, {transform_indices = @transform_7, window_bounds = array<i64: 256, 128>}]} {
    %c0_i32 = arith.constant 0 : i32
    %0 = arith.cmpi eq, %arg1, %c0_i32 : i32
    %1 = arith.extui %0 : i1 to i32
    %c0_i32_0 = arith.constant 0 : i32
    %2 = arith.cmpi ne, %1, %c0_i32_0 : i32
    scf.if %2 {
      %c0 = arith.constant 0 : index
      %c0_4 = arith.constant 0 : index
      %11 = vector.load %arg4[%c0, %c0_4] : memref<256x128xf32, #tpu.memory_space<vmem>>, vector<256x128xf32>
      %c0_5 = arith.constant 0 : index
      %c0_6 = arith.constant 0 : index
      %12 = vector.load %arg12[%c0_5, %c0_6] : memref<256x128xf32, #tpu.memory_space<vmem>>, vector<256x128xf32>
      tpu.vector_store %arg12[%c0_5, %c0_6], %11 {strides = array<i32>} : memref<256x128xf32, #tpu.memory_space<vmem>>, vector<256x128xf32>,
    } else {
    }
    %3 = arith.index_cast %arg0 : i32 to index
    %4 = memref.load %arg3[%3] : memref<1xi32, #tpu.memory_space<smem>>
    %5 = arith.cmpi slt, %arg1, %4 : i32
    %6 = arith.extui %5 : i1 to i32
    %c0_i32_1 = arith.constant 0 : i32
    %7 = arith.cmpi ne, %6, %c0_i32_1 : i32
    scf.if %7 {
      %c0 = arith.constant 0 : index
      %c0_4 = arith.constant 0 : index
      %11 = vector.load %arg6[%c0, %c0_4] : memref<256x128xbf16, #tpu.memory_space<vmem>>, vector<256x128xbf16>
      %cst = arith.constant 0.000000e+00 : bf16
      %12 = vector.broadcast %cst : bf16 to vector<256x128xbf16>
      %13 = arith.maximumf %11, %12 : vector<256x128xbf16>
      %c0_5 = arith.constant 0 : index
      %c0_6 = arith.constant 0 : index
      %c0_7 = arith.constant 0 : index
      %14 = vector.load %arg5[%c0_5, %c0_6, %c0_7] : memref<1x8x256xi32, #tpu.memory_space<vmem>>, vector<1x8x256xi32>
      %15 = vector.extract_strided_slice %14 {offsets = [0, 0, 0], sizes = [1, 1, 256], strides = [1, 1, 1]} : vector<1x8x256xi32> to vector<1x1x256xi32>
      %16 = vector.shape_cast %15 : vector<1x1x256xi32> to vector<1x256xi32>
      %17 = tpu.iota {dimensions = array<i32: 0>} : vector<256x256xi32>
      %18 = vector.broadcast %16 : vector<1x256xi32> to vector<256x256xi32>
      %19 = arith.cmpi eq, %18, %17 : vector<256x256xi32>
      %20 = arith.extui %19 : vector<256x256xi1> to vector<256x256xi32>
      %21 = arith.sitofp %20 : vector<256x256xi32> to vector<256x256xf32>
      %22 = arith.truncf %21 : vector<256x256xf32> to vector<256x256xbf16>
      %c0_8 = arith.constant 0 : index
      %c0_9 = arith.constant 0 : index
      %23 = vector.load %arg12[%c0_8, %c0_9] : memref<256x128xf32, #tpu.memory_space<vmem>>, vector<256x128xf32>
      %cst_10 = arith.constant dense<0.000000e+00> : vector<256x128xf32>
      %24 = tpu.matmul %22, %13, %cst_10 {dimension_numbers = #tpu.dot_dimension_numbers<[1], [0], [0], [1], [0, 0, 1, 1], [], []>} : vector<256x256xbf16>, vector<256x128xbf16>, vector<256x128xf32> -> vector<256x128xf32>
      %25 = arith.addf %23, %24 : vector<256x128xf32>
      %c0_11 = arith.constant 0 : index
      %c0_12 = arith.constant 0 : index
      %26 = vector.load %arg12[%c0_11, %c0_12] : memref<256x128xf32, #tpu.memory_space<vmem>>, vector<256x128xf32>
      tpu.vector_store %arg12[%c0_11, %c0_12], %25 {strides = array<i32>} : memref<256x128xf32, #tpu.memory_space<vmem>>, vector<256x128xf32>,
    } else {
    }
    %c0_i32_2 = arith.constant 0 : i32
    %8 = arith.cmpi eq, %arg1, %c0_i32_2 : i32
    %9 = arith.extui %8 : i1 to i32
    %c0_i32_3 = arith.constant 0 : i32
    %10 = arith.cmpi ne, %9, %c0_i32_3 : i32
    scf.if %10 {
      %c0 = arith.constant 0 : index
      %c0_4 = arith.constant 0 : index
      %11 = vector.load %arg12[%c0, %c0_4] : memref<256x128xf32, #tpu.memory_space<vmem>>, vector<256x128xf32>
      %c0_5 = arith.constant 0 : index
      %c0_6 = arith.constant 0 : index
      %12 = vector.load %arg7[%c0_5, %c0_6] : memref<128x128xf32, #tpu.memory_space<vmem>>, vector<128x128xf32>
      %cst = arith.constant dense<0.000000e+00> : vector<256x128xf32>
      %13 = tpu.matmul %11, %12, %cst {dimension_numbers = #tpu.dot_dimension_numbers<[1], [0], [0], [1], [0, 0, 1, 1], [], []>} : vector<256x128xf32>, vector<128x128xf32>, vector<256x128xf32> -> vector<256x128xf32>
      %c0_7 = arith.constant 0 : index
      %c0_8 = arith.constant 0 : index
      %14 = vector.load %arg8[%c0_7, %c0_8] : memref<1x128xf32, #tpu.memory_space<vmem>>, vector<1x128xf32>
      %15 = vector.broadcast %14 : vector<1x128xf32> to vector<256x128xf32>
      %16 = arith.addf %13, %15 : vector<256x128xf32>
      %cst_9 = arith.constant 0.000000e+00 : f32
      %17 = vector.broadcast %cst_9 : f32 to vector<256x128xf32>
      %18 = arith.maximumf %16, %17 : vector<256x128xf32>
      %c0_10 = arith.constant 0 : index
      %c0_11 = arith.constant 0 : index
      %19 = vector.load %arg9[%c0_10, %c0_11] : memref<128x128xf32, #tpu.memory_space<vmem>>, vector<128x128xf32>
      %cst_12 = arith.constant dense<0.000000e+00> : vector<256x128xf32>
      %20 = tpu.matmul %18, %19, %cst_12 {dimension_numbers = #tpu.dot_dimension_numbers<[1], [0], [0], [1], [0, 0, 1, 1], [], []>} : vector<256x128xf32>, vector<128x128xf32>, vector<256x128xf32> -> vector<256x128xf32>
      %c0_13 = arith.constant 0 : index
      %c0_14 = arith.constant 0 : index
      %21 = vector.load %arg10[%c0_13, %c0_14] : memref<1x128xf32, #tpu.memory_space<vmem>>, vector<1x128xf32>
      %22 = vector.broadcast %21 : vector<1x128xf32> to vector<256x128xf32>
      %23 = arith.addf %20, %22 : vector<256x128xf32>
      %c0_15 = arith.constant 0 : index
      %c0_16 = arith.constant 0 : index
      %24 = vector.load %arg11[%c0_15, %c0_16] : memref<256x128xf32, #tpu.memory_space<vmem>>, vector<256x128xf32>
      tpu.vector_store %arg11[%c0_15, %c0_16], %23 {strides = array<i32>} : memref<256x128xf32, #tpu.memory_space<vmem>>, vector<256x128xf32>,
    } else {
    }
    return
  }
  func.func @transform_0(%arg0: i32, %arg1: i32, %arg2: memref<1xi32, #tpu.memory_space<smem>>, %arg3: memref<1xi32, #tpu.memory_space<smem>>) -> (i32, i32) {
    %c0_i32 = arith.constant 0 : i32
    %c0_i32_0 = arith.constant 0 : i32
    return %arg0, %c0_i32 : i32, i32
  }
  func.func @transform_1(%arg0: i32, %arg1: i32, %arg2: memref<1xi32, #tpu.memory_space<smem>>, %arg3: memref<1xi32, #tpu.memory_space<smem>>) -> (i32, i32, i32) {
    %0 = arith.index_cast %arg0 : i32 to index
    %1 = memref.load %arg2[%0] : memref<1xi32, #tpu.memory_space<smem>>
    %2 = arith.index_cast %arg0 : i32 to index
    %3 = memref.load %arg3[%2] : memref<1xi32, #tpu.memory_space<smem>>
    %c1_i32 = arith.constant 1 : i32
    %4 = arith.subi %3, %c1_i32 : i32
    %c0_i32 = arith.constant 0 : i32
    %5 = arith.maxsi %4, %c0_i32 : i32
    %6 = arith.minsi %arg1, %5 : i32
    %7 = arith.addi %1, %6 : i32
    %c1_i32_0 = arith.constant 1 : i32
    %8 = arith.minsi %7, %c1_i32_0 : i32
    %c0_i32_1 = arith.constant 0 : i32
    %c0_i32_2 = arith.constant 0 : i32
    %c0_i32_3 = arith.constant 0 : i32
    return %8, %c0_i32_1, %c0_i32_2 : i32, i32, i32
  }
  func.func @transform_2(%arg0: i32, %arg1: i32, %arg2: memref<1xi32, #tpu.memory_space<smem>>, %arg3: memref<1xi32, #tpu.memory_space<smem>>) -> (i32, i32) {
    %0 = arith.index_cast %arg0 : i32 to index
    %1 = memref.load %arg2[%0] : memref<1xi32, #tpu.memory_space<smem>>
    %2 = arith.index_cast %arg0 : i32 to index
    %3 = memref.load %arg3[%2] : memref<1xi32, #tpu.memory_space<smem>>
    %c1_i32 = arith.constant 1 : i32
    %4 = arith.subi %3, %c1_i32 : i32
    %c0_i32 = arith.constant 0 : i32
    %5 = arith.maxsi %4, %c0_i32 : i32
    %6 = arith.minsi %arg1, %5 : i32
    %7 = arith.addi %1, %6 : i32
    %c1_i32_0 = arith.constant 1 : i32
    %8 = arith.minsi %7, %c1_i32_0 : i32
    %c0_i32_1 = arith.constant 0 : i32
    %c0_i32_2 = arith.constant 0 : i32
    return %8, %c0_i32_1 : i32, i32
  }
  func.func @transform_3(%arg0: i32, %arg1: i32, %arg2: memref<1xi32, #tpu.memory_space<smem>>, %arg3: memref<1xi32, #tpu.memory_space<smem>>) -> (i32, i32) {
    %c0_i32 = arith.constant 0 : i32
    %c0_i32_0 = arith.constant 0 : i32
    %c0_i32_1 = arith.constant 0 : i32
    return %c0_i32, %c0_i32_0 : i32, i32
  }
  func.func @transform_4(%arg0: i32, %arg1: i32, %arg2: memref<1xi32, #tpu.memory_space<smem>>, %arg3: memref<1xi32, #tpu.memory_space<smem>>) -> (i32, i32) {
    %c0_i32 = arith.constant 0 : i32
    %c0_i32_0 = arith.constant 0 : i32
    %c0_i32_1 = arith.constant 0 : i32
    return %c0_i32, %c0_i32_0 : i32, i32
  }
  func.func @transform_5(%arg0: i32, %arg1: i32, %arg2: memref<1xi32, #tpu.memory_space<smem>>, %arg3: memref<1xi32, #tpu.memory_space<smem>>) -> (i32, i32) {
    %c0_i32 = arith.constant 0 : i32
    %c0_i32_0 = arith.constant 0 : i32
    %c0_i32_1 = arith.constant 0 : i32
    return %c0_i32, %c0_i32_0 : i32, i32
  }
  func.func @transform_6(%arg0: i32, %arg1: i32, %arg2: memref<1xi32, #tpu.memory_space<smem>>, %arg3: memref<1xi32, #tpu.memory_space<smem>>) -> (i32, i32) {
    %c0_i32 = arith.constant 0 : i32
    %c0_i32_0 = arith.constant 0 : i32
    %c0_i32_1 = arith.constant 0 : i32
    return %c0_i32, %c0_i32_0 : i32, i32
  }
  func.func @transform_7(%arg0: i32, %arg1: i32, %arg2: memref<1xi32, #tpu.memory_space<smem>>, %arg3: memref<1xi32, #tpu.memory_space<smem>>) -> (i32, i32) {
    %c0_i32 = arith.constant 0 : i32
    %c0_i32_0 = arith.constant 0 : i32
    return %arg0, %c0_i32 : i32, i32
  }
}

</mosaic_0001>

<llo_original>
// kernel: gnn_node_virtualnode_forward.2
$region0: #{gnn_node_virtualnode_forward.2}
  #allocation0 [shape = 'u32[]', space=smem, size = 0x4, offset = 0x4, fixed_abs, tag = 'smem constant byte address 0x4 - core index']
  #allocation1 [shape = 'u32[144,128]{1,0:T(1,128)}', space=vmem, size = 0x12000, scoped, tag = 'internal scratch']
  #allocation2 [shape = 'f32[256,128]{1,0:T(8,128)}', space=vmem, size = 0x20000, scoped, tag = 'scratch operand']
  #allocation3 [shape = 's32[1]{0}', space=sflag, size = 0x4, scoped, tag = 'scoped memory for gnn_node_virtualnode_forward.2']
  #allocation4 [shape = 's32[1]{0:T(128)S(6)}', space=smem, size = 0x200, scoped, tag = 'prefetched SMEM operand 0']
  #allocation5 [shape = 's32[1]{0:T(128)S(6)}', space=smem, size = 0x200, scoped, tag = 'prefetched SMEM operand 1']
  %s0 = inlined_call_operand.<no memory space> [shape: s32[1], index: 0, kind: input, shape index: {}]
  %s1 = inlined_call_operand.<no memory space> [shape: s32[1], index: 1, kind: input, shape index: {}]
  %s2 = inlined_call_operand.vmem [shape: f32[256,128], index: 2, kind: input, shape index: {}]
  %s3 = inlined_call_operand.vmem [shape: s32[2,8,256], index: 3, kind: input, shape index: {}]
  %s4 = inlined_call_operand.vmem [shape: bf16[512,128], index: 4, kind: input, shape index: {}]
  %s5 = inlined_call_operand.vmem [shape: f32[128,128], index: 5, kind: input, shape index: {}]
  %s6 = inlined_call_operand.vmem [shape: f32[1,128], index: 6, kind: input, shape index: {}]
  %s7 = inlined_call_operand.vmem [shape: f32[128,128], index: 7, kind: input, shape index: {}]
  %s8 = inlined_call_operand.vmem [shape: f32[1,128], index: 8, kind: input, shape index: {}]
  %s9 = inlined_call_operand.vmem [shape: f32[256,128], index: 9, kind: output, shape index: {}]
  %s10 = sld [smem:[#allocation0]]
  $region50: #{gnn_node_virtualnode_forward.2} parent=0
    _
  %s12 = ssub.s32 1, %s10
  %s13 = scalar_select 0, %s12, %s10
  %14 = sst [smem:[#allocation4]] %s0
  %15 = sst [smem:[#allocation5]] %s1
  // Predicated region
  $region2: #{gnn_node_virtualnode_forward.2} parent=0 // pred_check
    _
  $region3: #{gnn_node_virtualnode_forward.2} parent=0 // pred_check_branch
    %17 = sbr.rel (0) target = $region5
  $region4: #{gnn_node_virtualnode_forward.2} parent=0 // pred_region
    _
  $region5: #{gnn_node_virtualnode_forward.2} parent=0 // pred_fallthru
    _
  // Predicated region
  $region6: #{gnn_node_virtualnode_forward.2} parent=0 // pred_check
    _
  $region7: #{gnn_node_virtualnode_forward.2} parent=0 // pred_check_branch
    %19 = sbr.rel (0) target = $region9
  $region8: #{gnn_node_virtualnode_forward.2} parent=0 // pred_region
    %s20 = sld [smem:[#allocation4]]
    %s21 = sld [smem:[#allocation5]]
    %s22 = ssub.s32 %s21, 1
    %p23 = scmp.gt.s32.totalorder %s22, 0
    %s24 = scalar_select %p23, %s22, 0
    %p25 = scmp.lt.s32.totalorder 0, %s24
    %s26 = scalar_select %p25, 0, %s24
    %s27 = sadd.s32 %s20, %s26
    %p28 = scmp.lt.s32.totalorder %s27, 1
    %s29 = scalar_select %p28, %s27, 1
    %p30 = scmp.lt.s32.totalorder %s29, 1
    %s31 = scalar_select %p30, %s29, 1
    %s32 = smul.addr %s31, 2
    %s33 = smul.addr %s32, 8
    %s34 = scalar_lea.vmem %s3, %s33
    %s35 = sld [smem:[#allocation4]]
    %s36 = sld [smem:[#allocation5]]
    %s37 = ssub.s32 %s36, 1
    %p38 = scmp.gt.s32.totalorder %s37, 0
    %s39 = scalar_select %p38, %s37, 0
    %p40 = scmp.lt.s32.totalorder 0, %s39
    %s41 = scalar_select %p40, 0, %s39
    %s42 = sadd.s32 %s35, %s41
    %p43 = scmp.lt.s32.totalorder %s42, 1
    %s44 = scalar_select %p43, %s42, 1
  $region9: #{gnn_node_virtualnode_forward.2} parent=0 // pred_fallthru
    _
  // Predicated region
  $region10: #{gnn_node_virtualnode_forward.2} parent=0 // pred_check
    _
  $region11: #{gnn_node_virtualnode_forward.2} parent=0 // pred_check_branch
    %46 = sbr.rel (0) target = $region13
  $region12: #{gnn_node_virtualnode_forward.2} parent=0 // pred_region
    %s47 = sld [smem:[#allocation4]]
    %s48 = sld [smem:[#allocation5]]
    %s49 = ssub.s32 %s48, 1
    %p50 = scmp.gt.s32.totalorder %s49, 0
    %s51 = scalar_select %p50, %s49, 0
    %p52 = scmp.lt.s32.totalorder 0, %s51
    %s53 = scalar_select %p52, 0, %s51
    %s54 = sadd.s32 %s47, %s53
    %p55 = scmp.lt.s32.totalorder %s54, 1
    %s56 = scalar_select %p55, %s54, 1
    %s57 = smul.u32 32, %s56
    %p58 = scmp.lt.s32.totalorder %s57, 63
    %s59 = scalar_select %p58, %s57, 63
    %s60 = smul.addr %s59, 4
    %s61 = scalar_lea.vmem %s4, %s60
    %s62 = sld [smem:[#allocation4]]
    %s63 = sld [smem:[#allocation5]]
    %s64 = ssub.s32 %s63, 1
    %p65 = scmp.gt.s32.totalorder %s64, 0
    %s66 = scalar_select %p65, %s64, 0
    %p67 = scmp.lt.s32.totalorder 0, %s66
    %s68 = scalar_select %p67, 0, %s66
    %s69 = sadd.s32 %s62, %s68
    %p70 = scmp.lt.s32.totalorder %s69, 1
    %s71 = scalar_select %p70, %s69, 1
    %s72 = smul.u32 32, %s71
  $region13: #{gnn_node_virtualnode_forward.2} parent=0 // pred_fallthru
    _
  // Predicated region
  $region14: #{gnn_node_virtualnode_forward.2} parent=0 // pred_check
    _
  $region15: #{gnn_node_virtualnode_forward.2} parent=0 // pred_check_branch
    %74 = sbr.rel (0) target = $region17
  $region16: #{gnn_node_virtualnode_forward.2} parent=0 // pred_region
    _
  $region17: #{gnn_node_virtualnode_forward.2} parent=0 // pred_fallthru
    _
  // Predicated region
  $region18: #{gnn_node_virtualnode_forward.2} parent=0 // pred_check
    _
  $region19: #{gnn_node_virtualnode_forward.2} parent=0 // pred_check_branch
    %76 = sbr.rel (0) target = $region21
  $region20: #{gnn_node_virtualnode_forward.2} parent=0 // pred_region
    _
  $region21: #{gnn_node_virtualnode_forward.2} parent=0 // pred_fallthru
    _
  // Predicated region
  $region22: #{gnn_node_virtualnode_forward.2} parent=0 // pred_check
    _
  $region23: #{gnn_node_virtualnode_forward.2} parent=0 // pred_check_branch
    %78 = sbr.rel (0) target = $region25
  $region24: #{gnn_node_virtualnode_forward.2} parent=0 // pred_region
    _
  $region25: #{gnn_node_virtualnode_forward.2} parent=0 // pred_fallthru
    _
  // Predicated region
  $region26: #{gnn_node_virtualnode_forward.2} parent=0 // pred_check
    _
  $region27: #{gnn_node_virtualnode_forward.2} parent=0 // pred_check_branch
    %80 = sbr.rel (0) target = $region29
  $region28: #{gnn_node_virtualnode_forward.2} parent=0 // pred_region
    _
  $region29: #{gnn_node_virtualnode_forward.2} parent=0 // pred_fallthru
    _
  %s81 = sld [smem:[#allocation4]]
  %s82 = sld [smem:[#allocation5]]
  %s83 = ssub.s32 %s82, 1
  %p84 = scmp.gt.s32.totalorder %s83, 0
  %s85 = scalar_select %p84, %s83, 0
  %p86 = scmp.lt.s32.totalorder 0, %s85
  %s87 = scalar_select %p86, 0, %s85
  %s88 = sadd.s32 %s81, %s87
  %p89 = scmp.lt.s32.totalorder %s88, 1
  %s90 = scalar_select %p89, %s88, 1
  %p91 = scmp.lt.s32.totalorder %s90, 1
  %s92 = scalar_select %p91, %s90, 1
  %s93 = smul.addr %s92, 2
  %s94 = smul.addr %s93, 8
  %s95 = scalar_lea.vmem %s3, %s94
  %s96 = sld [smem:[#allocation4]]
  %s97 = sld [smem:[#allocation5]]
  %s98 = ssub.s32 %s97, 1
  %p99 = scmp.gt.s32.totalorder %s98, 0
  %s100 = scalar_select %p99, %s98, 0
  %p101 = scmp.lt.s32.totalorder 0, %s100
  %s102 = scalar_select %p101, 0, %s100
  %s103 = sadd.s32 %s96, %s102
  %p104 = scmp.lt.s32.totalorder %s103, 1
  %s105 = scalar_select %p104, %s103, 1
  %s106 = smul.u32 32, %s105
  %p107 = scmp.lt.s32.totalorder %s106, 63
  %s108 = scalar_select %p107, %s106, 63
  %s109 = smul.addr %s108, 4
  %s110 = scalar_lea.vmem %s4, %s109
  %s111 = sld [smem:[#allocation4]]
  %s112 = sld [smem:[#allocation5]]
  %s113 = ssub.s32 %s112, 1
  %p114 = scmp.gt.s32.totalorder %s113, 0
  %s115 = scalar_select %p114, %s113, 0
  %p116 = scmp.lt.s32.totalorder 0, %s115
  %s117 = scalar_select %p116, 0, %s115
  %s118 = sadd.s32 %s111, %s117
  %p119 = scmp.lt.s32.totalorder %s118, 1
  %s120 = scalar_select %p119, %s118, 1
  %p121 = scmp.lt.s32.totalorder %s120, 1
  %s122 = scalar_select %p121, %s120, 1
  %s123 = smul.addr %s122, 2
  %s124 = smul.addr %s123, 8
  %s125 = scalar_lea.vmem %s3, %s124
  %s126 = sld [smem:[#allocation4]]
  %s127 = sld [smem:[#allocation5]]
  %s128 = ssub.s32 %s127, 1
  %p129 = scmp.gt.s32.totalorder %s128, 0
  %s130 = scalar_select %p129, %s128, 0
  %p131 = scmp.lt.s32.totalorder 0, %s130
  %s132 = scalar_select %p131, 0, %s130
  %s133 = sadd.s32 %s126, %s132
  %p134 = scmp.lt.s32.totalorder %s133, 1
  %s135 = scalar_select %p134, %s133, 1
  %s136 = sld [smem:[#allocation4]]
  %s137 = sld [smem:[#allocation5]]
  %s138 = ssub.s32 %s137, 1
  %p139 = scmp.gt.s32.totalorder %s138, 0
  %s140 = scalar_select %p139, %s138, 0
  %p141 = scmp.lt.s32.totalorder 0, %s140
  %s142 = scalar_select %p141, 0, %s140
  %s143 = sadd.s32 %s136, %s142
  %p144 = scmp.lt.s32.totalorder %s143, 1
  %s145 = scalar_select %p144, %s143, 1
  %s146 = smul.u32 32, %s145
  %p147 = scmp.lt.s32.totalorder %s146, 63
  %s148 = scalar_select %p147, %s146, 63
  %s149 = smul.addr %s148, 4
  %s150 = scalar_lea.vmem %s4, %s149
  %s151 = sld [smem:[#allocation4]]
  %s152 = sld [smem:[#allocation5]]
  %s153 = ssub.s32 %s152, 1
  %p154 = scmp.gt.s32.totalorder %s153, 0
  %s155 = scalar_select %p154, %s153, 0
  %p156 = scmp.lt.s32.totalorder 0, %s155
  %s157 = scalar_select %p156, 0, %s155
  %s158 = sadd.s32 %s151, %s157
  %p159 = scmp.lt.s32.totalorder %s158, 1
  %s160 = scalar_select %p159, %s158, 1
  %s161 = smul.u32 32, %s160
  %p163 = scmp.eq.s32.totalorder 0, 0
  // Predicated region
  $region30: #{gnn_node_virtualnode_forward.2} parent=0 // pred_check
    %p164 = pneg %p163
  $region31: #{gnn_node_virtualnode_forward.2} parent=0 // pred_check_branch
    %166 = sbr.rel (%p164) target = $region33
  $region32: #{gnn_node_virtualnode_forward.2} parent=0 // pred_region
    %v167 = vld [vmem:[%s2] sm:$0xff]
    %v168 = vld [vmem:[%s2 + $0x8] sm:$0xff]
    %v169 = vld [vmem:[%s2 + $0x10] sm:$0xff]
    %v170 = vld [vmem:[%s2 + $0x18] sm:$0xff]
    %v171 = vld [vmem:[%s2 + $0x20] sm:$0xff]
    %v172 = vld [vmem:[%s2 + $0x28] sm:$0xff]
    %v173 = vld [vmem:[%s2 + $0x30] sm:$0xff]
    %v174 = vld [vmem:[%s2 + $0x38] sm:$0xff]
    %v175 = vld [vmem:[%s2 + $0x40] sm:$0xff]
    %v176 = vld [vmem:[%s2 + $0x48] sm:$0xff]
    %v177 = vld [vmem:[%s2 + $0x50] sm:$0xff]
    %v178 = vld [vmem:[%s2 + $0x58] sm:$0xff]
    %v179 = vld [vmem:[%s2 + $0x60] sm:$0xff]
    %v180 = vld [vmem:[%s2 + $0x68] sm:$0xff]
    %v181 = vld [vmem:[%s2 + $0x70] sm:$0xff]
    %v182 = vld [vmem:[%s2 + $0x78] sm:$0xff]
    %v183 = vld [vmem:[%s2 + $0x80] sm:$0xff]
    %v184 = vld [vmem:[%s2 + $0x88] sm:$0xff]
    %v185 = vld [vmem:[%s2 + $0x90] sm:$0xff]
    %v186 = vld [vmem:[%s2 + $0x98] sm:$0xff]
    %v187 = vld [vmem:[%s2 + $0xa0] sm:$0xff]
    %v188 = vld [vmem:[%s2 + $0xa8] sm:$0xff]
    %v189 = vld [vmem:[%s2 + $0xb0] sm:$0xff]
    %v190 = vld [vmem:[%s2 + $0xb8] sm:$0xff]
    %v191 = vld [vmem:[%s2 + $0xc0] sm:$0xff]
    %v192 = vld [vmem:[%s2 + $0xc8] sm:$0xff]
    %v193 = vld [vmem:[%s2 + $0xd0] sm:$0xff]
    %v194 = vld [vmem:[%s2 + $0xd8] sm:$0xff]
    %v195 = vld [vmem:[%s2 + $0xe0] sm:$0xff]
    %v196 = vld [vmem:[%s2 + $0xe8] sm:$0xff]
    %v197 = vld [vmem:[%s2 + $0xf0] sm:$0xff]
    %v198 = vld [vmem:[%s2 + $0xf8] sm:$0xff]
    %199 = vst [vmem:[#allocation2] sm:$0xff] %v167
    %200 = vst [vmem:[#allocation2 + $0x8] sm:$0xff] %v168
    %201 = vst [vmem:[#allocation2 + $0x10] sm:$0xff] %v169
    %202 = vst [vmem:[#allocation2 + $0x18] sm:$0xff] %v170
    %203 = vst [vmem:[#allocation2 + $0x20] sm:$0xff] %v171
    %204 = vst [vmem:[#allocation2 + $0x28] sm:$0xff] %v172
    %205 = vst [vmem:[#allocation2 + $0x30] sm:$0xff] %v173
    %206 = vst [vmem:[#allocation2 + $0x38] sm:$0xff] %v174
    %207 = vst [vmem:[#allocation2 + $0x40] sm:$0xff] %v175
    %208 = vst [vmem:[#allocation2 + $0x48] sm:$0xff] %v176
    %209 = vst [vmem:[#allocation2 + $0x50] sm:$0xff] %v177
    %210 = vst [vmem:[#allocation2 + $0x58] sm:$0xff] %v178
    %211 = vst [vmem:[#allocation2 + $0x60] sm:$0xff] %v179
    %212 = vst [vmem:[#allocation2 + $0x68] sm:$0xff] %v180
    %213 = vst [vmem:[#allocation2 + $0x70] sm:$0xff] %v181
    %214 = vst [vmem:[#allocation2 + $0x78] sm:$0xff] %v182
    %215 = vst [vmem:[#allocation2 + $0x80] sm:$0xff] %v183
    %216 = vst [vmem:[#allocation2 + $0x88] sm:$0xff] %v184
    %217 = vst [vmem:[#allocation2 + $0x90] sm:$0xff] %v185
    %218 = vst [vmem:[#allocation2 + $0x98] sm:$0xff] %v186
    %219 = vst [vmem:[#allocation2 + $0xa0] sm:$0xff] %v187
    %220 = vst [vmem:[#allocation2 + $0xa8] sm:$0xff] %v188
    %221 = vst [vmem:[#allocation2 + $0xb0] sm:$0xff] %v189
    %222 = vst [vmem:[#allocation2 + $0xb8] sm:$0xff] %v190
    %223 = vst [vmem:[#allocation2 + $0xc0] sm:$0xff] %v191
    %224 = vst [vmem:[#allocation2 + $0xc8] sm:$0xff] %v192
    %225 = vst [vmem:[#allocation2 + $0xd0] sm:$0xff] %v193
    %226 = vst [vmem:[#allocation2 + $0xd8] sm:$0xff] %v194
    %227 = vst [vmem:[#allocation2 + $0xe0] sm:$0xff] %v195
    %228 = vst [vmem:[#allocation2 + $0xe8] sm:$0xff] %v196
    %229 = vst [vmem:[#allocation2 + $0xf0] sm:$0xff] %v197
    %230 = vst [vmem:[#allocation2 + $0xf8] sm:$0xff] %v198
  $region33: #{gnn_node_virtualnode_forward.2} parent=0 // pred_fallthru
    _
  %s231 = sld [smem:[#allocation5]]
  %p232 = scmp.lt.s32.totalorder 0, %s231
  // Predicated region
  $region34: #{gnn_node_virtualnode_forward.2} parent=0 // pred_check
    %p233 = pneg %p232
  $region35: #{gnn_node_virtualnode_forward.2} parent=0 // pred_check_branch
    %235 = sbr.rel (%p233) target = $region37
  $region36: #{gnn_node_virtualnode_forward.2} parent=0 // pred_region
    %v236 = vld [vmem:[%s150] sm:$0xf]
    %v237 = vld [vmem:[%s150 + $0x4] sm:$0xf]
    %v238 = vld [vmem:[%s150 + $0x8] sm:$0xf]
    %v239 = vld [vmem:[%s150 + $0xc] sm:$0xf]
    %v240 = vld [vmem:[%s150 + $0x10] sm:$0xf]
    %v241 = vld [vmem:[%s150 + $0x14] sm:$0xf]
    %v242 = vld [vmem:[%s150 + $0x18] sm:$0xf]
    %v243 = vld [vmem:[%s150 + $0x1c] sm:$0xf]
    %v244 = vld [vmem:[%s150 + $0x20] sm:$0xf]
    %v245 = vld [vmem:[%s150 + $0x24] sm:$0xf]
    %v246 = vld [vmem:[%s150 + $0x28] sm:$0xf]
    %v247 = vld [vmem:[%s150 + $0x2c] sm:$0xf]
    %v248 = vld [vmem:[%s150 + $0x30] sm:$0xf]
    %v249 = vld [vmem:[%s150 + $0x34] sm:$0xf]
    %v250 = vld [vmem:[%s150 + $0x38] sm:$0xf]
    %v251 = vld [vmem:[%s150 + $0x3c] sm:$0xf]
    %v252 = vld [vmem:[%s150 + $0x40] sm:$0xf]
    %v253 = vld [vmem:[%s150 + $0x44] sm:$0xf]
    %v254 = vld [vmem:[%s150 + $0x48] sm:$0xf]
    %v255 = vld [vmem:[%s150 + $0x4c] sm:$0xf]
    %v256 = vld [vmem:[%s150 + $0x50] sm:$0xf]
    %v257 = vld [vmem:[%s150 + $0x54] sm:$0xf]
    %v258 = vld [vmem:[%s150 + $0x58] sm:$0xf]
    %v259 = vld [vmem:[%s150 + $0x5c] sm:$0xf]
    %v260 = vld [vmem:[%s150 + $0x60] sm:$0xf]
    %v261 = vld [vmem:[%s150 + $0x64] sm:$0xf]
    %v262 = vld [vmem:[%s150 + $0x68] sm:$0xf]
    %v263 = vld [vmem:[%s150 + $0x6c] sm:$0xf]
    %v264 = vld [vmem:[%s150 + $0x70] sm:$0xf]
    %v265 = vld [vmem:[%s150 + $0x74] sm:$0xf]
    %v266 = vld [vmem:[%s150 + $0x78] sm:$0xf]
    %v267 = vld [vmem:[%s150 + $0x7c] sm:$0xf]
    %v268 = vmax.bf16 %v236, 0
    %v269 = vmax.bf16 %v237, 0
    %v270 = vmax.bf16 %v238, 0
    %v271 = vmax.bf16 %v239, 0
    %v272 = vmax.bf16 %v240, 0
    %v273 = vmax.bf16 %v241, 0
    %v274 = vmax.bf16 %v242, 0
    %v275 = vmax.bf16 %v243, 0
    %v276 = vmax.bf16 %v244, 0
    %v277 = vmax.bf16 %v245, 0
    %v278 = vmax.bf16 %v246, 0
    %v279 = vmax.bf16 %v247, 0
    %v280 = vmax.bf16 %v248, 0
    %v281 = vmax.bf16 %v249, 0
    %v282 = vmax.bf16 %v250, 0
    %v283 = vmax.bf16 %v251, 0
    %v284 = vmax.bf16 %v252, 0
    %v285 = vmax.bf16 %v253, 0
    %v286 = vmax.bf16 %v254, 0
    %v287 = vmax.bf16 %v255, 0
    %v288 = vmax.bf16 %v256, 0
    %v289 = vmax.bf16 %v257, 0
    %v290 = vmax.bf16 %v258, 0
    %v291 = vmax.bf16 %v259, 0
    %v292 = vmax.bf16 %v260, 0
    %v293 = vmax.bf16 %v261, 0
    %v294 = vmax.bf16 %v262, 0
    %v295 = vmax.bf16 %v263, 0
    %v296 = vmax.bf16 %v264, 0
    %v297 = vmax.bf16 %v265, 0
    %v298 = vmax.bf16 %v266, 0
    %v299 = vmax.bf16 %v267, 0
    %v300 = vld [vmem:[%s125] sm:$0xff]
    %v301 = vld [vmem:[%s125 + $0x8] sm:$0xff]
    %v302 = vlaneseq
    %v303 = vshrl.u32 %v302, 7
    %v304 = vadd.s32 %v303, 8
    %v305 = vadd.s32 %v303, 16
    %v306 = vadd.s32 %v303, 24
    %v307 = vadd.s32 %v303, 32
    %v308 = vadd.s32 %v303, 40
    %v309 = vadd.s32 %v303, 48
    %v310 = vadd.s32 %v303, 56
    %v311 = vadd.s32 %v303, 64
    %v312 = vadd.s32 %v303, 72
    %v313 = vadd.s32 %v303, 80
    %v314 = vadd.s32 %v303, 88
    %v315 = vadd.s32 %v303, 96
    %v316 = vadd.s32 %v303, 104
    %v317 = vadd.s32 %v303, 112
    %v318 = vadd.s32 %v303, 120
    %v319 = vadd.s32 %v303, 128
    %v320 = vadd.s32 %v303, 136
    %v321 = vadd.s32 %v303, 144
    %v322 = vadd.s32 %v303, 152
    %v323 = vadd.s32 %v303, 160
    %v324 = vadd.s32 %v303, 168
    %v325 = vadd.s32 %v303, 176
    %v326 = vadd.s32 %v303, 184
    %v327 = vadd.s32 %v303, 192
    %v328 = vadd.s32 %v303, 200
    %v329 = vadd.s32 %v303, 208
    %v330 = vadd.s32 %v303, 216
    %v331 = vadd.s32 %v303, 224
    %v332 = vadd.s32 %v303, 232
    %v333 = vadd.s32 %v303, 240
    %v334 = vadd.s32 %v303, 248
    %v335 = vlaneseq
    %v336 = vshrl.u32 %v335, 7
    %v337 = vsub.s32 0, %v336
    %v338 = vrot.slane %v300, %v337
    %v339 = vlaneseq
    %v340 = vshrl.u32 %v339, 7
    %v341 = vsub.s32 0, %v340
    %v342 = vrot.slane %v301, %v341
    %vm343 = vcmp.eq.s32.totalorder %v338, %v303
    %vm344 = vcmp.eq.s32.totalorder %v342, %v303
    %vm345 = vcmp.eq.s32.totalorder %v338, %v304
    %vm346 = vcmp.eq.s32.totalorder %v342, %v304
    %vm347 = vcmp.eq.s32.totalorder %v338, %v305
    %vm348 = vcmp.eq.s32.totalorder %v342, %v305
    %vm349 = vcmp.eq.s32.totalorder %v338, %v306
    %vm350 = vcmp.eq.s32.totalorder %v342, %v306
    %vm351 = vcmp.eq.s32.totalorder %v338, %v307
    %vm352 = vcmp.eq.s32.totalorder %v342, %v307
    %vm353 = vcmp.eq.s32.totalorder %v338, %v308
    %vm354 = vcmp.eq.s32.totalorder %v342, %v308
    %vm355 = vcmp.eq.s32.totalorder %v338, %v309
    %vm356 = vcmp.eq.s32.totalorder %v342, %v309
    %vm357 = vcmp.eq.s32.totalorder %v338, %v310
    %vm358 = vcmp.eq.s32.totalorder %v342, %v310
    %vm359 = vcmp.eq.s32.totalorder %v338, %v311
    %vm360 = vcmp.eq.s32.totalorder %v342, %v311
    %vm361 = vcmp.eq.s32.totalorder %v338, %v312
    %vm362 = vcmp.eq.s32.totalorder %v342, %v312
    %vm363 = vcmp.eq.s32.totalorder %v338, %v313
    %vm364 = vcmp.eq.s32.totalorder %v342, %v313
    %vm365 = vcmp.eq.s32.totalorder %v338, %v314
    %vm366 = vcmp.eq.s32.totalorder %v342, %v314
    %vm367 = vcmp.eq.s32.totalorder %v338, %v315
    %vm368 = vcmp.eq.s32.totalorder %v342, %v315
    %vm369 = vcmp.eq.s32.totalorder %v338, %v316
    %vm370 = vcmp.eq.s32.totalorder %v342, %v316
    %vm371 = vcmp.eq.s32.totalorder %v338, %v317
    %vm372 = vcmp.eq.s32.totalorder %v342, %v317
    %vm373 = vcmp.eq.s32.totalorder %v338, %v318
    %vm374 = vcmp.eq.s32.totalorder %v342, %v318
    %vm375 = vcmp.eq.s32.totalorder %v338, %v319
    %vm376 = vcmp.eq.s32.totalorder %v342, %v319
    %vm377 = vcmp.eq.s32.totalorder %v338, %v320
    %vm378 = vcmp.eq.s32.totalorder %v342, %v320
    %vm379 = vcmp.eq.s32.totalorder %v338, %v321
    %vm380 = vcmp.eq.s32.totalorder %v342, %v321
    %vm381 = vcmp.eq.s32.totalorder %v338, %v322
    %vm382 = vcmp.eq.s32.totalorder %v342, %v322
    %vm383 = vcmp.eq.s32.totalorder %v338, %v323
    %vm384 = vcmp.eq.s32.totalorder %v342, %v323
    %vm385 = vcmp.eq.s32.totalorder %v338, %v324
    %vm386 = vcmp.eq.s32.totalorder %v342, %v324
    %vm387 = vcmp.eq.s32.totalorder %v338, %v325
    %vm388 = vcmp.eq.s32.totalorder %v342, %v325
    %vm389 = vcmp.eq.s32.totalorder %v338, %v326
    %vm390 = vcmp.eq.s32.totalorder %v342, %v326
    %vm391 = vcmp.eq.s32.totalorder %v338, %v327
    %vm392 = vcmp.eq.s32.totalorder %v342, %v327
    %vm393 = vcmp.eq.s32.totalorder %v338, %v328
    %vm394 = vcmp.eq.s32.totalorder %v342, %v328
    %vm395 = vcmp.eq.s32.totalorder %v338, %v329
    %vm396 = vcmp.eq.s32.totalorder %v342, %v329
    %vm397 = vcmp.eq.s32.totalorder %v338, %v330
    %vm398 = vcmp.eq.s32.totalorder %v342, %v330
    %vm399 = vcmp.eq.s32.totalorder %v338, %v331
    %vm400 = vcmp.eq.s32.totalorder %v342, %v331
    %vm401 = vcmp.eq.s32.totalorder %v338, %v332
    %vm402 = vcmp.eq.s32.totalorder %v342, %v332
    %vm403 = vcmp.eq.s32.totalorder %v338, %v333
    %vm404 = vcmp.eq.s32.totalorder %v342, %v333
    %vm405 = vcmp.eq.s32.totalorder %v338, %v334
    %vm406 = vcmp.eq.s32.totalorder %v342, %v334
    %v407 = vsel %vm343, 1, 0
    %v408 = vsel %vm344, 1, 0
    %v409 = vsel %vm345, 1, 0
    %v410 = vsel %vm346, 1, 0
    %v411 = vsel %vm347, 1, 0
    %v412 = vsel %vm348, 1, 0
    %v413 = vsel %vm349, 1, 0
    %v414 = vsel %vm350, 1, 0
    %v415 = vsel %vm351, 1, 0
    %v416 = vsel %vm352, 1, 0
    %v417 = vsel %vm353, 1, 0
    %v418 = vsel %vm354, 1, 0
    %v419 = vsel %vm355, 1, 0
    %v420 = vsel %vm356, 1, 0
    %v421 = vsel %vm357, 1, 0
    %v422 = vsel %vm358, 1, 0
    %v423 = vsel %vm359, 1, 0
    %v424 = vsel %vm360, 1, 0
    %v425 = vsel %vm361, 1, 0
    %v426 = vsel %vm362, 1, 0
    %v427 = vsel %vm363, 1, 0
    %v428 = vsel %vm364, 1, 0
    %v429 = vsel %vm365, 1, 0
    %v430 = vsel %vm366, 1, 0
    %v431 = vsel %vm367, 1, 0
    %v432 = vsel %vm368, 1, 0
    %v433 = vsel %vm369, 1, 0
    %v434 = vsel %vm370, 1, 0
    %v435 = vsel %vm371, 1, 0
    %v436 = vsel %vm372, 1, 0
    %v437 = vsel %vm373, 1, 0
    %v438 = vsel %vm374, 1, 0
    %v439 = vsel %vm375, 1, 0
    %v440 = vsel %vm376, 1, 0
    %v441 = vsel %vm377, 1, 0
    %v442 = vsel %vm378, 1, 0
    %v443 = vsel %vm379, 1, 0
    %v444 = vsel %vm380, 1, 0
    %v445 = vsel %vm381, 1, 0
    %v446 = vsel %vm382, 1, 0
    %v447 = vsel %vm383, 1, 0
    %v448 = vsel %vm384, 1, 0
    %v449 = vsel %vm385, 1, 0
    %v450 = vsel %vm386, 1, 0
    %v451 = vsel %vm387, 1, 0
    %v452 = vsel %vm388, 1, 0
    %v453 = vsel %vm389, 1, 0
    %v454 = vsel %vm390, 1, 0
    %v455 = vsel %vm391, 1, 0
    %v456 = vsel %vm392, 1, 0
    %v457 = vsel %vm393, 1, 0
    %v458 = vsel %vm394, 1, 0
    %v459 = vsel %vm395, 1, 0
    %v460 = vsel %vm396, 1, 0
    %v461 = vsel %vm397, 1, 0
    %v462 = vsel %vm398, 1, 0
    %v463 = vsel %vm399, 1, 0
    %v464 = vsel %vm400, 1, 0
    %v465 = vsel %vm401, 1, 0
    %v466 = vsel %vm402, 1, 0
    %v467 = vsel %vm403, 1, 0
    %v468 = vsel %vm404, 1, 0
    %v469 = vsel %vm405, 1, 0
    %v470 = vsel %vm406, 1, 0
    %v471 = vcvt.s32.f32 %v407
    %v472 = vcvt.s32.f32 %v408
    %v473 = vcvt.s32.f32 %v409
    %v474 = vcvt.s32.f32 %v410
    %v475 = vcvt.s32.f32 %v411
    %v476 = vcvt.s32.f32 %v412
    %v477 = vcvt.s32.f32 %v413
    %v478 = vcvt.s32.f32 %v414
    %v479 = vcvt.s32.f32 %v415
    %v480 = vcvt.s32.f32 %v416
    %v481 = vcvt.s32.f32 %v417
    %v482 = vcvt.s32.f32 %v418
    %v483 = vcvt.s32.f32 %v419
    %v484 = vcvt.s32.f32 %v420
    %v485 = vcvt.s32.f32 %v421
    %v486 = vcvt.s32.f32 %v422
    %v487 = vcvt.s32.f32 %v423
    %v488 = vcvt.s32.f32 %v424
    %v489 = vcvt.s32.f32 %v425
    %v490 = vcvt.s32.f32 %v426
    %v491 = vcvt.s32.f32 %v427
    %v492 = vcvt.s32.f32 %v428
    %v493 = vcvt.s32.f32 %v429
    %v494 = vcvt.s32.f32 %v430
    %v495 = vcvt.s32.f32 %v431
    %v496 = vcvt.s32.f32 %v432
    %v497 = vcvt.s32.f32 %v433
    %v498 = vcvt.s32.f32 %v434
    %v499 = vcvt.s32.f32 %v435
    %v500 = vcvt.s32.f32 %v436
    %v501 = vcvt.s32.f32 %v437
    %v502 = vcvt.s32.f32 %v438
    %v503 = vcvt.s32.f32 %v439
    %v504 = vcvt.s32.f32 %v440
    %v505 = vcvt.s32.f32 %v441
    %v506 = vcvt.s32.f32 %v442
    %v507 = vcvt.s32.f32 %v443
    %v508 = vcvt.s32.f32 %v444
    %v509 = vcvt.s32.f32 %v445
    %v510 = vcvt.s32.f32 %v446
    %v511 = vcvt.s32.f32 %v447
    %v512 = vcvt.s32.f32 %v448
    %v513 = vcvt.s32.f32 %v449
    %v514 = vcvt.s32.f32 %v450
    %v515 = vcvt.s32.f32 %v451
    %v516 = vcvt.s32.f32 %v452
    %v517 = vcvt.s32.f32 %v453
    %v518 = vcvt.s32.f32 %v454
    %v519 = vcvt.s32.f32 %v455
    %v520 = vcvt.s32.f32 %v456
    %v521 = vcvt.s32.f32 %v457
    %v522 = vcvt.s32.f32 %v458
    %v523 = vcvt.s32.f32 %v459
    %v524 = vcvt.s32.f32 %v460
    %v525 = vcvt.s32.f32 %v461
    %v526 = vcvt.s32.f32 %v462
    %v527 = vcvt.s32.f32 %v463
    %v528 = vcvt.s32.f32 %v464
    %v529 = vcvt.s32.f32 %v465
    %v530 = vcvt.s32.f32 %v466
    %v531 = vcvt.s32.f32 %v467
    %v532 = vcvt.s32.f32 %v468
    %v533 = vcvt.s32.f32 %v469
    %v534 = vcvt.s32.f32 %v470
    %v535 = vpack.c.bf16 %v473, %v471
    %v536 = vpack.c.bf16 %v474, %v472
    %v537 = vpack.c.bf16 %v477, %v475
    %v538 = vpack.c.bf16 %v478, %v476
    %v539 = vpack.c.bf16 %v481, %v479
    %v540 = vpack.c.bf16 %v482, %v480
    %v541 = vpack.c.bf16 %v485, %v483
    %v542 = vpack.c.bf16 %v486, %v484
    %v543 = vpack.c.bf16 %v489, %v487
    %v544 = vpack.c.bf16 %v490, %v488
    %v545 = vpack.c.bf16 %v493, %v491
    %v546 = vpack.c.bf16 %v494, %v492
    %v547 = vpack.c.bf16 %v497, %v495
    %v548 = vpack.c.bf16 %v498, %v496
    %v549 = vpack.c.bf16 %v501, %v499
    %v550 = vpack.c.bf16 %v502, %v500
    %v551 = vpack.c.bf16 %v505, %v503
    %v552 = vpack.c.bf16 %v506, %v504
    %v553 = vpack.c.bf16 %v509, %v507
    %v554 = vpack.c.bf16 %v510, %v508
    %v555 = vpack.c.bf16 %v513, %v511
    %v556 = vpack.c.bf16 %v514, %v512
    %v557 = vpack.c.bf16 %v517, %v515
    %v558 = vpack.c.bf16 %v518, %v516
    %v559 = vpack.c.bf16 %v521, %v519
    %v560 = vpack.c.bf16 %v522, %v520
    %v561 = vpack.c.bf16 %v525, %v523
    %v562 = vpack.c.bf16 %v526, %v524
    %v563 = vpack.c.bf16 %v529, %v527
    %v564 = vpack.c.bf16 %v530, %v528
    %v565 = vpack.c.bf16 %v533, %v531
    %v566 = vpack.c.bf16 %v534, %v532
    %v567 = vld [vmem:[#allocation2] sm:$0xff]
    %v568 = vld [vmem:[#allocation2 + $0x8] sm:$0xff]
    %v569 = vld [vmem:[#allocation2 + $0x10] sm:$0xff]
    %v570 = vld [vmem:[#allocation2 + $0x18] sm:$0xff]
    %v571 = vld [vmem:[#allocation2 + $0x20] sm:$0xff]
    %v572 = vld [vmem:[#allocation2 + $0x28] sm:$0xff]
    %v573 = vld [vmem:[#allocation2 + $0x30] sm:$0xff]
    %v574 = vld [vmem:[#allocation2 + $0x38] sm:$0xff]
    %v575 = vld [vmem:[#allocation2 + $0x40] sm:$0xff]
    %v576 = vld [vmem:[#allocation2 + $0x48] sm:$0xff]
    %v577 = vld [vmem:[#allocation2 + $0x50] sm:$0xff]
    %v578 = vld [vmem:[#allocation2 + $0x58] sm:$0xff]
    %v579 = vld [vmem:[#allocation2 + $0x60] sm:$0xff]
    %v580 = vld [vmem:[#allocation2 + $0x68] sm:$0xff]
    %v581 = vld [vmem:[#allocation2 + $0x70] sm:$0xff]
    %v582 = vld [vmem:[#allocation2 + $0x78] sm:$0xff]
    %v583 = vld [vmem:[#allocation2 + $0x80] sm:$0xff]
    %v584 = vld [vmem:[#allocation2 + $0x88] sm:$0xff]
    %v585 = vld [vmem:[#allocation2 + $0x90] sm:$0xff]
    %v586 = vld [vmem:[#allocation2 + $0x98] sm:$0xff]
    %v587 = vld [vmem:[#allocation2 + $0xa0] sm:$0xff]
    %v588 = vld [vmem:[#allocation2 + $0xa8] sm:$0xff]
    %v589 = vld [vmem:[#allocation2 + $0xb0] sm:$0xff]
    %v590 = vld [vmem:[#allocation2 + $0xb8] sm:$0xff]
    %v591 = vld [vmem:[#allocation2 + $0xc0] sm:$0xff]
    %v592 = vld [vmem:[#allocation2 + $0xc8] sm:$0xff]
    %v593 = vld [vmem:[#allocation2 + $0xd0] sm:$0xff]
    %v594 = vld [vmem:[#allocation2 + $0xd8] sm:$0xff]
    %v595 = vld [vmem:[#allocation2 + $0xe0] sm:$0xff]
    %v596 = vld [vmem:[#allocation2 + $0xe8] sm:$0xff]
    %v597 = vld [vmem:[#allocation2 + $0xf0] sm:$0xff]
    %v598 = vld [vmem:[#allocation2 + $0xf8] sm:$0xff]
    %v631 = vunpack.c.l.b16 %v268
    %v632 = vunpack.c.l.b16 %v269
    %v633 = vunpack.c.l.b16 %v270
    %v634 = vunpack.c.l.b16 %v271
    %v635 = vunpack.c.l.b16 %v272
    %v636 = vunpack.c.l.b16 %v273
    %v637 = vunpack.c.l.b16 %v274
    %v638 = vunpack.c.l.b16 %v275
    %v639 = vunpack.c.l.b16 %v276
    %v640 = vunpack.c.l.b16 %v277
    %v641 = vunpack.c.l.b16 %v278
    %v642 = vunpack.c.l.b16 %v279
    %v643 = vunpack.c.l.b16 %v280
    %v644 = vunpack.c.l.b16 %v281
    %v645 = vunpack.c.l.b16 %v282
    %v646 = vunpack.c.l.b16 %v283
    %v647 = vunpack.c.l.b16 %v284
    %v648 = vunpack.c.l.b16 %v285
    %v649 = vunpack.c.l.b16 %v286
    %v650 = vunpack.c.l.b16 %v287
    %v651 = vunpack.c.l.b16 %v288
    %v652 = vunpack.c.l.b16 %v289
    %v653 = vunpack.c.l.b16 %v290
    %v654 = vunpack.c.l.b16 %v291
    %v655 = vunpack.c.l.b16 %v292
    %v656 = vunpack.c.l.b16 %v293
    %v657 = vunpack.c.l.b16 %v294
    %v658 = vunpack.c.l.b16 %v295
    %v659 = vunpack.c.l.b16 %v296
    %v660 = vunpack.c.l.b16 %v297
    %v661 = vunpack.c.l.b16 %v298
    %v662 = vunpack.c.l.b16 %v299
    %v663 = vpack.c.b16 %v632, %v631
    %v664 = vpack.c.b16 %v634, %v633
    %v665 = vpack.c.b16 %v636, %v635
    %v666 = vpack.c.b16 %v638, %v637
    %v667 = vpack.c.b16 %v640, %v639
    %v668 = vpack.c.b16 %v642, %v641
    %v669 = vpack.c.b16 %v644, %v643
    %v670 = vpack.c.b16 %v646, %v645
    %v671 = vpack.c.b16 %v648, %v647
    %v672 = vpack.c.b16 %v650, %v649
    %v673 = vpack.c.b16 %v652, %v651
    %v674 = vpack.c.b16 %v654, %v653
    %v675 = vpack.c.b16 %v656, %v655
    %v676 = vpack.c.b16 %v658, %v657
    %v677 = vpack.c.b16 %v660, %v659
    %v678 = vpack.c.b16 %v662, %v661
    %695 = vmatprep.subr.bf16.mxu0 0
    %696 = vmatpush1.bf16.msra.mxu0 %v663
    %697 = vmatprep.subr.bf16.mxu0 0
    %698 = vmatpush1.bf16.msra.mxu0 %v664
    %699 = vmatprep.subr.bf16.mxu0 0
    %700 = vmatpush1.bf16.msra.mxu0 %v665
    %701 = vmatprep.subr.bf16.mxu0 0
    %702 = vmatpush1.bf16.msra.mxu0 %v666
    %703 = vmatprep.subr.bf16.mxu0 0
    %704 = vmatpush1.bf16.msra.mxu0 %v667
    %705 = vmatprep.subr.bf16.mxu0 0
    %706 = vmatpush1.bf16.msra.mxu0 %v668
    %707 = vmatprep.subr.bf16.mxu0 0
    %708 = vmatpush1.bf16.msra.mxu0 %v669
    %709 = vmatprep.subr.bf16.mxu0 0
    %710 = vmatpush1.bf16.msra.mxu0 %v670
    %711 = vmatprep.subr.bf16.mxu0 0
    %712 = vmatpush1.bf16.msra.mxu0 %v671
    %713 = vmatprep.subr.bf16.mxu0 0
    %714 = vmatpush1.bf16.msra.mxu0 %v672
    %715 = vmatprep.subr.bf16.mxu0 0
    %716 = vmatpush1.bf16.msra.mxu0 %v673
    %717 = vmatprep.subr.bf16.mxu0 0
    %718 = vmatpush1.bf16.msra.mxu0 %v674
    %719 = vmatprep.subr.bf16.mxu0 0
    %720 = vmatpush1.bf16.msra.mxu0 %v675
    %721 = vmatprep.subr.bf16.mxu0 0
    %722 = vmatpush1.bf16.msra.mxu0 %v676
    %723 = vmatprep.subr.bf16.mxu0 0
    %724 = vmatpush1.bf16.msra.mxu0 %v677
    %725 = vmatprep.subr.bf16.mxu0 0
    %726 = vmatpush1.bf16.msra.mxu0 %v678
    %727 = vmatprep.mubr.bf16.mxu0 %v536
    %728 = vmatmul.mubr.bf16.gmra.mrb[0].mxu0 %v535
    %v729 = vpop.f32.mrb[0].mxu0
    %v730 = vadd.f32 0.0, %v729
    %v731 = vpop.f32.mrb[0].mxu0
    %v732 = vpop.f32.mrb[0].mxu0
    %v733 = vadd.f32 0.0, %v732
    %v734 = vpop.f32.mrb[0].mxu0
    %735 = vmatprep.mubr.bf16.mxu0 %v538
    %736 = vmatmul.mubr.bf16.gmra.mrb[0].mxu0 %v537
    %v737 = vpop.f32.mrb[0].mxu0
    %v738 = vadd.f32 0.0, %v737
    %v739 = vpop.f32.mrb[0].mxu0
    %v740 = vpop.f32.mrb[0].mxu0
    %v741 = vadd.f32 0.0, %v740
    %v742 = vpop.f32.mrb[0].mxu0
    %743 = vmatprep.mubr.bf16.mxu0 %v540
    %744 = vmatmul.mubr.bf16.gmra.mrb[0].mxu0 %v539
    %v745 = vpop.f32.mrb[0].mxu0
    %v746 = vadd.f32 0.0, %v745
    %v747 = vpop.f32.mrb[0].mxu0
    %v748 = vpop.f32.mrb[0].mxu0
    %v749 = vadd.f32 0.0, %v748
    %v750 = vpop.f32.mrb[0].mxu0
    %751 = vmatprep.mubr.bf16.mxu0 %v542
    %752 = vmatmul.mubr.bf16.gmra.mrb[0].mxu0 %v541
    %v753 = vpop.f32.mrb[0].mxu0
    %v754 = vadd.f32 0.0, %v753
    %v755 = vpop.f32.mrb[0].mxu0
    %v756 = vpop.f32.mrb[0].mxu0
    %v757 = vadd.f32 0.0, %v756
    %v758 = vpop.f32.mrb[0].mxu0
    %759 = vmatprep.mubr.bf16.mxu0 %v544
    %760 = vmatmul.mubr.bf16.gmra.mrb[0].mxu0 %v543
    %v761 = vpop.f32.mrb[0].mxu0
    %v762 = vadd.f32 0.0, %v761
    %v763 = vpop.f32.mrb[0].mxu0
    %v764 = vpop.f32.mrb[0].mxu0
    %v765 = vadd.f32 0.0, %v764
    %v766 = vpop.f32.mrb[0].mxu0
    %767 = vmatprep.mubr.bf16.mxu0 %v546
    %768 = vmatmul.mubr.bf16.gmra.mrb[0].mxu0 %v545
    %v769 = vpop.f32.mrb[0].mxu0
    %v770 = vadd.f32 0.0, %v769
    %v771 = vpop.f32.mrb[0].mxu0
    %v772 = vpop.f32.mrb[0].mxu0
    %v773 = vadd.f32 0.0, %v772
    %v774 = vpop.f32.mrb[0].mxu0
    %775 = vmatprep.mubr.bf16.mxu0 %v548
    %776 = vmatmul.mubr.bf16.gmra.mrb[0].mxu0 %v547
    %v777 = vpop.f32.mrb[0].mxu0
    %v778 = vadd.f32 0.0, %v777
    %v779 = vpop.f32.mrb[0].mxu0
    %v780 = vpop.f32.mrb[0].mxu0
    %v781 = vadd.f32 0.0, %v780
    %v782 = vpop.f32.mrb[0].mxu0
    %783 = vmatprep.mubr.bf16.mxu0 %v550
    %784 = vmatmul.mubr.bf16.gmra.mrb[0].mxu0 %v549
    %v785 = vpop.f32.mrb[0].mxu0
    %v786 = vadd.f32 0.0, %v785
    %v787 = vpop.f32.mrb[0].mxu0
    %v788 = vpop.f32.mrb[0].mxu0
    %v789 = vadd.f32 0.0, %v788
    %v790 = vpop.f32.mrb[0].mxu0
    %791 = vmatprep.mubr.bf16.mxu0 %v552
    %792 = vmatmul.mubr.bf16.gmra.mrb[0].mxu0 %v551
    %v793 = vpop.f32.mrb[0].mxu0
    %v794 = vadd.f32 0.0, %v793
    %v795 = vpop.f32.mrb[0].mxu0
    %v796 = vpop.f32.mrb[0].mxu0
    %v797 = vadd.f32 0.0, %v796
    %v798 = vpop.f32.mrb[0].mxu0
    %799 = vmatprep.mubr.bf16.mxu0 %v554
    %800 = vmatmul.mubr.bf16.gmra.mrb[0].mxu0 %v553
    %v801 = vpop.f32.mrb[0].mxu0
    %v802 = vadd.f32 0.0, %v801
    %v803 = vpop.f32.mrb[0].mxu0
    %v804 = vpop.f32.mrb[0].mxu0
    %v805 = vadd.f32 0.0, %v804
    %v806 = vpop.f32.mrb[0].mxu0
    %807 = vmatprep.mubr.bf16.mxu0 %v556
    %808 = vmatmul.mubr.bf16.gmra.mrb[0].mxu0 %v555
    %v809 = vpop.f32.mrb[0].mxu0
    %v810 = vadd.f32 0.0, %v809
    %v811 = vpop.f32.mrb[0].mxu0
    %v812 = vpop.f32.mrb[0].mxu0
    %v813 = vadd.f32 0.0, %v812
    %v814 = vpop.f32.mrb[0].mxu0
    %815 = vmatprep.mubr.bf16.mxu0 %v558
    %816 = vmatmul.mubr.bf16.gmra.mrb[0].mxu0 %v557
    %v817 = vpop.f32.mrb[0].mxu0
    %v818 = vadd.f32 0.0, %v817
    %v819 = vpop.f32.mrb[0].mxu0
    %v820 = vpop.f32.mrb[0].mxu0
    %v821 = vadd.f32 0.0, %v820
    %v822 = vpop.f32.mrb[0].mxu0
    %823 = vmatprep.mubr.bf16.mxu0 %v560
    %824 = vmatmul.mubr.bf16.gmra.mrb[0].mxu0 %v559
    %v825 = vpop.f32.mrb[0].mxu0
    %v826 = vadd.f32 0.0, %v825
    %v827 = vpop.f32.mrb[0].mxu0
    %v828 = vpop.f32.mrb[0].mxu0
    %v829 = vadd.f32 0.0, %v828
    %v830 = vpop.f32.mrb[0].mxu0
    %831 = vmatprep.mubr.bf16.mxu0 %v562
    %832 = vmatmul.mubr.bf16.gmra.mrb[0].mxu0 %v561
    %v833 = vpop.f32.mrb[0].mxu0
    %v834 = vadd.f32 0.0, %v833
    %v835 = vpop.f32.mrb[0].mxu0
    %v836 = vpop.f32.mrb[0].mxu0
    %v837 = vadd.f32 0.0, %v836
    %v838 = vpop.f32.mrb[0].mxu0
    %839 = vmatprep.mubr.bf16.mxu0 %v564
    %840 = vmatmul.mubr.bf16.gmra.mrb[0].mxu0 %v563
    %v841 = vpop.f32.mrb[0].mxu0
    %v842 = vadd.f32 0.0, %v841
    %v843 = vpop.f32.mrb[0].mxu0
    %v844 = vpop.f32.mrb[0].mxu0
    %v845 = vadd.f32 0.0, %v844
    %v846 = vpop.f32.mrb[0].mxu0
    %847 = vmatprep.mubr.bf16.mxu0 %v566
    %848 = vmatmul.mubr.bf16.gmra.mrb[0].mxu0 %v565
    %v849 = vpop.f32.mrb[0].mxu0
    %v850 = vadd.f32 0.0, %v849
    %v851 = vpop.f32.mrb[0].mxu0
    %v852 = vpop.f32.mrb[0].mxu0
    %v853 = vadd.f32 0.0, %v852
    %v854 = vpop.f32.mrb[0].mxu0
    %855 = vdwg.mxu0
    %v856 = vadd.f32 %v567, %v730
    %v857 = vadd.f32 %v568, %v733
    %v858 = vadd.f32 %v569, %v738
    %v859 = vadd.f32 %v570, %v741
    %v860 = vadd.f32 %v571, %v746
    %v861 = vadd.f32 %v572, %v749
    %v862 = vadd.f32 %v573, %v754
    %v863 = vadd.f32 %v574, %v757
    %v864 = vadd.f32 %v575, %v762
    %v865 = vadd.f32 %v576, %v765
    %v866 = vadd.f32 %v577, %v770
    %v867 = vadd.f32 %v578, %v773
    %v868 = vadd.f32 %v579, %v778
    %v869 = vadd.f32 %v580, %v781
    %v870 = vadd.f32 %v581, %v786
    %v871 = vadd.f32 %v582, %v789
    %v872 = vadd.f32 %v583, %v794
    %v873 = vadd.f32 %v584, %v797
    %v874 = vadd.f32 %v585, %v802
    %v875 = vadd.f32 %v586, %v805
    %v876 = vadd.f32 %v587, %v810
    %v877 = vadd.f32 %v588, %v813
    %v878 = vadd.f32 %v589, %v818
    %v879 = vadd.f32 %v590, %v821
    %v880 = vadd.f32 %v591, %v826
    %v881 = vadd.f32 %v592, %v829
    %v882 = vadd.f32 %v593, %v834
    %v883 = vadd.f32 %v594, %v837
    %v884 = vadd.f32 %v595, %v842
    %v885 = vadd.f32 %v596, %v845
    %v886 = vadd.f32 %v597, %v850
    %v887 = vadd.f32 %v598, %v853
    %888 = vst [vmem:[#allocation2] sm:$0xff] %v856
    %889 = vst [vmem:[#allocation2 + $0x8] sm:$0xff] %v857
    %890 = vst [vmem:[#allocation2 + $0x10] sm:$0xff] %v858
    %891 = vst [vmem:[#allocation2 + $0x18] sm:$0xff] %v859
    %892 = vst [vmem:[#allocation2 + $0x20] sm:$0xff] %v860
    %893 = vst [vmem:[#allocation2 + $0x28] sm:$0xff] %v861
    %894 = vst [vmem:[#allocation2 + $0x30] sm:$0xff] %v862
    %895 = vst [vmem:[#allocation2 + $0x38] sm:$0xff] %v863
    %896 = vst [vmem:[#allocation2 + $0x40] sm:$0xff] %v864
    %897 = vst [vmem:[#allocation2 + $0x48] sm:$0xff] %v865
    %898 = vst [vmem:[#allocation2 + $0x50] sm:$0xff] %v866
    %899 = vst [vmem:[#allocation2 + $0x58] sm:$0xff] %v867
    %900 = vst [vmem:[#allocation2 + $0x60] sm:$0xff] %v868
    %901 = vst [vmem:[#allocation2 + $0x68] sm:$0xff] %v869
    %902 = vst [vmem:[#allocation2 + $0x70] sm:$0xff] %v870
    %903 = vst [vmem:[#allocation2 + $0x78] sm:$0xff] %v871
    %904 = vst [vmem:[#allocation2 + $0x80] sm:$0xff] %v872
    %905 = vst [vmem:[#allocation2 + $0x88] sm:$0xff] %v873
    %906 = vst [vmem:[#allocation2 + $0x90] sm:$0xff] %v874
    %907 = vst [vmem:[#allocation2 + $0x98] sm:$0xff] %v875
    %908 = vst [vmem:[#allocation2 + $0xa0] sm:$0xff] %v876
    %909 = vst [vmem:[#allocation2 + $0xa8] sm:$0xff] %v877
    %910 = vst [vmem:[#allocation2 + $0xb0] sm:$0xff] %v878
    %911 = vst [vmem:[#allocation2 + $0xb8] sm:$0xff] %v879
    %912 = vst [vmem:[#allocation2 + $0xc0] sm:$0xff] %v880
    %913 = vst [vmem:[#allocation2 + $0xc8] sm:$0xff] %v881
    %914 = vst [vmem:[#allocation2 + $0xd0] sm:$0xff] %v882
    %915 = vst [vmem:[#allocation2 + $0xd8] sm:$0xff] %v883
    %916 = vst [vmem:[#allocation2 + $0xe0] sm:$0xff] %v884
    %917 = vst [vmem:[#allocation2 + $0xe8] sm:$0xff] %v885
    %918 = vst [vmem:[#allocation2 + $0xf0] sm:$0xff] %v886
    %919 = vst [vmem:[#allocation2 + $0xf8] sm:$0xff] %v887
  $region37: #{gnn_node_virtualnode_forward.2} parent=0 // pred_fallthru
    _
  // Predicated region
  $region38: #{gnn_node_virtualnode_forward.2} parent=0 // pred_check
    %p920 = pneg %p163
  $region39: #{gnn_node_virtualnode_forward.2} parent=0 // pred_check_branch
    %922 = sbr.rel (%p920) target = $region41
  $region40: #{gnn_node_virtualnode_forward.2} parent=0 // pred_region
    %v923 = vld [vmem:[#allocation2] sm:$0xff]
    %v924 = vld [vmem:[#allocation2 + $0x8] sm:$0xff]
    %v925 = vld [vmem:[#allocation2 + $0x10] sm:$0xff]
    %v926 = vld [vmem:[#allocation2 + $0x18] sm:$0xff]
    %v927 = vld [vmem:[#allocation2 + $0x20] sm:$0xff]
    %v928 = vld [vmem:[#allocation2 + $0x28] sm:$0xff]
    %v929 = vld [vmem:[#allocation2 + $0x30] sm:$0xff]
    %v930 = vld [vmem:[#allocation2 + $0x38] sm:$0xff]
    %v931 = vld [vmem:[#allocation2 + $0x40] sm:$0xff]
    %v932 = vld [vmem:[#allocation2 + $0x48] sm:$0xff]
    %v933 = vld [vmem:[#allocation2 + $0x50] sm:$0xff]
    %v934 = vld [vmem:[#allocation2 + $0x58] sm:$0xff]
    %v935 = vld [vmem:[#allocation2 + $0x60] sm:$0xff]
    %v936 = vld [vmem:[#allocation2 + $0x68] sm:$0xff]
    %v937 = vld [vmem:[#allocation2 + $0x70] sm:$0xff]
    %v938 = vld [vmem:[#allocation2 + $0x78] sm:$0xff]
    %v939 = vld [vmem:[#allocation2 + $0x80] sm:$0xff]
    %v940 = vld [vmem:[#allocation2 + $0x88] sm:$0xff]
    %v941 = vld [vmem:[#allocation2 + $0x90] sm:$0xff]
    %v942 = vld [vmem:[#allocation2 + $0x98] sm:$0xff]
    %v943 = vld [vmem:[#allocation2 + $0xa0] sm:$0xff]
    %v944 = vld [vmem:[#allocation2 + $0xa8] sm:$0xff]
    %v945 = vld [vmem:[#allocation2 + $0xb0] sm:$0xff]
    %v946 = vld [vmem:[#allocation2 + $0xb8] sm:$0xff]
    %v947 = vld [vmem:[#allocation2 + $0xc0] sm:$0xff]
    %v948 = vld [vmem:[#allocation2 + $0xc8] sm:$0xff]
    %v949 = vld [vmem:[#allocation2 + $0xd0] sm:$0xff]
    %v950 = vld [vmem:[#allocation2 + $0xd8] sm:$0xff]
    %v951 = vld [vmem:[#allocation2 + $0xe0] sm:$0xff]
    %v952 = vld [vmem:[#allocation2 + $0xe8] sm:$0xff]
    %v953 = vld [vmem:[#allocation2 + $0xf0] sm:$0xff]
    %v954 = vld [vmem:[#allocation2 + $0xf8] sm:$0xff]
    %v955 = vld [vmem:[%s5] sm:$0xff]
    %v956 = vld [vmem:[%s5 + $0x8] sm:$0xff]
    %v957 = vld [vmem:[%s5 + $0x10] sm:$0xff]
    %v958 = vld [vmem:[%s5 + $0x18] sm:$0xff]
    %v959 = vld [vmem:[%s5 + $0x20] sm:$0xff]
    %v960 = vld [vmem:[%s5 + $0x28] sm:$0xff]
    %v961 = vld [vmem:[%s5 + $0x30] sm:$0xff]
    %v962 = vld [vmem:[%s5 + $0x38] sm:$0xff]
    %v963 = vld [vmem:[%s5 + $0x40] sm:$0xff]
    %v964 = vld [vmem:[%s5 + $0x48] sm:$0xff]
    %v965 = vld [vmem:[%s5 + $0x50] sm:$0xff]
    %v966 = vld [vmem:[%s5 + $0x58] sm:$0xff]
    %v967 = vld [vmem:[%s5 + $0x60] sm:$0xff]
    %v968 = vld [vmem:[%s5 + $0x68] sm:$0xff]
    %v969 = vld [vmem:[%s5 + $0x70] sm:$0xff]
    %v970 = vld [vmem:[%s5 + $0x78] sm:$0xff]
    %v971 = vld [vmem:[%s6] sm:$0x1]
    %v973 = vlaneseq
    %v974 = vshrl.u32 %v973, 7
    %v975 = vsub.s32 0, %v974
    %v976 = vrot.slane %v971, %v975
    %978 = vmatprep.subr.mxu0 0.0
    %979 = vmatpush1.msra.mxu0 %v955
    %980 = vmatprep.subr.mxu0 0.0
    %981 = vmatpush1.msra.mxu0 %v956
    %982 = vmatprep.subr.mxu0 0.0
    %983 = vmatpush1.msra.mxu0 %v957
    %984 = vmatprep.subr.mxu0 0.0
    %985 = vmatpush1.msra.mxu0 %v958
    %986 = vmatprep.subr.mxu0 0.0
    %987 = vmatpush1.msra.mxu0 %v959
    %988 = vmatprep.subr.mxu0 0.0
    %989 = vmatpush1.msra.mxu0 %v960
    %990 = vmatprep.subr.mxu0 0.0
    %991 = vmatpush1.msra.mxu0 %v961
    %992 = vmatprep.subr.mxu0 0.0
    %993 = vmatpush1.msra.mxu0 %v962
    %994 = vmatprep.subr.mxu0 0.0
    %995 = vmatpush1.msra.mxu0 %v963
    %996 = vmatprep.subr.mxu0 0.0
    %997 = vmatpush1.msra.mxu0 %v964
    %998 = vmatprep.subr.mxu0 0.0
    %999 = vmatpush1.msra.mxu0 %v965
    %1000 = vmatprep.subr.mxu0 0.0
    %1001 = vmatpush1.msra.mxu0 %v966
    %1002 = vmatprep.subr.mxu0 0.0
    %1003 = vmatpush1.msra.mxu0 %v967
    %1004 = vmatprep.subr.mxu0 0.0
    %1005 = vmatpush1.msra.mxu0 %v968
    %1006 = vmatprep.subr.mxu0 0.0
    %1007 = vmatpush1.msra.mxu0 %v969
    %1008 = vmatprep.subr.mxu0 0.0
    %1009 = vmatpush1.msra.mxu0 %v970
    %1010 = vmatprep.subr.mxu0 0.0
    %1011 = vmatpush1.msra.mxu0 0.0
    %1012 = vmatprep.subr.mxu0 0.0
    %1013 = vmatpush1.msra.mxu0 0.0
    %1014 = vmatprep.subr.mxu0 0.0
    %1015 = vmatpush1.msra.mxu0 0.0
    %1016 = vmatprep.subr.mxu0 0.0
    %1017 = vmatpush1.msra.mxu0 0.0
    %1018 = vmatprep.subr.mxu0 0.0
    %1019 = vmatpush1.msra.mxu0 0.0
    %1020 = vmatprep.subr.mxu0 0.0
    %1021 = vmatpush1.msra.mxu0 0.0
    %1022 = vmatprep.subr.mxu0 0.0
    %1023 = vmatpush1.msra.mxu0 0.0
    %1024 = vmatprep.subr.mxu0 0.0
    %1025 = vmatpush1.msra.mxu0 0.0
    %1026 = vmatprep.subr.mxu0 0.0
    %1027 = vmatpush1.msra.mxu0 0.0
    %1028 = vmatprep.subr.mxu0 0.0
    %1029 = vmatpush1.msra.mxu0 0.0
    %1030 = vmatprep.subr.mxu0 0.0
    %1031 = vmatpush1.msra.mxu0 0.0
    %1032 = vmatprep.subr.mxu0 0.0
    %1033 = vmatpush1.msra.mxu0 0.0
    %1034 = vmatprep.subr.mxu0 0.0
    %1035 = vmatpush1.msra.mxu0 0.0
    %1036 = vmatprep.subr.mxu0 0.0
    %1037 = vmatpush1.msra.mxu0 0.0
    %1038 = vmatprep.subr.mxu0 0.0
    %1039 = vmatpush1.msra.mxu0 0.0
    %1040 = vmatprep.subr.mxu0 0.0
    %1041 = vmatpush1.msra.mxu0 0.0
    %1042 = vmatprep.mubr.f32.mxu0 0.0
    %1043 = vmatmul.mubr.f32.gmra.mrb[0].mxu0 %v923
    %v1044 = vpop.f32.mrb[0].mxu0
    %v1045 = vadd.f32 %v976, %v1044
    %v1046 = vpop.f32.mrb[0].mxu0
    %1047 = vmatprep.mubr.f32.mxu0 0.0
    %1048 = vmatmul.mubr.f32.gmra.mrb[0].mxu0 %v924
    %v1049 = vpop.f32.mrb[0].mxu0
    %v1050 = vadd.f32 %v976, %v1049
    %v1051 = vpop.f32.mrb[0].mxu0
    %1052 = vmatprep.mubr.f32.mxu0 0.0
    %1053 = vmatmul.mubr.f32.gmra.mrb[0].mxu0 %v925
    %v1054 = vpop.f32.mrb[0].mxu0
    %v1055 = vadd.f32 %v976, %v1054
    %v1056 = vpop.f32.mrb[0].mxu0
    %1057 = vmatprep.mubr.f32.mxu0 0.0
    %1058 = vmatmul.mubr.f32.gmra.mrb[0].mxu0 %v926
    %v1059 = vpop.f32.mrb[0].mxu0
    %v1060 = vadd.f32 %v976, %v1059
    %v1061 = vpop.f32.mrb[0].mxu0
    %1062 = vmatprep.mubr.f32.mxu0 0.0
    %1063 = vmatmul.mubr.f32.gmra.mrb[0].mxu0 %v927
    %v1064 = vpop.f32.mrb[0].mxu0
    %v1065 = vadd.f32 %v976, %v1064
    %v1066 = vpop.f32.mrb[0].mxu0
    %1067 = vmatprep.mubr.f32.mxu0 0.0
    %1068 = vmatmul.mubr.f32.gmra.mrb[0].mxu0 %v928
    %v1069 = vpop.f32.mrb[0].mxu0
    %v1070 = vadd.f32 %v976, %v1069
    %v1071 = vpop.f32.mrb[0].mxu0
    %1072 = vmatprep.mubr.f32.mxu0 0.0
    %1073 = vmatmul.mubr.f32.gmra.mrb[0].mxu0 %v929
    %v1074 = vpop.f32.mrb[0].mxu0
    %v1075 = vadd.f32 %v976, %v1074
    %v1076 = vpop.f32.mrb[0].mxu0
    %1077 = vmatprep.mubr.f32.mxu0 0.0
    %1078 = vmatmul.mubr.f32.gmra.mrb[0].mxu0 %v930
    %v1079 = vpop.f32.mrb[0].mxu0
    %v1080 = vadd.f32 %v976, %v1079
    %v1081 = vpop.f32.mrb[0].mxu0
    %1082 = vmatprep.mubr.f32.mxu0 0.0
    %1083 = vmatmul.mubr.f32.gmra.mrb[0].mxu0 %v931
    %v1084 = vpop.f32.mrb[0].mxu0
    %v1085 = vadd.f32 %v976, %v1084
    %v1086 = vpop.f32.mrb[0].mxu0
    %1087 = vmatprep.mubr.f32.mxu0 0.0
    %1088 = vmatmul.mubr.f32.gmra.mrb[0].mxu0 %v932
    %v1089 = vpop.f32.mrb[0].mxu0
    %v1090 = vadd.f32 %v976, %v1089
    %v1091 = vpop.f32.mrb[0].mxu0
    %1092 = vmatprep.mubr.f32.mxu0 0.0
    %1093 = vmatmul.mubr.f32.gmra.mrb[0].mxu0 %v933
    %v1094 = vpop.f32.mrb[0].mxu0
    %v1095 = vadd.f32 %v976, %v1094
    %v1096 = vpop.f32.mrb[0].mxu0
    %1097 = vmatprep.mubr.f32.mxu0 0.0
    %1098 = vmatmul.mubr.f32.gmra.mrb[0].mxu0 %v934
    %v1099 = vpop.f32.mrb[0].mxu0
    %v1100 = vadd.f32 %v976, %v1099
    %v1101 = vpop.f32.mrb[0].mxu0
    %1102 = vmatprep.mubr.f32.mxu0 0.0
    %1103 = vmatmul.mubr.f32.gmra.mrb[0].mxu0 %v935
    %v1104 = vpop.f32.mrb[0].mxu0
    %v1105 = vadd.f32 %v976, %v1104
    %v1106 = vpop.f32.mrb[0].mxu0
    %1107 = vmatprep.mubr.f32.mxu0 0.0
    %1108 = vmatmul.mubr.f32.gmra.mrb[0].mxu0 %v936
    %v1109 = vpop.f32.mrb[0].mxu0
    %v1110 = vadd.f32 %v976, %v1109
    %v1111 = vpop.f32.mrb[0].mxu0
    %1112 = vmatprep.mubr.f32.mxu0 0.0
    %1113 = vmatmul.mubr.f32.gmra.mrb[0].mxu0 %v937
    %v1114 = vpop.f32.mrb[0].mxu0
    %v1115 = vadd.f32 %v976, %v1114
    %v1116 = vpop.f32.mrb[0].mxu0
    %1117 = vmatprep.mubr.f32.mxu0 0.0
    %1118 = vmatmul.mubr.f32.gmra.mrb[0].mxu0 %v938
    %v1119 = vpop.f32.mrb[0].mxu0
    %v1120 = vadd.f32 %v976, %v1119
    %v1121 = vpop.f32.mrb[0].mxu0
    %1122 = vmatprep.mubr.f32.mxu0 0.0
    %1123 = vmatmul.mubr.f32.gmra.mrb[0].mxu0 %v939
    %v1124 = vpop.f32.mrb[0].mxu0
    %v1125 = vadd.f32 %v976, %v1124
    %v1126 = vpop.f32.mrb[0].mxu0
    %1127 = vmatprep.mubr.f32.mxu0 0.0
    %1128 = vmatmul.mubr.f32.gmra.mrb[0].mxu0 %v940
    %v1129 = vpop.f32.mrb[0].mxu0
    %v1130 = vadd.f32 %v976, %v1129
    %v1131 = vpop.f32.mrb[0].mxu0
    %1132 = vmatprep.mubr.f32.mxu0 0.0
    %1133 = vmatmul.mubr.f32.gmra.mrb[0].mxu0 %v941
    %v1134 = vpop.f32.mrb[0].mxu0
    %v1135 = vadd.f32 %v976, %v1134
    %v1136 = vpop.f32.mrb[0].mxu0
    %1137 = vmatprep.mubr.f32.mxu0 0.0
    %1138 = vmatmul.mubr.f32.gmra.mrb[0].mxu0 %v942
    %v1139 = vpop.f32.mrb[0].mxu0
    %v1140 = vadd.f32 %v976, %v1139
    %v1141 = vpop.f32.mrb[0].mxu0
    %1142 = vmatprep.mubr.f32.mxu0 0.0
    %1143 = vmatmul.mubr.f32.gmra.mrb[0].mxu0 %v943
    %v1144 = vpop.f32.mrb[0].mxu0
    %v1145 = vadd.f32 %v976, %v1144
    %v1146 = vpop.f32.mrb[0].mxu0
    %1147 = vmatprep.mubr.f32.mxu0 0.0
    %1148 = vmatmul.mubr.f32.gmra.mrb[0].mxu0 %v944
    %v1149 = vpop.f32.mrb[0].mxu0
    %v1150 = vadd.f32 %v976, %v1149
    %v1151 = vpop.f32.mrb[0].mxu0
    %1152 = vmatprep.mubr.f32.mxu0 0.0
    %1153 = vmatmul.mubr.f32.gmra.mrb[0].mxu0 %v945
    %v1154 = vpop.f32.mrb[0].mxu0
    %v1155 = vadd.f32 %v976, %v1154
    %v1156 = vpop.f32.mrb[0].mxu0
    %1157 = vmatprep.mubr.f32.mxu0 0.0
    %1158 = vmatmul.mubr.f32.gmra.mrb[0].mxu0 %v946
    %v1159 = vpop.f32.mrb[0].mxu0
    %v1160 = vadd.f32 %v976, %v1159
    %v1161 = vpop.f32.mrb[0].mxu0
    %1162 = vmatprep.mubr.f32.mxu0 0.0
    %1163 = vmatmul.mubr.f32.gmra.mrb[0].mxu0 %v947
    %v1164 = vpop.f32.mrb[0].mxu0
    %v1165 = vadd.f32 %v976, %v1164
    %v1166 = vpop.f32.mrb[0].mxu0
    %1167 = vmatprep.mubr.f32.mxu0 0.0
    %1168 = vmatmul.mubr.f32.gmra.mrb[0].mxu0 %v948
    %v1169 = vpop.f32.mrb[0].mxu0
    %v1170 = vadd.f32 %v976, %v1169
    %v1171 = vpop.f32.mrb[0].mxu0
    %1172 = vmatprep.mubr.f32.mxu0 0.0
    %1173 = vmatmul.mubr.f32.gmra.mrb[0].mxu0 %v949
    %v1174 = vpop.f32.mrb[0].mxu0
    %v1175 = vadd.f32 %v976, %v1174
    %v1176 = vpop.f32.mrb[0].mxu0
    %1177 = vmatprep.mubr.f32.mxu0 0.0
    %1178 = vmatmul.mubr.f32.gmra.mrb[0].mxu0 %v950
    %v1179 = vpop.f32.mrb[0].mxu0
    %v1180 = vadd.f32 %v976, %v1179
    %v1181 = vpop.f32.mrb[0].mxu0
    %1182 = vmatprep.mubr.f32.mxu0 0.0
    %1183 = vmatmul.mubr.f32.gmra.mrb[0].mxu0 %v951
    %v1184 = vpop.f32.mrb[0].mxu0
    %v1185 = vadd.f32 %v976, %v1184
    %v1186 = vpop.f32.mrb[0].mxu0
    %1187 = vmatprep.mubr.f32.mxu0 0.0
    %1188 = vmatmul.mubr.f32.gmra.mrb[0].mxu0 %v952
    %v1189 = vpop.f32.mrb[0].mxu0
    %v1190 = vadd.f32 %v976, %v1189
    %v1191 = vpop.f32.mrb[0].mxu0
    %1192 = vmatprep.mubr.f32.mxu0 0.0
    %1193 = vmatmul.mubr.f32.gmra.mrb[0].mxu0 %v953
    %v1194 = vpop.f32.mrb[0].mxu0
    %v1195 = vadd.f32 %v976, %v1194
    %v1196 = vpop.f32.mrb[0].mxu0
    %1197 = vmatprep.mubr.f32.mxu0 0.0
    %1198 = vmatmul.mubr.f32.gmra.mrb[0].mxu0 %v954
    %v1199 = vpop.f32.mrb[0].mxu0
    %v1200 = vadd.f32 %v976, %v1199
    %v1201 = vpop.f32.mrb[0].mxu0
    %1202 = vdwg.mxu0
    %v1203 = vmax.f32 %v1045, 0.0
    %v1204 = vmax.f32 %v1050, 0.0
    %v1205 = vmax.f32 %v1055, 0.0
    %v1206 = vmax.f32 %v1060, 0.0
    %v1207 = vmax.f32 %v1065, 0.0
    %v1208 = vmax.f32 %v1070, 0.0
    %v1209 = vmax.f32 %v1075, 0.0
    %v1210 = vmax.f32 %v1080, 0.0
    %v1211 = vmax.f32 %v1085, 0.0
    %v1212 = vmax.f32 %v1090, 0.0
    %v1213 = vmax.f32 %v1095, 0.0
    %v1214 = vmax.f32 %v1100, 0.0
    %v1215 = vmax.f32 %v1105, 0.0
    %v1216 = vmax.f32 %v1110, 0.0
    %v1217 = vmax.f32 %v1115, 0.0
    %v1218 = vmax.f32 %v1120, 0.0
    %v1219 = vmax.f32 %v1125, 0.0
    %v1220 = vmax.f32 %v1130, 0.0
    %v1221 = vmax.f32 %v1135, 0.0
    %v1222 = vmax.f32 %v1140, 0.0
    %v1223 = vmax.f32 %v1145, 0.0
    %v1224 = vmax.f32 %v1150, 0.0
    %v1225 = vmax.f32 %v1155, 0.0
    %v1226 = vmax.f32 %v1160, 0.0
    %v1227 = vmax.f32 %v1165, 0.0
    %v1228 = vmax.f32 %v1170, 0.0
    %v1229 = vmax.f32 %v1175, 0.0
    %v1230 = vmax.f32 %v1180, 0.0
    %v1231 = vmax.f32 %v1185, 0.0
    %v1232 = vmax.f32 %v1190, 0.0
    %v1233 = vmax.f32 %v1195, 0.0
    %v1234 = vmax.f32 %v1200, 0.0
    %v1235 = vld [vmem:[%s7] sm:$0xff]
    %v1236 = vld [vmem:[%s7 + $0x8] sm:$0xff]
    %v1237 = vld [vmem:[%s7 + $0x10] sm:$0xff]
    %v1238 = vld [vmem:[%s7 + $0x18] sm:$0xff]
    %v1239 = vld [vmem:[%s7 + $0x20] sm:$0xff]
    %v1240 = vld [vmem:[%s7 + $0x28] sm:$0xff]
    %v1241 = vld [vmem:[%s7 + $0x30] sm:$0xff]
    %v1242 = vld [vmem:[%s7 + $0x38] sm:$0xff]
    %v1243 = vld [vmem:[%s7 + $0x40] sm:$0xff]
    %v1244 = vld [vmem:[%s7 + $0x48] sm:$0xff]
    %v1245 = vld [vmem:[%s7 + $0x50] sm:$0xff]
    %v1246 = vld [vmem:[%s7 + $0x58] sm:$0xff]
    %v1247 = vld [vmem:[%s7 + $0x60] sm:$0xff]
    %v1248 = vld [vmem:[%s7 + $0x68] sm:$0xff]
    %v1249 = vld [vmem:[%s7 + $0x70] sm:$0xff]
    %v1250 = vld [vmem:[%s7 + $0x78] sm:$0xff]
    %v1251 = vld [vmem:[%s8] sm:$0x1]
    %v1253 = vlaneseq
    %v1254 = vshrl.u32 %v1253, 7
    %v1255 = vsub.s32 0, %v1254
    %v1256 = vrot.slane %v1251, %v1255
    %1258 = vmatprep.subr.mxu0 0.0
    %1259 = vmatpush1.msra.mxu0 %v1235
    %1260 = vmatprep.subr.mxu0 0.0
    %1261 = vmatpush1.msra.mxu0 %v1236
    %1262 = vmatprep.subr.mxu0 0.0
    %1263 = vmatpush1.msra.mxu0 %v1237
    %1264 = vmatprep.subr.mxu0 0.0
    %1265 = vmatpush1.msra.mxu0 %v1238
    %1266 = vmatprep.subr.mxu0 0.0
    %1267 = vmatpush1.msra.mxu0 %v1239
    %1268 = vmatprep.subr.mxu0 0.0
    %1269 = vmatpush1.msra.mxu0 %v1240
    %1270 = vmatprep.subr.mxu0 0.0
    %1271 = vmatpush1.msra.mxu0 %v1241
    %1272 = vmatprep.subr.mxu0 0.0
    %1273 = vmatpush1.msra.mxu0 %v1242
    %1274 = vmatprep.subr.mxu0 0.0
    %1275 = vmatpush1.msra.mxu0 %v1243
    %1276 = vmatprep.subr.mxu0 0.0
    %1277 = vmatpush1.msra.mxu0 %v1244
    %1278 = vmatprep.subr.mxu0 0.0
    %1279 = vmatpush1.msra.mxu0 %v1245
    %1280 = vmatprep.subr.mxu0 0.0
    %1281 = vmatpush1.msra.mxu0 %v1246
    %1282 = vmatprep.subr.mxu0 0.0
    %1283 = vmatpush1.msra.mxu0 %v1247
    %1284 = vmatprep.subr.mxu0 0.0
    %1285 = vmatpush1.msra.mxu0 %v1248
    %1286 = vmatprep.subr.mxu0 0.0
    %1287 = vmatpush1.msra.mxu0 %v1249
    %1288 = vmatprep.subr.mxu0 0.0
    %1289 = vmatpush1.msra.mxu0 %v1250
    %1290 = vmatprep.subr.mxu0 0.0
    %1291 = vmatpush1.msra.mxu0 0.0
    %1292 = vmatprep.subr.mxu0 0.0
    %1293 = vmatpush1.msra.mxu0 0.0
    %1294 = vmatprep.subr.mxu0 0.0
    %1295 = vmatpush1.msra.mxu0 0.0
    %1296 = vmatprep.subr.mxu0 0.0
    %1297 = vmatpush1.msra.mxu0 0.0
    %1298 = vmatprep.subr.mxu0 0.0
    %1299 = vmatpush1.msra.mxu0 0.0
    %1300 = vmatprep.subr.mxu0 0.0
    %1301 = vmatpush1.msra.mxu0 0.0
    %1302 = vmatprep.subr.mxu0 0.0
    %1303 = vmatpush1.msra.mxu0 0.0
    %1304 = vmatprep.subr.mxu0 0.0
    %1305 = vmatpush1.msra.mxu0 0.0
    %1306 = vmatprep.subr.mxu0 0.0
    %1307 = vmatpush1.msra.mxu0 0.0
    %1308 = vmatprep.subr.mxu0 0.0
    %1309 = vmatpush1.msra.mxu0 0.0
    %1310 = vmatprep.subr.mxu0 0.0
    %1311 = vmatpush1.msra.mxu0 0.0
    %1312 = vmatprep.subr.mxu0 0.0
    %1313 = vmatpush1.msra.mxu0 0.0
    %1314 = vmatprep.subr.mxu0 0.0
    %1315 = vmatpush1.msra.mxu0 0.0
    %1316 = vmatprep.subr.mxu0 0.0
    %1317 = vmatpush1.msra.mxu0 0.0
    %1318 = vmatprep.subr.mxu0 0.0
    %1319 = vmatpush1.msra.mxu0 0.0
    %1320 = vmatprep.subr.mxu0 0.0
    %1321 = vmatpush1.msra.mxu0 0.0
    %1322 = vmatprep.mubr.f32.mxu0 0.0
    %1323 = vmatmul.mubr.f32.gmra.mrb[0].mxu0 %v1203
    %v1324 = vpop.f32.mrb[0].mxu0
    %v1325 = vadd.f32 %v1256, %v1324
    %v1326 = vpop.f32.mrb[0].mxu0
    %1327 = vmatprep.mubr.f32.mxu0 0.0
    %1328 = vmatmul.mubr.f32.gmra.mrb[0].mxu0 %v1204
    %v1329 = vpop.f32.mrb[0].mxu0
    %v1330 = vadd.f32 %v1256, %v1329
    %v1331 = vpop.f32.mrb[0].mxu0
    %1332 = vmatprep.mubr.f32.mxu0 0.0
    %1333 = vmatmul.mubr.f32.gmra.mrb[0].mxu0 %v1205
    %v1334 = vpop.f32.mrb[0].mxu0
    %v1335 = vadd.f32 %v1256, %v1334
    %v1336 = vpop.f32.mrb[0].mxu0
    %1337 = vmatprep.mubr.f32.mxu0 0.0
    %1338 = vmatmul.mubr.f32.gmra.mrb[0].mxu0 %v1206
    %v1339 = vpop.f32.mrb[0].mxu0
    %v1340 = vadd.f32 %v1256, %v1339
    %v1341 = vpop.f32.mrb[0].mxu0
    %1342 = vmatprep.mubr.f32.mxu0 0.0
    %1343 = vmatmul.mubr.f32.gmra.mrb[0].mxu0 %v1207
    %v1344 = vpop.f32.mrb[0].mxu0
    %v1345 = vadd.f32 %v1256, %v1344
    %v1346 = vpop.f32.mrb[0].mxu0
    %1347 = vmatprep.mubr.f32.mxu0 0.0
    %1348 = vmatmul.mubr.f32.gmra.mrb[0].mxu0 %v1208
    %v1349 = vpop.f32.mrb[0].mxu0
    %v1350 = vadd.f32 %v1256, %v1349
    %v1351 = vpop.f32.mrb[0].mxu0
    %1352 = vmatprep.mubr.f32.mxu0 0.0
    %1353 = vmatmul.mubr.f32.gmra.mrb[0].mxu0 %v1209
    %v1354 = vpop.f32.mrb[0].mxu0
    %v1355 = vadd.f32 %v1256, %v1354
    %v1356 = vpop.f32.mrb[0].mxu0
    %1357 = vmatprep.mubr.f32.mxu0 0.0
    %1358 = vmatmul.mubr.f32.gmra.mrb[0].mxu0 %v1210
    %v1359 = vpop.f32.mrb[0].mxu0
    %v1360 = vadd.f32 %v1256, %v1359
    %v1361 = vpop.f32.mrb[0].mxu0
    %1362 = vmatprep.mubr.f32.mxu0 0.0
    %1363 = vmatmul.mubr.f32.gmra.mrb[0].mxu0 %v1211
    %v1364 = vpop.f32.mrb[0].mxu0
    %v1365 = vadd.f32 %v1256, %v1364
    %v1366 = vpop.f32.mrb[0].mxu0
    %1367 = vmatprep.mubr.f32.mxu0 0.0
    %1368 = vmatmul.mubr.f32.gmra.mrb[0].mxu0 %v1212
    %v1369 = vpop.f32.mrb[0].mxu0
    %v1370 = vadd.f32 %v1256, %v1369
    %v1371 = vpop.f32.mrb[0].mxu0
    %1372 = vmatprep.mubr.f32.mxu0 0.0
    %1373 = vmatmul.mubr.f32.gmra.mrb[0].mxu0 %v1213
    %v1374 = vpop.f32.mrb[0].mxu0
    %v1375 = vadd.f32 %v1256, %v1374
    %v1376 = vpop.f32.mrb[0].mxu0
    %1377 = vmatprep.mubr.f32.mxu0 0.0
    %1378 = vmatmul.mubr.f32.gmra.mrb[0].mxu0 %v1214
    %v1379 = vpop.f32.mrb[0].mxu0
    %v1380 = vadd.f32 %v1256, %v1379
    %v1381 = vpop.f32.mrb[0].mxu0
    %1382 = vmatprep.mubr.f32.mxu0 0.0
    %1383 = vmatmul.mubr.f32.gmra.mrb[0].mxu0 %v1215
    %v1384 = vpop.f32.mrb[0].mxu0
    %v1385 = vadd.f32 %v1256, %v1384
    %v1386 = vpop.f32.mrb[0].mxu0
    %1387 = vmatprep.mubr.f32.mxu0 0.0
    %1388 = vmatmul.mubr.f32.gmra.mrb[0].mxu0 %v1216
    %v1389 = vpop.f32.mrb[0].mxu0
    %v1390 = vadd.f32 %v1256, %v1389
    %v1391 = vpop.f32.mrb[0].mxu0
    %1392 = vmatprep.mubr.f32.mxu0 0.0
    %1393 = vmatmul.mubr.f32.gmra.mrb[0].mxu0 %v1217
    %v1394 = vpop.f32.mrb[0].mxu0
    %v1395 = vadd.f32 %v1256, %v1394
    %v1396 = vpop.f32.mrb[0].mxu0
    %1397 = vmatprep.mubr.f32.mxu0 0.0
    %1398 = vmatmul.mubr.f32.gmra.mrb[0].mxu0 %v1218
    %v1399 = vpop.f32.mrb[0].mxu0
    %v1400 = vadd.f32 %v1256, %v1399
    %v1401 = vpop.f32.mrb[0].mxu0
    %1402 = vmatprep.mubr.f32.mxu0 0.0
    %1403 = vmatmul.mubr.f32.gmra.mrb[0].mxu0 %v1219
    %v1404 = vpop.f32.mrb[0].mxu0
    %v1405 = vadd.f32 %v1256, %v1404
    %v1406 = vpop.f32.mrb[0].mxu0
    %1407 = vmatprep.mubr.f32.mxu0 0.0
    %1408 = vmatmul.mubr.f32.gmra.mrb[0].mxu0 %v1220
    %v1409 = vpop.f32.mrb[0].mxu0
    %v1410 = vadd.f32 %v1256, %v1409
    %v1411 = vpop.f32.mrb[0].mxu0
    %1412 = vmatprep.mubr.f32.mxu0 0.0
    %1413 = vmatmul.mubr.f32.gmra.mrb[0].mxu0 %v1221
    %v1414 = vpop.f32.mrb[0].mxu0
    %v1415 = vadd.f32 %v1256, %v1414
    %v1416 = vpop.f32.mrb[0].mxu0
    %1417 = vmatprep.mubr.f32.mxu0 0.0
    %1418 = vmatmul.mubr.f32.gmra.mrb[0].mxu0 %v1222
    %v1419 = vpop.f32.mrb[0].mxu0
    %v1420 = vadd.f32 %v1256, %v1419
    %v1421 = vpop.f32.mrb[0].mxu0
    %1422 = vmatprep.mubr.f32.mxu0 0.0
    %1423 = vmatmul.mubr.f32.gmra.mrb[0].mxu0 %v1223
    %v1424 = vpop.f32.mrb[0].mxu0
    %v1425 = vadd.f32 %v1256, %v1424
    %v1426 = vpop.f32.mrb[0].mxu0
    %1427 = vmatprep.mubr.f32.mxu0 0.0
    %1428 = vmatmul.mubr.f32.gmra.mrb[0].mxu0 %v1224
    %v1429 = vpop.f32.mrb[0].mxu0
    %v1430 = vadd.f32 %v1256, %v1429
    %v1431 = vpop.f32.mrb[0].mxu0
    %1432 = vmatprep.mubr.f32.mxu0 0.0
    %1433 = vmatmul.mubr.f32.gmra.mrb[0].mxu0 %v1225
    %v1434 = vpop.f32.mrb[0].mxu0
    %v1435 = vadd.f32 %v1256, %v1434
    %v1436 = vpop.f32.mrb[0].mxu0
    %1437 = vmatprep.mubr.f32.mxu0 0.0
    %1438 = vmatmul.mubr.f32.gmra.mrb[0].mxu0 %v1226
    %v1439 = vpop.f32.mrb[0].mxu0
    %v1440 = vadd.f32 %v1256, %v1439
    %v1441 = vpop.f32.mrb[0].mxu0
    %1442 = vmatprep.mubr.f32.mxu0 0.0
    %1443 = vmatmul.mubr.f32.gmra.mrb[0].mxu0 %v1227
    %v1444 = vpop.f32.mrb[0].mxu0
    %v1445 = vadd.f32 %v1256, %v1444
    %v1446 = vpop.f32.mrb[0].mxu0
    %1447 = vmatprep.mubr.f32.mxu0 0.0
    %1448 = vmatmul.mubr.f32.gmra.mrb[0].mxu0 %v1228
    %v1449 = vpop.f32.mrb[0].mxu0
    %v1450 = vadd.f32 %v1256, %v1449
    %v1451 = vpop.f32.mrb[0].mxu0
    %1452 = vmatprep.mubr.f32.mxu0 0.0
    %1453 = vmatmul.mubr.f32.gmra.mrb[0].mxu0 %v1229
    %v1454 = vpop.f32.mrb[0].mxu0
    %v1455 = vadd.f32 %v1256, %v1454
    %v1456 = vpop.f32.mrb[0].mxu0
    %1457 = vmatprep.mubr.f32.mxu0 0.0
    %1458 = vmatmul.mubr.f32.gmra.mrb[0].mxu0 %v1230
    %v1459 = vpop.f32.mrb[0].mxu0
    %v1460 = vadd.f32 %v1256, %v1459
    %v1461 = vpop.f32.mrb[0].mxu0
    %1462 = vmatprep.mubr.f32.mxu0 0.0
    %1463 = vmatmul.mubr.f32.gmra.mrb[0].mxu0 %v1231
    %v1464 = vpop.f32.mrb[0].mxu0
    %v1465 = vadd.f32 %v1256, %v1464
    %v1466 = vpop.f32.mrb[0].mxu0
    %1467 = vmatprep.mubr.f32.mxu0 0.0
    %1468 = vmatmul.mubr.f32.gmra.mrb[0].mxu0 %v1232
    %v1469 = vpop.f32.mrb[0].mxu0
    %v1470 = vadd.f32 %v1256, %v1469
    %v1471 = vpop.f32.mrb[0].mxu0
    %1472 = vmatprep.mubr.f32.mxu0 0.0
    %1473 = vmatmul.mubr.f32.gmra.mrb[0].mxu0 %v1233
    %v1474 = vpop.f32.mrb[0].mxu0
    %v1475 = vadd.f32 %v1256, %v1474
    %v1476 = vpop.f32.mrb[0].mxu0
    %1477 = vmatprep.mubr.f32.mxu0 0.0
    %1478 = vmatmul.mubr.f32.gmra.mrb[0].mxu0 %v1234
    %v1479 = vpop.f32.mrb[0].mxu0
    %v1480 = vadd.f32 %v1256, %v1479
    %v1481 = vpop.f32.mrb[0].mxu0
    %1482 = vdwg.mxu0
    %v1483 = vmax.f32 %v1325, 0.0
    %v1484 = vmax.f32 %v1330, 0.0
    %v1485 = vmax.f32 %v1335, 0.0
    %v1486 = vmax.f32 %v1340, 0.0
    %v1487 = vmax.f32 %v1345, 0.0
    %v1488 = vmax.f32 %v1350, 0.0
    %v1489 = vmax.f32 %v1355, 0.0
    %v1490 = vmax.f32 %v1360, 0.0
    %v1491 = vmax.f32 %v1365, 0.0
    %v1492 = vmax.f32 %v1370, 0.0
    %v1493 = vmax.f32 %v1375, 0.0
    %v1494 = vmax.f32 %v1380, 0.0
    %v1495 = vmax.f32 %v1385, 0.0
    %v1496 = vmax.f32 %v1390, 0.0
    %v1497 = vmax.f32 %v1395, 0.0
    %v1498 = vmax.f32 %v1400, 0.0
    %v1499 = vmax.f32 %v1405, 0.0
    %v1500 = vmax.f32 %v1410, 0.0
    %v1501 = vmax.f32 %v1415, 0.0
    %v1502 = vmax.f32 %v1420, 0.0
    %v1503 = vmax.f32 %v1425, 0.0
    %v1504 = vmax.f32 %v1430, 0.0
    %v1505 = vmax.f32 %v1435, 0.0
    %v1506 = vmax.f32 %v1440, 0.0
    %v1507 = vmax.f32 %v1445, 0.0
    %v1508 = vmax.f32 %v1450, 0.0
    %v1509 = vmax.f32 %v1455, 0.0
    %v1510 = vmax.f32 %v1460, 0.0
    %v1511 = vmax.f32 %v1465, 0.0
    %v1512 = vmax.f32 %v1470, 0.0
    %v1513 = vmax.f32 %v1475, 0.0
    %v1514 = vmax.f32 %v1480, 0.0
    %1515 = vst [vmem:[%s9] sm:$0xff] %v1483
    %1516 = vst [vmem:[%s9 + $0x8] sm:$0xff] %v1484
    %1517 = vst [vmem:[%s9 + $0x10] sm:$0xff] %v1485
    %1518 = vst [vmem:[%s9 + $0x18] sm:$0xff] %v1486
    %1519 = vst [vmem:[%s9 + $0x20] sm:$0xff] %v1487
    %1520 = vst [vmem:[%s9 + $0x28] sm:$0xff] %v1488
    %1521 = vst [vmem:[%s9 + $0x30] sm:$0xff] %v1489
    %1522 = vst [vmem:[%s9 + $0x38] sm:$0xff] %v1490
    %1523 = vst [vmem:[%s9 + $0x40] sm:$0xff] %v1491
    %1524 = vst [vmem:[%s9 + $0x48] sm:$0xff] %v1492
    %1525 = vst [vmem:[%s9 + $0x50] sm:$0xff] %v1493
    %1526 = vst [vmem:[%s9 + $0x58] sm:$0xff] %v1494
    %1527 = vst [vmem:[%s9 + $0x60] sm:$0xff] %v1495
    %1528 = vst [vmem:[%s9 + $0x68] sm:$0xff] %v1496
    %1529 = vst [vmem:[%s9 + $0x70] sm:$0xff] %v1497
    %1530 = vst [vmem:[%s9 + $0x78] sm:$0xff] %v1498
    %1531 = vst [vmem:[%s9 + $0x80] sm:$0xff] %v1499
    %1532 = vst [vmem:[%s9 + $0x88] sm:$0xff] %v1500
    %1533 = vst [vmem:[%s9 + $0x90] sm:$0xff] %v1501
    %1534 = vst [vmem:[%s9 + $0x98] sm:$0xff] %v1502
    %1535 = vst [vmem:[%s9 + $0xa0] sm:$0xff] %v1503
    %1536 = vst [vmem:[%s9 + $0xa8] sm:$0xff] %v1504
    %1537 = vst [vmem:[%s9 + $0xb0] sm:$0xff] %v1505
    %1538 = vst [vmem:[%s9 + $0xb8] sm:$0xff] %v1506
    %1539 = vst [vmem:[%s9 + $0xc0] sm:$0xff] %v1507
    %1540 = vst [vmem:[%s9 + $0xc8] sm:$0xff] %v1508
    %1541 = vst [vmem:[%s9 + $0xd0] sm:$0xff] %v1509
    %1542 = vst [vmem:[%s9 + $0xd8] sm:$0xff] %v1510
    %1543 = vst [vmem:[%s9 + $0xe0] sm:$0xff] %v1511
    %1544 = vst [vmem:[%s9 + $0xe8] sm:$0xff] %v1512
    %1545 = vst [vmem:[%s9 + $0xf0] sm:$0xff] %v1513
    %1546 = vst [vmem:[%s9 + $0xf8] sm:$0xff] %v1514
  $region41: #{gnn_node_virtualnode_forward.2} parent=0 // pred_fallthru
    _
  // Predicated region
  $region42: #{gnn_node_virtualnode_forward.2} parent=0 // pred_check
    _
  $region43: #{gnn_node_virtualnode_forward.2} parent=0 // pred_check_branch
    %1548 = sbr.rel (0) target = $region45
  $region44: #{gnn_node_virtualnode_forward.2} parent=0 // pred_region
    _
  $region45: #{gnn_node_virtualnode_forward.2} parent=0 // pred_fallthru
    _
  // Predicated region
  $region46: #{gnn_node_virtualnode_forward.2} parent=0 // pred_check
    _
  $region47: #{gnn_node_virtualnode_forward.2} parent=0 // pred_check_branch
    %1550 = sbr.rel (0) target = $region49
  $region48: #{gnn_node_virtualnode_forward.2} parent=0 // pred_region
    _
  $region49: #{gnn_node_virtualnode_forward.2} parent=0 // pred_fallthru
    _

// kernel: gnn_node_virtualnode_forward.3
$region0: #{gnn_node_virtualnode_forward.3}
  #allocation0 [shape = 'u32[]', space=smem, size = 0x4, offset = 0x4, fixed_abs, tag = 'smem constant byte address 0x4 - core index']
  #allocation1 [shape = 'u32[144,128]{1,0:T(1,128)}', space=vmem, size = 0x12000, scoped, tag = 'internal scratch']
  #allocation2 [shape = 'f32[256,128]{1,0:T(8,128)}', space=vmem, size = 0x20000, scoped, tag = 'scratch operand']
  #allocation3 [shape = 's32[1]{0}', space=sflag, size = 0x4, scoped, tag = 'scoped memory for gnn_node_virtualnode_forward.3']
  #allocation4 [shape = 's32[1]{0:T(128)S(6)}', space=smem, size = 0x200, scoped, tag = 'prefetched SMEM operand 0']
  #allocation5 [shape = 's32[1]{0:T(128)S(6)}', space=smem, size = 0x200, scoped, tag = 'prefetched SMEM operand 1']
  %s0 = inlined_call_operand.<no memory space> [shape: s32[1], index: 0, kind: input, shape index: {}]
  %s1 = inlined_call_operand.<no memory space> [shape: s32[1], index: 1, kind: input, shape index: {}]
  %s2 = inlined_call_operand.vmem [shape: f32[256,128], index: 2, kind: input, shape index: {}]
  %s3 = inlined_call_operand.vmem [shape: s32[2,8,256], index: 3, kind: input, shape index: {}]
  %s4 = inlined_call_operand.vmem [shape: bf16[512,128], index: 4, kind: input, shape index: {}]
  %s5 = inlined_call_operand.vmem [shape: f32[128,128], index: 5, kind: input, shape index: {}]
  %s6 = inlined_call_operand.vmem [shape: f32[1,128], index: 6, kind: input, shape index: {}]
  %s7 = inlined_call_operand.vmem [shape: f32[128,128], index: 7, kind: input, shape index: {}]
  %s8 = inlined_call_operand.vmem [shape: f32[1,128], index: 8, kind: input, shape index: {}]
  %s9 = inlined_call_operand.vmem [shape: f32[256,128], index: 9, kind: output, shape index: {}]
  %s10 = sld [smem:[#allocation0]]
  $region50: #{gnn_node_virtualnode_forward.3} parent=0
    _
  %s12 = ssub.s32 1, %s10
  %s13 = scalar_select 0, %s12, %s10
  %14 = sst [smem:[#allocation4]] %s0
  %15 = sst [smem:[#allocation5]] %s1
  // Predicated region
  $region2: #{gnn_node_virtualnode_forward.3} parent=0 // pred_check
    _
  $region3: #{gnn_node_virtualnode_forward.3} parent=0 // pred_check_branch
    %17 = sbr.rel (0) target = $region5
  $region4: #{gnn_node_virtualnode_forward.3} parent=0 // pred_region
    _
  $region5: #{gnn_node_virtualnode_forward.3} parent=0 // pred_fallthru
    _
  // Predicated region
  $region6: #{gnn_node_virtualnode_forward.3} parent=0 // pred_check
    _
  $region7: #{gnn_node_virtualnode_forward.3} parent=0 // pred_check_branch
    %19 = sbr.rel (0) target = $region9
  $region8: #{gnn_node_virtualnode_forward.3} parent=0 // pred_region
    %s20 = sld [smem:[#allocation4]]
    %s21 = sld [smem:[#allocation5]]
    %s22 = ssub.s32 %s21, 1
    %p23 = scmp.gt.s32.totalorder %s22, 0
    %s24 = scalar_select %p23, %s22, 0
    %p25 = scmp.lt.s32.totalorder 0, %s24
    %s26 = scalar_select %p25, 0, %s24
    %s27 = sadd.s32 %s20, %s26
    %p28 = scmp.lt.s32.totalorder %s27, 1
    %s29 = scalar_select %p28, %s27, 1
    %p30 = scmp.lt.s32.totalorder %s29, 1
    %s31 = scalar_select %p30, %s29, 1
    %s32 = smul.addr %s31, 2
    %s33 = smul.addr %s32, 8
    %s34 = scalar_lea.vmem %s3, %s33
    %s35 = sld [smem:[#allocation4]]
    %s36 = sld [smem:[#allocation5]]
    %s37 = ssub.s32 %s36, 1
    %p38 = scmp.gt.s32.totalorder %s37, 0
    %s39 = scalar_select %p38, %s37, 0
    %p40 = scmp.lt.s32.totalorder 0, %s39
    %s41 = scalar_select %p40, 0, %s39
    %s42 = sadd.s32 %s35, %s41
    %p43 = scmp.lt.s32.totalorder %s42, 1
    %s44 = scalar_select %p43, %s42, 1
  $region9: #{gnn_node_virtualnode_forward.3} parent=0 // pred_fallthru
    _
  // Predicated region
  $region10: #{gnn_node_virtualnode_forward.3} parent=0 // pred_check
    _
  $region11: #{gnn_node_virtualnode_forward.3} parent=0 // pred_check_branch
    %46 = sbr.rel (0) target = $region13
  $region12: #{gnn_node_virtualnode_forward.3} parent=0 // pred_region
    %s47 = sld [smem:[#allocation4]]
    %s48 = sld [smem:[#allocation5]]
    %s49 = ssub.s32 %s48, 1
    %p50 = scmp.gt.s32.totalorder %s49, 0
    %s51 = scalar_select %p50, %s49, 0
    %p52 = scmp.lt.s32.totalorder 0, %s51
    %s53 = scalar_select %p52, 0, %s51
    %s54 = sadd.s32 %s47, %s53
    %p55 = scmp.lt.s32.totalorder %s54, 1
    %s56 = scalar_select %p55, %s54, 1
    %s57 = smul.u32 32, %s56
    %p58 = scmp.lt.s32.totalorder %s57, 63
    %s59 = scalar_select %p58, %s57, 63
    %s60 = smul.addr %s59, 4
    %s61 = scalar_lea.vmem %s4, %s60
    %s62 = sld [smem:[#allocation4]]
    %s63 = sld [smem:[#allocation5]]
    %s64 = ssub.s32 %s63, 1
    %p65 = scmp.gt.s32.totalorder %s64, 0
    %s66 = scalar_select %p65, %s64, 0
    %p67 = scmp.lt.s32.totalorder 0, %s66
    %s68 = scalar_select %p67, 0, %s66
    %s69 = sadd.s32 %s62, %s68
    %p70 = scmp.lt.s32.totalorder %s69, 1
    %s71 = scalar_select %p70, %s69, 1
    %s72 = smul.u32 32, %s71
  $region13: #{gnn_node_virtualnode_forward.3} parent=0 // pred_fallthru
    _
  // Predicated region
  $region14: #{gnn_node_virtualnode_forward.3} parent=0 // pred_check
    _
  $region15: #{gnn_node_virtualnode_forward.3} parent=0 // pred_check_branch
    %74 = sbr.rel (0) target = $region17
  $region16: #{gnn_node_virtualnode_forward.3} parent=0 // pred_region
    _
  $region17: #{gnn_node_virtualnode_forward.3} parent=0 // pred_fallthru
    _
  // Predicated region
  $region18: #{gnn_node_virtualnode_forward.3} parent=0 // pred_check
    _
  $region19: #{gnn_node_virtualnode_forward.3} parent=0 // pred_check_branch
    %76 = sbr.rel (0) target = $region21
  $region20: #{gnn_node_virtualnode_forward.3} parent=0 // pred_region
    _
  $region21: #{gnn_node_virtualnode_forward.3} parent=0 // pred_fallthru
    _
  // Predicated region
  $region22: #{gnn_node_virtualnode_forward.3} parent=0 // pred_check
    _
  $region23: #{gnn_node_virtualnode_forward.3} parent=0 // pred_check_branch
    %78 = sbr.rel (0) target = $region25
  $region24: #{gnn_node_virtualnode_forward.3} parent=0 // pred_region
    _
  $region25: #{gnn_node_virtualnode_forward.3} parent=0 // pred_fallthru
    _
  // Predicated region
  $region26: #{gnn_node_virtualnode_forward.3} parent=0 // pred_check
    _
  $region27: #{gnn_node_virtualnode_forward.3} parent=0 // pred_check_branch
    %80 = sbr.rel (0) target = $region29
  $region28: #{gnn_node_virtualnode_forward.3} parent=0 // pred_region
    _
  $region29: #{gnn_node_virtualnode_forward.3} parent=0 // pred_fallthru
    _
  %s81 = sld [smem:[#allocation4]]
  %s82 = sld [smem:[#allocation5]]
  %s83 = ssub.s32 %s82, 1
  %p84 = scmp.gt.s32.totalorder %s83, 0
  %s85 = scalar_select %p84, %s83, 0
  %p86 = scmp.lt.s32.totalorder 0, %s85
  %s87 = scalar_select %p86, 0, %s85
  %s88 = sadd.s32 %s81, %s87
  %p89 = scmp.lt.s32.totalorder %s88, 1
  %s90 = scalar_select %p89, %s88, 1
  %p91 = scmp.lt.s32.totalorder %s90, 1
  %s92 = scalar_select %p91, %s90, 1
  %s93 = smul.addr %s92, 2
  %s94 = smul.addr %s93, 8
  %s95 = scalar_lea.vmem %s3, %s94
  %s96 = sld [smem:[#allocation4]]
  %s97 = sld [smem:[#allocation5]]
  %s98 = ssub.s32 %s97, 1
  %p99 = scmp.gt.s32.totalorder %s98, 0
  %s100 = scalar_select %p99, %s98, 0
  %p101 = scmp.lt.s32.totalorder 0, %s100
  %s102 = scalar_select %p101, 0, %s100
  %s103 = sadd.s32 %s96, %s102
  %p104 = scmp.lt.s32.totalorder %s103, 1
  %s105 = scalar_select %p104, %s103, 1
  %s106 = smul.u32 32, %s105
  %p107 = scmp.lt.s32.totalorder %s106, 63
  %s108 = scalar_select %p107, %s106, 63
  %s109 = smul.addr %s108, 4
  %s110 = scalar_lea.vmem %s4, %s109
  %s111 = sld [smem:[#allocation4]]
  %s112 = sld [smem:[#allocation5]]
  %s113 = ssub.s32 %s112, 1
  %p114 = scmp.gt.s32.totalorder %s113, 0
  %s115 = scalar_select %p114, %s113, 0
  %p116 = scmp.lt.s32.totalorder 0, %s115
  %s117 = scalar_select %p116, 0, %s115
  %s118 = sadd.s32 %s111, %s117
  %p119 = scmp.lt.s32.totalorder %s118, 1
  %s120 = scalar_select %p119, %s118, 1
  %p121 = scmp.lt.s32.totalorder %s120, 1
  %s122 = scalar_select %p121, %s120, 1
  %s123 = smul.addr %s122, 2
  %s124 = smul.addr %s123, 8
  %s125 = scalar_lea.vmem %s3, %s124
  %s126 = sld [smem:[#allocation4]]
  %s127 = sld [smem:[#allocation5]]
  %s128 = ssub.s32 %s127, 1
  %p129 = scmp.gt.s32.totalorder %s128, 0
  %s130 = scalar_select %p129, %s128, 0
  %p131 = scmp.lt.s32.totalorder 0, %s130
  %s132 = scalar_select %p131, 0, %s130
  %s133 = sadd.s32 %s126, %s132
  %p134 = scmp.lt.s32.totalorder %s133, 1
  %s135 = scalar_select %p134, %s133, 1
  %s136 = sld [smem:[#allocation4]]
  %s137 = sld [smem:[#allocation5]]
  %s138 = ssub.s32 %s137, 1
  %p139 = scmp.gt.s32.totalorder %s138, 0
  %s140 = scalar_select %p139, %s138, 0
  %p141 = scmp.lt.s32.totalorder 0, %s140
  %s142 = scalar_select %p141, 0, %s140
  %s143 = sadd.s32 %s136, %s142
  %p144 = scmp.lt.s32.totalorder %s143, 1
  %s145 = scalar_select %p144, %s143, 1
  %s146 = smul.u32 32, %s145
  %p147 = scmp.lt.s32.totalorder %s146, 63
  %s148 = scalar_select %p147, %s146, 63
  %s149 = smul.addr %s148, 4
  %s150 = scalar_lea.vmem %s4, %s149
  %s151 = sld [smem:[#allocation4]]
  %s152 = sld [smem:[#allocation5]]
  %s153 = ssub.s32 %s152, 1
  %p154 = scmp.gt.s32.totalorder %s153, 0
  %s155 = scalar_select %p154, %s153, 0
  %p156 = scmp.lt.s32.totalorder 0, %s155
  %s157 = scalar_select %p156, 0, %s155
  %s158 = sadd.s32 %s151, %s157
  %p159 = scmp.lt.s32.totalorder %s158, 1
  %s160 = scalar_select %p159, %s158, 1
  %s161 = smul.u32 32, %s160
  %p163 = scmp.eq.s32.totalorder 0, 0
  // Predicated region
  $region30: #{gnn_node_virtualnode_forward.3} parent=0 // pred_check
    %p164 = pneg %p163
  $region31: #{gnn_node_virtualnode_forward.3} parent=0 // pred_check_branch
    %166 = sbr.rel (%p164) target = $region33
  $region32: #{gnn_node_virtualnode_forward.3} parent=0 // pred_region
    %v167 = vld [vmem:[%s2] sm:$0xff]
    %v168 = vld [vmem:[%s2 + $0x8] sm:$0xff]
    %v169 = vld [vmem:[%s2 + $0x10] sm:$0xff]
    %v170 = vld [vmem:[%s2 + $0x18] sm:$0xff]
    %v171 = vld [vmem:[%s2 + $0x20] sm:$0xff]
    %v172 = vld [vmem:[%s2 + $0x28] sm:$0xff]
    %v173 = vld [vmem:[%s2 + $0x30] sm:$0xff]
    %v174 = vld [vmem:[%s2 + $0x38] sm:$0xff]
    %v175 = vld [vmem:[%s2 + $0x40] sm:$0xff]
    %v176 = vld [vmem:[%s2 + $0x48] sm:$0xff]
    %v177 = vld [vmem:[%s2 + $0x50] sm:$0xff]
    %v178 = vld [vmem:[%s2 + $0x58] sm:$0xff]
    %v179 = vld [vmem:[%s2 + $0x60] sm:$0xff]
    %v180 = vld [vmem:[%s2 + $0x68] sm:$0xff]
    %v181 = vld [vmem:[%s2 + $0x70] sm:$0xff]
    %v182 = vld [vmem:[%s2 + $0x78] sm:$0xff]
    %v183 = vld [vmem:[%s2 + $0x80] sm:$0xff]
    %v184 = vld [vmem:[%s2 + $0x88] sm:$0xff]
    %v185 = vld [vmem:[%s2 + $0x90] sm:$0xff]
    %v186 = vld [vmem:[%s2 + $0x98] sm:$0xff]
    %v187 = vld [vmem:[%s2 + $0xa0] sm:$0xff]
    %v188 = vld [vmem:[%s2 + $0xa8] sm:$0xff]
    %v189 = vld [vmem:[%s2 + $0xb0] sm:$0xff]
    %v190 = vld [vmem:[%s2 + $0xb8] sm:$0xff]
    %v191 = vld [vmem:[%s2 + $0xc0] sm:$0xff]
    %v192 = vld [vmem:[%s2 + $0xc8] sm:$0xff]
    %v193 = vld [vmem:[%s2 + $0xd0] sm:$0xff]
    %v194 = vld [vmem:[%s2 + $0xd8] sm:$0xff]
    %v195 = vld [vmem:[%s2 + $0xe0] sm:$0xff]
    %v196 = vld [vmem:[%s2 + $0xe8] sm:$0xff]
    %v197 = vld [vmem:[%s2 + $0xf0] sm:$0xff]
    %v198 = vld [vmem:[%s2 + $0xf8] sm:$0xff]
    %199 = vst [vmem:[#allocation2] sm:$0xff] %v167
    %200 = vst [vmem:[#allocation2 + $0x8] sm:$0xff] %v168
    %201 = vst [vmem:[#allocation2 + $0x10] sm:$0xff] %v169
    %202 = vst [vmem:[#allocation2 + $0x18] sm:$0xff] %v170
    %203 = vst [vmem:[#allocation2 + $0x20] sm:$0xff] %v171
    %204 = vst [vmem:[#allocation2 + $0x28] sm:$0xff] %v172
    %205 = vst [vmem:[#allocation2 + $0x30] sm:$0xff] %v173
    %206 = vst [vmem:[#allocation2 + $0x38] sm:$0xff] %v174
    %207 = vst [vmem:[#allocation2 + $0x40] sm:$0xff] %v175
    %208 = vst [vmem:[#allocation2 + $0x48] sm:$0xff] %v176
    %209 = vst [vmem:[#allocation2 + $0x50] sm:$0xff] %v177
    %210 = vst [vmem:[#allocation2 + $0x58] sm:$0xff] %v178
    %211 = vst [vmem:[#allocation2 + $0x60] sm:$0xff] %v179
    %212 = vst [vmem:[#allocation2 + $0x68] sm:$0xff] %v180
    %213 = vst [vmem:[#allocation2 + $0x70] sm:$0xff] %v181
    %214 = vst [vmem:[#allocation2 + $0x78] sm:$0xff] %v182
    %215 = vst [vmem:[#allocation2 + $0x80] sm:$0xff] %v183
    %216 = vst [vmem:[#allocation2 + $0x88] sm:$0xff] %v184
    %217 = vst [vmem:[#allocation2 + $0x90] sm:$0xff] %v185
    %218 = vst [vmem:[#allocation2 + $0x98] sm:$0xff] %v186
    %219 = vst [vmem:[#allocation2 + $0xa0] sm:$0xff] %v187
    %220 = vst [vmem:[#allocation2 + $0xa8] sm:$0xff] %v188
    %221 = vst [vmem:[#allocation2 + $0xb0] sm:$0xff] %v189
    %222 = vst [vmem:[#allocation2 + $0xb8] sm:$0xff] %v190
    %223 = vst [vmem:[#allocation2 + $0xc0] sm:$0xff] %v191
    %224 = vst [vmem:[#allocation2 + $0xc8] sm:$0xff] %v192
    %225 = vst [vmem:[#allocation2 + $0xd0] sm:$0xff] %v193
    %226 = vst [vmem:[#allocation2 + $0xd8] sm:$0xff] %v194
    %227 = vst [vmem:[#allocation2 + $0xe0] sm:$0xff] %v195
    %228 = vst [vmem:[#allocation2 + $0xe8] sm:$0xff] %v196
    %229 = vst [vmem:[#allocation2 + $0xf0] sm:$0xff] %v197
    %230 = vst [vmem:[#allocation2 + $0xf8] sm:$0xff] %v198
  $region33: #{gnn_node_virtualnode_forward.3} parent=0 // pred_fallthru
    _
  %s231 = sld [smem:[#allocation5]]
  %p232 = scmp.lt.s32.totalorder 0, %s231
  // Predicated region
  $region34: #{gnn_node_virtualnode_forward.3} parent=0 // pred_check
    %p233 = pneg %p232
  $region35: #{gnn_node_virtualnode_forward.3} parent=0 // pred_check_branch
    %235 = sbr.rel (%p233) target = $region37
  $region36: #{gnn_node_virtualnode_forward.3} parent=0 // pred_region
    %v236 = vld [vmem:[%s150] sm:$0xf]
    %v237 = vld [vmem:[%s150 + $0x4] sm:$0xf]
    %v238 = vld [vmem:[%s150 + $0x8] sm:$0xf]
    %v239 = vld [vmem:[%s150 + $0xc] sm:$0xf]
    %v240 = vld [vmem:[%s150 + $0x10] sm:$0xf]
    %v241 = vld [vmem:[%s150 + $0x14] sm:$0xf]
    %v242 = vld [vmem:[%s150 + $0x18] sm:$0xf]
    %v243 = vld [vmem:[%s150 + $0x1c] sm:$0xf]
    %v244 = vld [vmem:[%s150 + $0x20] sm:$0xf]
    %v245 = vld [vmem:[%s150 + $0x24] sm:$0xf]
    %v246 = vld [vmem:[%s150 + $0x28] sm:$0xf]
    %v247 = vld [vmem:[%s150 + $0x2c] sm:$0xf]
    %v248 = vld [vmem:[%s150 + $0x30] sm:$0xf]
    %v249 = vld [vmem:[%s150 + $0x34] sm:$0xf]
    %v250 = vld [vmem:[%s150 + $0x38] sm:$0xf]
    %v251 = vld [vmem:[%s150 + $0x3c] sm:$0xf]
    %v252 = vld [vmem:[%s150 + $0x40] sm:$0xf]
    %v253 = vld [vmem:[%s150 + $0x44] sm:$0xf]
    %v254 = vld [vmem:[%s150 + $0x48] sm:$0xf]
    %v255 = vld [vmem:[%s150 + $0x4c] sm:$0xf]
    %v256 = vld [vmem:[%s150 + $0x50] sm:$0xf]
    %v257 = vld [vmem:[%s150 + $0x54] sm:$0xf]
    %v258 = vld [vmem:[%s150 + $0x58] sm:$0xf]
    %v259 = vld [vmem:[%s150 + $0x5c] sm:$0xf]
    %v260 = vld [vmem:[%s150 + $0x60] sm:$0xf]
    %v261 = vld [vmem:[%s150 + $0x64] sm:$0xf]
    %v262 = vld [vmem:[%s150 + $0x68] sm:$0xf]
    %v263 = vld [vmem:[%s150 + $0x6c] sm:$0xf]
    %v264 = vld [vmem:[%s150 + $0x70] sm:$0xf]
    %v265 = vld [vmem:[%s150 + $0x74] sm:$0xf]
    %v266 = vld [vmem:[%s150 + $0x78] sm:$0xf]
    %v267 = vld [vmem:[%s150 + $0x7c] sm:$0xf]
    %v268 = vmax.bf16 %v236, 0
    %v269 = vmax.bf16 %v237, 0
    %v270 = vmax.bf16 %v238, 0
    %v271 = vmax.bf16 %v239, 0
    %v272 = vmax.bf16 %v240, 0
    %v273 = vmax.bf16 %v241, 0
    %v274 = vmax.bf16 %v242, 0
    %v275 = vmax.bf16 %v243, 0
    %v276 = vmax.bf16 %v244, 0
    %v277 = vmax.bf16 %v245, 0
    %v278 = vmax.bf16 %v246, 0
    %v279 = vmax.bf16 %v247, 0
    %v280 = vmax.bf16 %v248, 0
    %v281 = vmax.bf16 %v249, 0
    %v282 = vmax.bf16 %v250, 0
    %v283 = vmax.bf16 %v251, 0
    %v284 = vmax.bf16 %v252, 0
    %v285 = vmax.bf16 %v253, 0
    %v286 = vmax.bf16 %v254, 0
    %v287 = vmax.bf16 %v255, 0
    %v288 = vmax.bf16 %v256, 0
    %v289 = vmax.bf16 %v257, 0
    %v290 = vmax.bf16 %v258, 0
    %v291 = vmax.bf16 %v259, 0
    %v292 = vmax.bf16 %v260, 0
    %v293 = vmax.bf16 %v261, 0
    %v294 = vmax.bf16 %v262, 0
    %v295 = vmax.bf16 %v263, 0
    %v296 = vmax.bf16 %v264, 0
    %v297 = vmax.bf16 %v265, 0
    %v298 = vmax.bf16 %v266, 0
    %v299 = vmax.bf16 %v267, 0
    %v300 = vld [vmem:[%s125] sm:$0xff]
    %v301 = vld [vmem:[%s125 + $0x8] sm:$0xff]
    %v302 = vlaneseq
    %v303 = vshrl.u32 %v302, 7
    %v304 = vadd.s32 %v303, 8
    %v305 = vadd.s32 %v303, 16
    %v306 = vadd.s32 %v303, 24
    %v307 = vadd.s32 %v303, 32
    %v308 = vadd.s32 %v303, 40
    %v309 = vadd.s32 %v303, 48
    %v310 = vadd.s32 %v303, 56
    %v311 = vadd.s32 %v303, 64
    %v312 = vadd.s32 %v303, 72
    %v313 = vadd.s32 %v303, 80
    %v314 = vadd.s32 %v303, 88
    %v315 = vadd.s32 %v303, 96
    %v316 = vadd.s32 %v303, 104
    %v317 = vadd.s32 %v303, 112
    %v318 = vadd.s32 %v303, 120
    %v319 = vadd.s32 %v303, 128
    %v320 = vadd.s32 %v303, 136
    %v321 = vadd.s32 %v303, 144
    %v322 = vadd.s32 %v303, 152
    %v323 = vadd.s32 %v303, 160
    %v324 = vadd.s32 %v303, 168
    %v325 = vadd.s32 %v303, 176
    %v326 = vadd.s32 %v303, 184
    %v327 = vadd.s32 %v303, 192
    %v328 = vadd.s32 %v303, 200
    %v329 = vadd.s32 %v303, 208
    %v330 = vadd.s32 %v303, 216
    %v331 = vadd.s32 %v303, 224
    %v332 = vadd.s32 %v303, 232
    %v333 = vadd.s32 %v303, 240
    %v334 = vadd.s32 %v303, 248
    %v335 = vlaneseq
    %v336 = vshrl.u32 %v335, 7
    %v337 = vsub.s32 0, %v336
    %v338 = vrot.slane %v300, %v337
    %v339 = vlaneseq
    %v340 = vshrl.u32 %v339, 7
    %v341 = vsub.s32 0, %v340
    %v342 = vrot.slane %v301, %v341
    %vm343 = vcmp.eq.s32.totalorder %v338, %v303
    %vm344 = vcmp.eq.s32.totalorder %v342, %v303
    %vm345 = vcmp.eq.s32.totalorder %v338, %v304
    %vm346 = vcmp.eq.s32.totalorder %v342, %v304
    %vm347 = vcmp.eq.s32.totalorder %v338, %v305
    %vm348 = vcmp.eq.s32.totalorder %v342, %v305
    %vm349 = vcmp.eq.s32.totalorder %v338, %v306
    %vm350 = vcmp.eq.s32.totalorder %v342, %v306
    %vm351 = vcmp.eq.s32.totalorder %v338, %v307
    %vm352 = vcmp.eq.s32.totalorder %v342, %v307
    %vm353 = vcmp.eq.s32.totalorder %v338, %v308
    %vm354 = vcmp.eq.s32.totalorder %v342, %v308
    %vm355 = vcmp.eq.s32.totalorder %v338, %v309
    %vm356 = vcmp.eq.s32.totalorder %v342, %v309
    %vm357 = vcmp.eq.s32.totalorder %v338, %v310
    %vm358 = vcmp.eq.s32.totalorder %v342, %v310
    %vm359 = vcmp.eq.s32.totalorder %v338, %v311
    %vm360 = vcmp.eq.s32.totalorder %v342, %v311
    %vm361 = vcmp.eq.s32.totalorder %v338, %v312
    %vm362 = vcmp.eq.s32.totalorder %v342, %v312
    %vm363 = vcmp.eq.s32.totalorder %v338, %v313
    %vm364 = vcmp.eq.s32.totalorder %v342, %v313
    %vm365 = vcmp.eq.s32.totalorder %v338, %v314
    %vm366 = vcmp.eq.s32.totalorder %v342, %v314
    %vm367 = vcmp.eq.s32.totalorder %v338, %v315
    %vm368 = vcmp.eq.s32.totalorder %v342, %v315
    %vm369 = vcmp.eq.s32.totalorder %v338, %v316
    %vm370 = vcmp.eq.s32.totalorder %v342, %v316
    %vm371 = vcmp.eq.s32.totalorder %v338, %v317
    %vm372 = vcmp.eq.s32.totalorder %v342, %v317
    %vm373 = vcmp.eq.s32.totalorder %v338, %v318
    %vm374 = vcmp.eq.s32.totalorder %v342, %v318
    %vm375 = vcmp.eq.s32.totalorder %v338, %v319
    %vm376 = vcmp.eq.s32.totalorder %v342, %v319
    %vm377 = vcmp.eq.s32.totalorder %v338, %v320
    %vm378 = vcmp.eq.s32.totalorder %v342, %v320
    %vm379 = vcmp.eq.s32.totalorder %v338, %v321
    %vm380 = vcmp.eq.s32.totalorder %v342, %v321
    %vm381 = vcmp.eq.s32.totalorder %v338, %v322
    %vm382 = vcmp.eq.s32.totalorder %v342, %v322
    %vm383 = vcmp.eq.s32.totalorder %v338, %v323
    %vm384 = vcmp.eq.s32.totalorder %v342, %v323
    %vm385 = vcmp.eq.s32.totalorder %v338, %v324
    %vm386 = vcmp.eq.s32.totalorder %v342, %v324
    %vm387 = vcmp.eq.s32.totalorder %v338, %v325
    %vm388 = vcmp.eq.s32.totalorder %v342, %v325
    %vm389 = vcmp.eq.s32.totalorder %v338, %v326
    %vm390 = vcmp.eq.s32.totalorder %v342, %v326
    %vm391 = vcmp.eq.s32.totalorder %v338, %v327
    %vm392 = vcmp.eq.s32.totalorder %v342, %v327
    %vm393 = vcmp.eq.s32.totalorder %v338, %v328
    %vm394 = vcmp.eq.s32.totalorder %v342, %v328
    %vm395 = vcmp.eq.s32.totalorder %v338, %v329
    %vm396 = vcmp.eq.s32.totalorder %v342, %v329
    %vm397 = vcmp.eq.s32.totalorder %v338, %v330
    %vm398 = vcmp.eq.s32.totalorder %v342, %v330
    %vm399 = vcmp.eq.s32.totalorder %v338, %v331
    %vm400 = vcmp.eq.s32.totalorder %v342, %v331
    %vm401 = vcmp.eq.s32.totalorder %v338, %v332
    %vm402 = vcmp.eq.s32.totalorder %v342, %v332
    %vm403 = vcmp.eq.s32.totalorder %v338, %v333
    %vm404 = vcmp.eq.s32.totalorder %v342, %v333
    %vm405 = vcmp.eq.s32.totalorder %v338, %v334
    %vm406 = vcmp.eq.s32.totalorder %v342, %v334
    %v407 = vsel %vm343, 1, 0
    %v408 = vsel %vm344, 1, 0
    %v409 = vsel %vm345, 1, 0
    %v410 = vsel %vm346, 1, 0
    %v411 = vsel %vm347, 1, 0
    %v412 = vsel %vm348, 1, 0
    %v413 = vsel %vm349, 1, 0
    %v414 = vsel %vm350, 1, 0
    %v415 = vsel %vm351, 1, 0
    %v416 = vsel %vm352, 1, 0
    %v417 = vsel %vm353, 1, 0
    %v418 = vsel %vm354, 1, 0
    %v419 = vsel %vm355, 1, 0
    %v420 = vsel %vm356, 1, 0
    %v421 = vsel %vm357, 1, 0
    %v422 = vsel %vm358, 1, 0
    %v423 = vsel %vm359, 1, 0
    %v424 = vsel %vm360, 1, 0
    %v425 = vsel %vm361, 1, 0
    %v426 = vsel %vm362, 1, 0
    %v427 = vsel %vm363, 1, 0
    %v428 = vsel %vm364, 1, 0
    %v429 = vsel %vm365, 1, 0
    %v430 = vsel %vm366, 1, 0
    %v431 = vsel %vm367, 1, 0
    %v432 = vsel %vm368, 1, 0
    %v433 = vsel %vm369, 1, 0
    %v434 = vsel %vm370, 1, 0
    %v435 = vsel %vm371, 1, 0
    %v436 = vsel %vm372, 1, 0
    %v437 = vsel %vm373, 1, 0
    %v438 = vsel %vm374, 1, 0
    %v439 = vsel %vm375, 1, 0
    %v440 = vsel %vm376, 1, 0
    %v441 = vsel %vm377, 1, 0
    %v442 = vsel %vm378, 1, 0
    %v443 = vsel %vm379, 1, 0
    %v444 = vsel %vm380, 1, 0
    %v445 = vsel %vm381, 1, 0
    %v446 = vsel %vm382, 1, 0
    %v447 = vsel %vm383, 1, 0
    %v448 = vsel %vm384, 1, 0
    %v449 = vsel %vm385, 1, 0
    %v450 = vsel %vm386, 1, 0
    %v451 = vsel %vm387, 1, 0
    %v452 = vsel %vm388, 1, 0
    %v453 = vsel %vm389, 1, 0
    %v454 = vsel %vm390, 1, 0
    %v455 = vsel %vm391, 1, 0
    %v456 = vsel %vm392, 1, 0
    %v457 = vsel %vm393, 1, 0
    %v458 = vsel %vm394, 1, 0
    %v459 = vsel %vm395, 1, 0
    %v460 = vsel %vm396, 1, 0
    %v461 = vsel %vm397, 1, 0
    %v462 = vsel %vm398, 1, 0
    %v463 = vsel %vm399, 1, 0
    %v464 = vsel %vm400, 1, 0
    %v465 = vsel %vm401, 1, 0
    %v466 = vsel %vm402, 1, 0
    %v467 = vsel %vm403, 1, 0
    %v468 = vsel %vm404, 1, 0
    %v469 = vsel %vm405, 1, 0
    %v470 = vsel %vm406, 1, 0
    %v471 = vcvt.s32.f32 %v407
    %v472 = vcvt.s32.f32 %v408
    %v473 = vcvt.s32.f32 %v409
    %v474 = vcvt.s32.f32 %v410
    %v475 = vcvt.s32.f32 %v411
    %v476 = vcvt.s32.f32 %v412
    %v477 = vcvt.s32.f32 %v413
    %v478 = vcvt.s32.f32 %v414
    %v479 = vcvt.s32.f32 %v415
    %v480 = vcvt.s32.f32 %v416
    %v481 = vcvt.s32.f32 %v417
    %v482 = vcvt.s32.f32 %v418
    %v483 = vcvt.s32.f32 %v419
    %v484 = vcvt.s32.f32 %v420
    %v485 = vcvt.s32.f32 %v421
    %v486 = vcvt.s32.f32 %v422
    %v487 = vcvt.s32.f32 %v423
    %v488 = vcvt.s32.f32 %v424
    %v489 = vcvt.s32.f32 %v425
    %v490 = vcvt.s32.f32 %v426
    %v491 = vcvt.s32.f32 %v427
    %v492 = vcvt.s32.f32 %v428
    %v493 = vcvt.s32.f32 %v429
    %v494 = vcvt.s32.f32 %v430
    %v495 = vcvt.s32.f32 %v431
    %v496 = vcvt.s32.f32 %v432
    %v497 = vcvt.s32.f32 %v433
    %v498 = vcvt.s32.f32 %v434
    %v499 = vcvt.s32.f32 %v435
    %v500 = vcvt.s32.f32 %v436
    %v501 = vcvt.s32.f32 %v437
    %v502 = vcvt.s32.f32 %v438
    %v503 = vcvt.s32.f32 %v439
    %v504 = vcvt.s32.f32 %v440
    %v505 = vcvt.s32.f32 %v441
    %v506 = vcvt.s32.f32 %v442
    %v507 = vcvt.s32.f32 %v443
    %v508 = vcvt.s32.f32 %v444
    %v509 = vcvt.s32.f32 %v445
    %v510 = vcvt.s32.f32 %v446
    %v511 = vcvt.s32.f32 %v447
    %v512 = vcvt.s32.f32 %v448
    %v513 = vcvt.s32.f32 %v449
    %v514 = vcvt.s32.f32 %v450
    %v515 = vcvt.s32.f32 %v451
    %v516 = vcvt.s32.f32 %v452
    %v517 = vcvt.s32.f32 %v453
    %v518 = vcvt.s32.f32 %v454
    %v519 = vcvt.s32.f32 %v455
    %v520 = vcvt.s32.f32 %v456
    %v521 = vcvt.s32.f32 %v457
    %v522 = vcvt.s32.f32 %v458
    %v523 = vcvt.s32.f32 %v459
    %v524 = vcvt.s32.f32 %v460
    %v525 = vcvt.s32.f32 %v461
    %v526 = vcvt.s32.f32 %v462
    %v527 = vcvt.s32.f32 %v463
    %v528 = vcvt.s32.f32 %v464
    %v529 = vcvt.s32.f32 %v465
    %v530 = vcvt.s32.f32 %v466
    %v531 = vcvt.s32.f32 %v467
    %v532 = vcvt.s32.f32 %v468
    %v533 = vcvt.s32.f32 %v469
    %v534 = vcvt.s32.f32 %v470
    %v535 = vpack.c.bf16 %v473, %v471
    %v536 = vpack.c.bf16 %v474, %v472
    %v537 = vpack.c.bf16 %v477, %v475
    %v538 = vpack.c.bf16 %v478, %v476
    %v539 = vpack.c.bf16 %v481, %v479
    %v540 = vpack.c.bf16 %v482, %v480
    %v541 = vpack.c.bf16 %v485, %v483
    %v542 = vpack.c.bf16 %v486, %v484
    %v543 = vpack.c.bf16 %v489, %v487
    %v544 = vpack.c.bf16 %v490, %v488
    %v545 = vpack.c.bf16 %v493, %v491
    %v546 = vpack.c.bf16 %v494, %v492
    %v547 = vpack.c.bf16 %v497, %v495
    %v548 = vpack.c.bf16 %v498, %v496
    %v549 = vpack.c.bf16 %v501, %v499
    %v550 = vpack.c.bf16 %v502, %v500
    %v551 = vpack.c.bf16 %v505, %v503
    %v552 = vpack.c.bf16 %v506, %v504
    %v553 = vpack.c.bf16 %v509, %v507
    %v554 = vpack.c.bf16 %v510, %v508
    %v555 = vpack.c.bf16 %v513, %v511
    %v556 = vpack.c.bf16 %v514, %v512
    %v557 = vpack.c.bf16 %v517, %v515
    %v558 = vpack.c.bf16 %v518, %v516
    %v559 = vpack.c.bf16 %v521, %v519
    %v560 = vpack.c.bf16 %v522, %v520
    %v561 = vpack.c.bf16 %v525, %v523
    %v562 = vpack.c.bf16 %v526, %v524
    %v563 = vpack.c.bf16 %v529, %v527
    %v564 = vpack.c.bf16 %v530, %v528
    %v565 = vpack.c.bf16 %v533, %v531
    %v566 = vpack.c.bf16 %v534, %v532
    %v567 = vld [vmem:[#allocation2] sm:$0xff]
    %v568 = vld [vmem:[#allocation2 + $0x8] sm:$0xff]
    %v569 = vld [vmem:[#allocation2 + $0x10] sm:$0xff]
    %v570 = vld [vmem:[#allocation2 + $0x18] sm:$0xff]
    %v571 = vld [vmem:[#allocation2 + $0x20] sm:$0xff]
    %v572 = vld [vmem:[#allocation2 + $0x28] sm:$0xff]
    %v573 = vld [vmem:[#allocation2 + $0x30] sm:$0xff]
    %v574 = vld [vmem:[#allocation2 + $0x38] sm:$0xff]
    %v575 = vld [vmem:[#allocation2 + $0x40] sm:$0xff]
    %v576 = vld [vmem:[#allocation2 + $0x48] sm:$0xff]
    %v577 = vld [vmem:[#allocation2 + $0x50] sm:$0xff]
    %v578 = vld [vmem:[#allocation2 + $0x58] sm:$0xff]
    %v579 = vld [vmem:[#allocation2 + $0x60] sm:$0xff]
    %v580 = vld [vmem:[#allocation2 + $0x68] sm:$0xff]
    %v581 = vld [vmem:[#allocation2 + $0x70] sm:$0xff]
    %v582 = vld [vmem:[#allocation2 + $0x78] sm:$0xff]
    %v583 = vld [vmem:[#allocation2 + $0x80] sm:$0xff]
    %v584 = vld [vmem:[#allocation2 + $0x88] sm:$0xff]
    %v585 = vld [vmem:[#allocation2 + $0x90] sm:$0xff]
    %v586 = vld [vmem:[#allocation2 + $0x98] sm:$0xff]
    %v587 = vld [vmem:[#allocation2 + $0xa0] sm:$0xff]
    %v588 = vld [vmem:[#allocation2 + $0xa8] sm:$0xff]
    %v589 = vld [vmem:[#allocation2 + $0xb0] sm:$0xff]
    %v590 = vld [vmem:[#allocation2 + $0xb8] sm:$0xff]
    %v591 = vld [vmem:[#allocation2 + $0xc0] sm:$0xff]
    %v592 = vld [vmem:[#allocation2 + $0xc8] sm:$0xff]
    %v593 = vld [vmem:[#allocation2 + $0xd0] sm:$0xff]
    %v594 = vld [vmem:[#allocation2 + $0xd8] sm:$0xff]
    %v595 = vld [vmem:[#allocation2 + $0xe0] sm:$0xff]
    %v596 = vld [vmem:[#allocation2 + $0xe8] sm:$0xff]
    %v597 = vld [vmem:[#allocation2 + $0xf0] sm:$0xff]
    %v598 = vld [vmem:[#allocation2 + $0xf8] sm:$0xff]
    %v631 = vunpack.c.l.b16 %v268
    %v632 = vunpack.c.l.b16 %v269
    %v633 = vunpack.c.l.b16 %v270
    %v634 = vunpack.c.l.b16 %v271
    %v635 = vunpack.c.l.b16 %v272
    %v636 = vunpack.c.l.b16 %v273
    %v637 = vunpack.c.l.b16 %v274
    %v638 = vunpack.c.l.b16 %v275
    %v639 = vunpack.c.l.b16 %v276
    %v640 = vunpack.c.l.b16 %v277
    %v641 = vunpack.c.l.b16 %v278
    %v642 = vunpack.c.l.b16 %v279
    %v643 = vunpack.c.l.b16 %v280
    %v644 = vunpack.c.l.b16 %v281
    %v645 = vunpack.c.l.b16 %v282
    %v646 = vunpack.c.l.b16 %v283
    %v647 = vunpack.c.l.b16 %v284
    %v648 = vunpack.c.l.b16 %v285
    %v649 = vunpack.c.l.b16 %v286
    %v650 = vunpack.c.l.b16 %v287
    %v651 = vunpack.c.l.b16 %v288
    %v652 = vunpack.c.l.b16 %v289
    %v653 = vunpack.c.l.b16 %v290
    %v654 = vunpack.c.l.b16 %v291
    %v655 = vunpack.c.l.b16 %v292
    %v656 = vunpack.c.l.b16 %v293
    %v657 = vunpack.c.l.b16 %v294
    %v658 = vunpack.c.l.b16 %v295
    %v659 = vunpack.c.l.b16 %v296
    %v660 = vunpack.c.l.b16 %v297
    %v661 = vunpack.c.l.b16 %v298
    %v662 = vunpack.c.l.b16 %v299
    %v663 = vpack.c.b16 %v632, %v631
    %v664 = vpack.c.b16 %v634, %v633
    %v665 = vpack.c.b16 %v636, %v635
    %v666 = vpack.c.b16 %v638, %v637
    %v667 = vpack.c.b16 %v640, %v639
    %v668 = vpack.c.b16 %v642, %v641
    %v669 = vpack.c.b16 %v644, %v643
    %v670 = vpack.c.b16 %v646, %v645
    %v671 = vpack.c.b16 %v648, %v647
    %v672 = vpack.c.b16 %v650, %v649
    %v673 = vpack.c.b16 %v652, %v651
    %v674 = vpack.c.b16 %v654, %v653
    %v675 = vpack.c.b16 %v656, %v655
    %v676 = vpack.c.b16 %v658, %v657
    %v677 = vpack.c.b16 %v660, %v659
    %v678 = vpack.c.b16 %v662, %v661
    %695 = vmatprep.subr.bf16.mxu0 0
    %696 = vmatpush1.bf16.msra.mxu0 %v663
    %697 = vmatprep.subr.bf16.mxu0 0
    %698 = vmatpush1.bf16.msra.mxu0 %v664
    %699 = vmatprep.subr.bf16.mxu0 0
    %700 = vmatpush1.bf16.msra.mxu0 %v665
    %701 = vmatprep.subr.bf16.mxu0 0
    %702 = vmatpush1.bf16.msra.mxu0 %v666
    %703 = vmatprep.subr.bf16.mxu0 0
    %704 = vmatpush1.bf16.msra.mxu0 %v667
    %705 = vmatprep.subr.bf16.mxu0 0
    %706 = vmatpush1.bf16.msra.mxu0 %v668
    %707 = vmatprep.subr.bf16.mxu0 0
    %708 = vmatpush1.bf16.msra.mxu0 %v669
    %709 = vmatprep.subr.bf16.mxu0 0
    %710 = vmatpush1.bf16.msra.mxu0 %v670
    %711 = vmatprep.subr.bf16.mxu0 0
    %712 = vmatpush1.bf16.msra.mxu0 %v671
    %713 = vmatprep.subr.bf16.mxu0 0
    %714 = vmatpush1.bf16.msra.mxu0 %v672
    %715 = vmatprep.subr.bf16.mxu0 0
    %716 = vmatpush1.bf16.msra.mxu0 %v673
    %717 = vmatprep.subr.bf16.mxu0 0
    %718 = vmatpush1.bf16.msra.mxu0 %v674
    %719 = vmatprep.subr.bf16.mxu0 0
    %720 = vmatpush1.bf16.msra.mxu0 %v675
    %721 = vmatprep.subr.bf16.mxu0 0
    %722 = vmatpush1.bf16.msra.mxu0 %v676
    %723 = vmatprep.subr.bf16.mxu0 0
    %724 = vmatpush1.bf16.msra.mxu0 %v677
    %725 = vmatprep.subr.bf16.mxu0 0
    %726 = vmatpush1.bf16.msra.mxu0 %v678
    %727 = vmatprep.mubr.bf16.mxu0 %v536
    %728 = vmatmul.mubr.bf16.gmra.mrb[0].mxu0 %v535
    %v729 = vpop.f32.mrb[0].mxu0
    %v730 = vadd.f32 0.0, %v729
    %v731 = vpop.f32.mrb[0].mxu0
    %v732 = vpop.f32.mrb[0].mxu0
    %v733 = vadd.f32 0.0, %v732
    %v734 = vpop.f32.mrb[0].mxu0
    %735 = vmatprep.mubr.bf16.mxu0 %v538
    %736 = vmatmul.mubr.bf16.gmra.mrb[0].mxu0 %v537
    %v737 = vpop.f32.mrb[0].mxu0
    %v738 = vadd.f32 0.0, %v737
    %v739 = vpop.f32.mrb[0].mxu0
    %v740 = vpop.f32.mrb[0].mxu0
    %v741 = vadd.f32 0.0, %v740
    %v742 = vpop.f32.mrb[0].mxu0
    %743 = vmatprep.mubr.bf16.mxu0 %v540
    %744 = vmatmul.mubr.bf16.gmra.mrb[0].mxu0 %v539
    %v745 = vpop.f32.mrb[0].mxu0
    %v746 = vadd.f32 0.0, %v745
    %v747 = vpop.f32.mrb[0].mxu0
    %v748 = vpop.f32.mrb[0].mxu0
    %v749 = vadd.f32 0.0, %v748
    %v750 = vpop.f32.mrb[0].mxu0
    %751 = vmatprep.mubr.bf16.mxu0 %v542
    %752 = vmatmul.mubr.bf16.gmra.mrb[0].mxu0 %v541
    %v753 = vpop.f32.mrb[0].mxu0
    %v754 = vadd.f32 0.0, %v753
    %v755 = vpop.f32.mrb[0].mxu0
    %v756 = vpop.f32.mrb[0].mxu0
    %v757 = vadd.f32 0.0, %v756
    %v758 = vpop.f32.mrb[0].mxu0
    %759 = vmatprep.mubr.bf16.mxu0 %v544
    %760 = vmatmul.mubr.bf16.gmra.mrb[0].mxu0 %v543
    %v761 = vpop.f32.mrb[0].mxu0
    %v762 = vadd.f32 0.0, %v761
    %v763 = vpop.f32.mrb[0].mxu0
    %v764 = vpop.f32.mrb[0].mxu0
    %v765 = vadd.f32 0.0, %v764
    %v766 = vpop.f32.mrb[0].mxu0
    %767 = vmatprep.mubr.bf16.mxu0 %v546
    %768 = vmatmul.mubr.bf16.gmra.mrb[0].mxu0 %v545
    %v769 = vpop.f32.mrb[0].mxu0
    %v770 = vadd.f32 0.0, %v769
    %v771 = vpop.f32.mrb[0].mxu0
    %v772 = vpop.f32.mrb[0].mxu0
    %v773 = vadd.f32 0.0, %v772
    %v774 = vpop.f32.mrb[0].mxu0
    %775 = vmatprep.mubr.bf16.mxu0 %v548
    %776 = vmatmul.mubr.bf16.gmra.mrb[0].mxu0 %v547
    %v777 = vpop.f32.mrb[0].mxu0
    %v778 = vadd.f32 0.0, %v777
    %v779 = vpop.f32.mrb[0].mxu0
    %v780 = vpop.f32.mrb[0].mxu0
    %v781 = vadd.f32 0.0, %v780
    %v782 = vpop.f32.mrb[0].mxu0
    %783 = vmatprep.mubr.bf16.mxu0 %v550
    %784 = vmatmul.mubr.bf16.gmra.mrb[0].mxu0 %v549
    %v785 = vpop.f32.mrb[0].mxu0
    %v786 = vadd.f32 0.0, %v785
    %v787 = vpop.f32.mrb[0].mxu0
    %v788 = vpop.f32.mrb[0].mxu0
    %v789 = vadd.f32 0.0, %v788
    %v790 = vpop.f32.mrb[0].mxu0
    %791 = vmatprep.mubr.bf16.mxu0 %v552
    %792 = vmatmul.mubr.bf16.gmra.mrb[0].mxu0 %v551
    %v793 = vpop.f32.mrb[0].mxu0
    %v794 = vadd.f32 0.0, %v793
    %v795 = vpop.f32.mrb[0].mxu0
    %v796 = vpop.f32.mrb[0].mxu0
    %v797 = vadd.f32 0.0, %v796
    %v798 = vpop.f32.mrb[0].mxu0
    %799 = vmatprep.mubr.bf16.mxu0 %v554
    %800 = vmatmul.mubr.bf16.gmra.mrb[0].mxu0 %v553
    %v801 = vpop.f32.mrb[0].mxu0
    %v802 = vadd.f32 0.0, %v801
    %v803 = vpop.f32.mrb[0].mxu0
    %v804 = vpop.f32.mrb[0].mxu0
    %v805 = vadd.f32 0.0, %v804
    %v806 = vpop.f32.mrb[0].mxu0
    %807 = vmatprep.mubr.bf16.mxu0 %v556
    %808 = vmatmul.mubr.bf16.gmra.mrb[0].mxu0 %v555
    %v809 = vpop.f32.mrb[0].mxu0
    %v810 = vadd.f32 0.0, %v809
    %v811 = vpop.f32.mrb[0].mxu0
    %v812 = vpop.f32.mrb[0].mxu0
    %v813 = vadd.f32 0.0, %v812
    %v814 = vpop.f32.mrb[0].mxu0
    %815 = vmatprep.mubr.bf16.mxu0 %v558
    %816 = vmatmul.mubr.bf16.gmra.mrb[0].mxu0 %v557
    %v817 = vpop.f32.mrb[0].mxu0
    %v818 = vadd.f32 0.0, %v817
    %v819 = vpop.f32.mrb[0].mxu0
    %v820 = vpop.f32.mrb[0].mxu0
    %v821 = vadd.f32 0.0, %v820
    %v822 = vpop.f32.mrb[0].mxu0
    %823 = vmatprep.mubr.bf16.mxu0 %v560
    %824 = vmatmul.mubr.bf16.gmra.mrb[0].mxu0 %v559
    %v825 = vpop.f32.mrb[0].mxu0
    %v826 = vadd.f32 0.0, %v825
    %v827 = vpop.f32.mrb[0].mxu0
    %v828 = vpop.f32.mrb[0].mxu0
    %v829 = vadd.f32 0.0, %v828
    %v830 = vpop.f32.mrb[0].mxu0
    %831 = vmatprep.mubr.bf16.mxu0 %v562
    %832 = vmatmul.mubr.bf16.gmra.mrb[0].mxu0 %v561
    %v833 = vpop.f32.mrb[0].mxu0
    %v834 = vadd.f32 0.0, %v833
    %v835 = vpop.f32.mrb[0].mxu0
    %v836 = vpop.f32.mrb[0].mxu0
    %v837 = vadd.f32 0.0, %v836
    %v838 = vpop.f32.mrb[0].mxu0
    %839 = vmatprep.mubr.bf16.mxu0 %v564
    %840 = vmatmul.mubr.bf16.gmra.mrb[0].mxu0 %v563
    %v841 = vpop.f32.mrb[0].mxu0
    %v842 = vadd.f32 0.0, %v841
    %v843 = vpop.f32.mrb[0].mxu0
    %v844 = vpop.f32.mrb[0].mxu0
    %v845 = vadd.f32 0.0, %v844
    %v846 = vpop.f32.mrb[0].mxu0
    %847 = vmatprep.mubr.bf16.mxu0 %v566
    %848 = vmatmul.mubr.bf16.gmra.mrb[0].mxu0 %v565
    %v849 = vpop.f32.mrb[0].mxu0
    %v850 = vadd.f32 0.0, %v849
    %v851 = vpop.f32.mrb[0].mxu0
    %v852 = vpop.f32.mrb[0].mxu0
    %v853 = vadd.f32 0.0, %v852
    %v854 = vpop.f32.mrb[0].mxu0
    %855 = vdwg.mxu0
    %v856 = vadd.f32 %v567, %v730
    %v857 = vadd.f32 %v568, %v733
    %v858 = vadd.f32 %v569, %v738
    %v859 = vadd.f32 %v570, %v741
    %v860 = vadd.f32 %v571, %v746
    %v861 = vadd.f32 %v572, %v749
    %v862 = vadd.f32 %v573, %v754
    %v863 = vadd.f32 %v574, %v757
    %v864 = vadd.f32 %v575, %v762
    %v865 = vadd.f32 %v576, %v765
    %v866 = vadd.f32 %v577, %v770
    %v867 = vadd.f32 %v578, %v773
    %v868 = vadd.f32 %v579, %v778
    %v869 = vadd.f32 %v580, %v781
    %v870 = vadd.f32 %v581, %v786
    %v871 = vadd.f32 %v582, %v789
    %v872 = vadd.f32 %v583, %v794
    %v873 = vadd.f32 %v584, %v797
    %v874 = vadd.f32 %v585, %v802
    %v875 = vadd.f32 %v586, %v805
    %v876 = vadd.f32 %v587, %v810
    %v877 = vadd.f32 %v588, %v813
    %v878 = vadd.f32 %v589, %v818
    %v879 = vadd.f32 %v590, %v821
    %v880 = vadd.f32 %v591, %v826
    %v881 = vadd.f32 %v592, %v829
    %v882 = vadd.f32 %v593, %v834
    %v883 = vadd.f32 %v594, %v837
    %v884 = vadd.f32 %v595, %v842
    %v885 = vadd.f32 %v596, %v845
    %v886 = vadd.f32 %v597, %v850
    %v887 = vadd.f32 %v598, %v853
    %888 = vst [vmem:[#allocation2] sm:$0xff] %v856
    %889 = vst [vmem:[#allocation2 + $0x8] sm:$0xff] %v857
    %890 = vst [vmem:[#allocation2 + $0x10] sm:$0xff] %v858
    %891 = vst [vmem:[#allocation2 + $0x18] sm:$0xff] %v859
    %892 = vst [vmem:[#allocation2 + $0x20] sm:$0xff] %v860
    %893 = vst [vmem:[#allocation2 + $0x28] sm:$0xff] %v861
    %894 = vst [vmem:[#allocation2 + $0x30] sm:$0xff] %v862
    %895 = vst [vmem:[#allocation2 + $0x38] sm:$0xff] %v863
    %896 = vst [vmem:[#allocation2 + $0x40] sm:$0xff] %v864
    %897 = vst [vmem:[#allocation2 + $0x48] sm:$0xff] %v865
    %898 = vst [vmem:[#allocation2 + $0x50] sm:$0xff] %v866
    %899 = vst [vmem:[#allocation2 + $0x58] sm:$0xff] %v867
    %900 = vst [vmem:[#allocation2 + $0x60] sm:$0xff] %v868
    %901 = vst [vmem:[#allocation2 + $0x68] sm:$0xff] %v869
    %902 = vst [vmem:[#allocation2 + $0x70] sm:$0xff] %v870
    %903 = vst [vmem:[#allocation2 + $0x78] sm:$0xff] %v871
    %904 = vst [vmem:[#allocation2 + $0x80] sm:$0xff] %v872
    %905 = vst [vmem:[#allocation2 + $0x88] sm:$0xff] %v873
    %906 = vst [vmem:[#allocation2 + $0x90] sm:$0xff] %v874
    %907 = vst [vmem:[#allocation2 + $0x98] sm:$0xff] %v875
    %908 = vst [vmem:[#allocation2 + $0xa0] sm:$0xff] %v876
    %909 = vst [vmem:[#allocation2 + $0xa8] sm:$0xff] %v877
    %910 = vst [vmem:[#allocation2 + $0xb0] sm:$0xff] %v878
    %911 = vst [vmem:[#allocation2 + $0xb8] sm:$0xff] %v879
    %912 = vst [vmem:[#allocation2 + $0xc0] sm:$0xff] %v880
    %913 = vst [vmem:[#allocation2 + $0xc8] sm:$0xff] %v881
    %914 = vst [vmem:[#allocation2 + $0xd0] sm:$0xff] %v882
    %915 = vst [vmem:[#allocation2 + $0xd8] sm:$0xff] %v883
    %916 = vst [vmem:[#allocation2 + $0xe0] sm:$0xff] %v884
    %917 = vst [vmem:[#allocation2 + $0xe8] sm:$0xff] %v885
    %918 = vst [vmem:[#allocation2 + $0xf0] sm:$0xff] %v886
    %919 = vst [vmem:[#allocation2 + $0xf8] sm:$0xff] %v887
  $region37: #{gnn_node_virtualnode_forward.3} parent=0 // pred_fallthru
    _
  // Predicated region
  $region38: #{gnn_node_virtualnode_forward.3} parent=0 // pred_check
    %p920 = pneg %p163
  $region39: #{gnn_node_virtualnode_forward.3} parent=0 // pred_check_branch
    %922 = sbr.rel (%p920) target = $region41
  $region40: #{gnn_node_virtualnode_forward.3} parent=0 // pred_region
    %v923 = vld [vmem:[#allocation2] sm:$0xff]
    %v924 = vld [vmem:[#allocation2 + $0x8] sm:$0xff]
    %v925 = vld [vmem:[#allocation2 + $0x10] sm:$0xff]
    %v926 = vld [vmem:[#allocation2 + $0x18] sm:$0xff]
    %v927 = vld [vmem:[#allocation2 + $0x20] sm:$0xff]
    %v928 = vld [vmem:[#allocation2 + $0x28] sm:$0xff]
    %v929 = vld [vmem:[#allocation2 + $0x30] sm:$0xff]
    %v930 = vld [vmem:[#allocation2 + $0x38] sm:$0xff]
    %v931 = vld [vmem:[#allocation2 + $0x40] sm:$0xff]
    %v932 = vld [vmem:[#allocation2 + $0x48] sm:$0xff]
    %v933 = vld [vmem:[#allocation2 + $0x50] sm:$0xff]
    %v934 = vld [vmem:[#allocation2 + $0x58] sm:$0xff]
    %v935 = vld [vmem:[#allocation2 + $0x60] sm:$0xff]
    %v936 = vld [vmem:[#allocation2 + $0x68] sm:$0xff]
    %v937 = vld [vmem:[#allocation2 + $0x70] sm:$0xff]
    %v938 = vld [vmem:[#allocation2 + $0x78] sm:$0xff]
    %v939 = vld [vmem:[#allocation2 + $0x80] sm:$0xff]
    %v940 = vld [vmem:[#allocation2 + $0x88] sm:$0xff]
    %v941 = vld [vmem:[#allocation2 + $0x90] sm:$0xff]
    %v942 = vld [vmem:[#allocation2 + $0x98] sm:$0xff]
    %v943 = vld [vmem:[#allocation2 + $0xa0] sm:$0xff]
    %v944 = vld [vmem:[#allocation2 + $0xa8] sm:$0xff]
    %v945 = vld [vmem:[#allocation2 + $0xb0] sm:$0xff]
    %v946 = vld [vmem:[#allocation2 + $0xb8] sm:$0xff]
    %v947 = vld [vmem:[#allocation2 + $0xc0] sm:$0xff]
    %v948 = vld [vmem:[#allocation2 + $0xc8] sm:$0xff]
    %v949 = vld [vmem:[#allocation2 + $0xd0] sm:$0xff]
    %v950 = vld [vmem:[#allocation2 + $0xd8] sm:$0xff]
    %v951 = vld [vmem:[#allocation2 + $0xe0] sm:$0xff]
    %v952 = vld [vmem:[#allocation2 + $0xe8] sm:$0xff]
    %v953 = vld [vmem:[#allocation2 + $0xf0] sm:$0xff]
    %v954 = vld [vmem:[#allocation2 + $0xf8] sm:$0xff]
    %v955 = vld [vmem:[%s5] sm:$0xff]
    %v956 = vld [vmem:[%s5 + $0x8] sm:$0xff]
    %v957 = vld [vmem:[%s5 + $0x10] sm:$0xff]
    %v958 = vld [vmem:[%s5 + $0x18] sm:$0xff]
    %v959 = vld [vmem:[%s5 + $0x20] sm:$0xff]
    %v960 = vld [vmem:[%s5 + $0x28] sm:$0xff]
    %v961 = vld [vmem:[%s5 + $0x30] sm:$0xff]
    %v962 = vld [vmem:[%s5 + $0x38] sm:$0xff]
    %v963 = vld [vmem:[%s5 + $0x40] sm:$0xff]
    %v964 = vld [vmem:[%s5 + $0x48] sm:$0xff]
    %v965 = vld [vmem:[%s5 + $0x50] sm:$0xff]
    %v966 = vld [vmem:[%s5 + $0x58] sm:$0xff]
    %v967 = vld [vmem:[%s5 + $0x60] sm:$0xff]
    %v968 = vld [vmem:[%s5 + $0x68] sm:$0xff]
    %v969 = vld [vmem:[%s5 + $0x70] sm:$0xff]
    %v970 = vld [vmem:[%s5 + $0x78] sm:$0xff]
    %v971 = vld [vmem:[%s6] sm:$0x1]
    %v973 = vlaneseq
    %v974 = vshrl.u32 %v973, 7
    %v975 = vsub.s32 0, %v974
    %v976 = vrot.slane %v971, %v975
    %978 = vmatprep.subr.mxu0 0.0
    %979 = vmatpush1.msra.mxu0 %v955
    %980 = vmatprep.subr.mxu0 0.0
    %981 = vmatpush1.msra.mxu0 %v956
    %982 = vmatprep.subr.mxu0 0.0
    %983 = vmatpush1.msra.mxu0 %v957
    %984 = vmatprep.subr.mxu0 0.0
    %985 = vmatpush1.msra.mxu0 %v958
    %986 = vmatprep.subr.mxu0 0.0
    %987 = vmatpush1.msra.mxu0 %v959
    %988 = vmatprep.subr.mxu0 0.0
    %989 = vmatpush1.msra.mxu0 %v960
    %990 = vmatprep.subr.mxu0 0.0
    %991 = vmatpush1.msra.mxu0 %v961
    %992 = vmatprep.subr.mxu0 0.0
    %993 = vmatpush1.msra.mxu0 %v962
    %994 = vmatprep.subr.mxu0 0.0
    %995 = vmatpush1.msra.mxu0 %v963
    %996 = vmatprep.subr.mxu0 0.0
    %997 = vmatpush1.msra.mxu0 %v964
    %998 = vmatprep.subr.mxu0 0.0
    %999 = vmatpush1.msra.mxu0 %v965
    %1000 = vmatprep.subr.mxu0 0.0
    %1001 = vmatpush1.msra.mxu0 %v966
    %1002 = vmatprep.subr.mxu0 0.0
    %1003 = vmatpush1.msra.mxu0 %v967
    %1004 = vmatprep.subr.mxu0 0.0
    %1005 = vmatpush1.msra.mxu0 %v968
    %1006 = vmatprep.subr.mxu0 0.0
    %1007 = vmatpush1.msra.mxu0 %v969
    %1008 = vmatprep.subr.mxu0 0.0
    %1009 = vmatpush1.msra.mxu0 %v970
    %1010 = vmatprep.subr.mxu0 0.0
    %1011 = vmatpush1.msra.mxu0 0.0
    %1012 = vmatprep.subr.mxu0 0.0
    %1013 = vmatpush1.msra.mxu0 0.0
    %1014 = vmatprep.subr.mxu0 0.0
    %1015 = vmatpush1.msra.mxu0 0.0
    %1016 = vmatprep.subr.mxu0 0.0
    %1017 = vmatpush1.msra.mxu0 0.0
    %1018 = vmatprep.subr.mxu0 0.0
    %1019 = vmatpush1.msra.mxu0 0.0
    %1020 = vmatprep.subr.mxu0 0.0
    %1021 = vmatpush1.msra.mxu0 0.0
    %1022 = vmatprep.subr.mxu0 0.0
    %1023 = vmatpush1.msra.mxu0 0.0
    %1024 = vmatprep.subr.mxu0 0.0
    %1025 = vmatpush1.msra.mxu0 0.0
    %1026 = vmatprep.subr.mxu0 0.0
    %1027 = vmatpush1.msra.mxu0 0.0
    %1028 = vmatprep.subr.mxu0 0.0
    %1029 = vmatpush1.msra.mxu0 0.0
    %1030 = vmatprep.subr.mxu0 0.0
    %1031 = vmatpush1.msra.mxu0 0.0
    %1032 = vmatprep.subr.mxu0 0.0
    %1033 = vmatpush1.msra.mxu0 0.0
    %1034 = vmatprep.subr.mxu0 0.0
    %1035 = vmatpush1.msra.mxu0 0.0
    %1036 = vmatprep.subr.mxu0 0.0
    %1037 = vmatpush1.msra.mxu0 0.0
    %1038 = vmatprep.subr.mxu0 0.0
    %1039 = vmatpush1.msra.mxu0 0.0
    %1040 = vmatprep.subr.mxu0 0.0
    %1041 = vmatpush1.msra.mxu0 0.0
    %1042 = vmatprep.mubr.f32.mxu0 0.0
    %1043 = vmatmul.mubr.f32.gmra.mrb[0].mxu0 %v923
    %v1044 = vpop.f32.mrb[0].mxu0
    %v1045 = vadd.f32 %v976, %v1044
    %v1046 = vpop.f32.mrb[0].mxu0
    %1047 = vmatprep.mubr.f32.mxu0 0.0
    %1048 = vmatmul.mubr.f32.gmra.mrb[0].mxu0 %v924
    %v1049 = vpop.f32.mrb[0].mxu0
    %v1050 = vadd.f32 %v976, %v1049
    %v1051 = vpop.f32.mrb[0].mxu0
    %1052 = vmatprep.mubr.f32.mxu0 0.0
    %1053 = vmatmul.mubr.f32.gmra.mrb[0].mxu0 %v925
    %v1054 = vpop.f32.mrb[0].mxu0
    %v1055 = vadd.f32 %v976, %v1054
    %v1056 = vpop.f32.mrb[0].mxu0
    %1057 = vmatprep.mubr.f32.mxu0 0.0
    %1058 = vmatmul.mubr.f32.gmra.mrb[0].mxu0 %v926
    %v1059 = vpop.f32.mrb[0].mxu0
    %v1060 = vadd.f32 %v976, %v1059
    %v1061 = vpop.f32.mrb[0].mxu0
    %1062 = vmatprep.mubr.f32.mxu0 0.0
    %1063 = vmatmul.mubr.f32.gmra.mrb[0].mxu0 %v927
    %v1064 = vpop.f32.mrb[0].mxu0
    %v1065 = vadd.f32 %v976, %v1064
    %v1066 = vpop.f32.mrb[0].mxu0
    %1067 = vmatprep.mubr.f32.mxu0 0.0
    %1068 = vmatmul.mubr.f32.gmra.mrb[0].mxu0 %v928
    %v1069 = vpop.f32.mrb[0].mxu0
    %v1070 = vadd.f32 %v976, %v1069
    %v1071 = vpop.f32.mrb[0].mxu0
    %1072 = vmatprep.mubr.f32.mxu0 0.0
    %1073 = vmatmul.mubr.f32.gmra.mrb[0].mxu0 %v929
    %v1074 = vpop.f32.mrb[0].mxu0
    %v1075 = vadd.f32 %v976, %v1074
    %v1076 = vpop.f32.mrb[0].mxu0
    %1077 = vmatprep.mubr.f32.mxu0 0.0
    %1078 = vmatmul.mubr.f32.gmra.mrb[0].mxu0 %v930
    %v1079 = vpop.f32.mrb[0].mxu0
    %v1080 = vadd.f32 %v976, %v1079
    %v1081 = vpop.f32.mrb[0].mxu0
    %1082 = vmatprep.mubr.f32.mxu0 0.0
    %1083 = vmatmul.mubr.f32.gmra.mrb[0].mxu0 %v931
    %v1084 = vpop.f32.mrb[0].mxu0
    %v1085 = vadd.f32 %v976, %v1084
    %v1086 = vpop.f32.mrb[0].mxu0
    %1087 = vmatprep.mubr.f32.mxu0 0.0
    %1088 = vmatmul.mubr.f32.gmra.mrb[0].mxu0 %v932
    %v1089 = vpop.f32.mrb[0].mxu0
    %v1090 = vadd.f32 %v976, %v1089
    %v1091 = vpop.f32.mrb[0].mxu0
    %1092 = vmatprep.mubr.f32.mxu0 0.0
    %1093 = vmatmul.mubr.f32.gmra.mrb[0].mxu0 %v933
    %v1094 = vpop.f32.mrb[0].mxu0
    %v1095 = vadd.f32 %v976, %v1094
    %v1096 = vpop.f32.mrb[0].mxu0
    %1097 = vmatprep.mubr.f32.mxu0 0.0
    %1098 = vmatmul.mubr.f32.gmra.mrb[0].mxu0 %v934
    %v1099 = vpop.f32.mrb[0].mxu0
    %v1100 = vadd.f32 %v976, %v1099
    %v1101 = vpop.f32.mrb[0].mxu0
    %1102 = vmatprep.mubr.f32.mxu0 0.0
    %1103 = vmatmul.mubr.f32.gmra.mrb[0].mxu0 %v935
    %v1104 = vpop.f32.mrb[0].mxu0
    %v1105 = vadd.f32 %v976, %v1104
    %v1106 = vpop.f32.mrb[0].mxu0
    %1107 = vmatprep.mubr.f32.mxu0 0.0
    %1108 = vmatmul.mubr.f32.gmra.mrb[0].mxu0 %v936
    %v1109 = vpop.f32.mrb[0].mxu0
    %v1110 = vadd.f32 %v976, %v1109
    %v1111 = vpop.f32.mrb[0].mxu0
    %1112 = vmatprep.mubr.f32.mxu0 0.0
    %1113 = vmatmul.mubr.f32.gmra.mrb[0].mxu0 %v937
    %v1114 = vpop.f32.mrb[0].mxu0
    %v1115 = vadd.f32 %v976, %v1114
    %v1116 = vpop.f32.mrb[0].mxu0
    %1117 = vmatprep.mubr.f32.mxu0 0.0
    %1118 = vmatmul.mubr.f32.gmra.mrb[0].mxu0 %v938
    %v1119 = vpop.f32.mrb[0].mxu0
    %v1120 = vadd.f32 %v976, %v1119
    %v1121 = vpop.f32.mrb[0].mxu0
    %1122 = vmatprep.mubr.f32.mxu0 0.0
    %1123 = vmatmul.mubr.f32.gmra.mrb[0].mxu0 %v939
    %v1124 = vpop.f32.mrb[0].mxu0
    %v1125 = vadd.f32 %v976, %v1124
    %v1126 = vpop.f32.mrb[0].mxu0
    %1127 = vmatprep.mubr.f32.mxu0 0.0
    %1128 = vmatmul.mubr.f32.gmra.mrb[0].mxu0 %v940
    %v1129 = vpop.f32.mrb[0].mxu0
    %v1130 = vadd.f32 %v976, %v1129
    %v1131 = vpop.f32.mrb[0].mxu0
    %1132 = vmatprep.mubr.f32.mxu0 0.0
    %1133 = vmatmul.mubr.f32.gmra.mrb[0].mxu0 %v941
    %v1134 = vpop.f32.mrb[0].mxu0
    %v1135 = vadd.f32 %v976, %v1134
    %v1136 = vpop.f32.mrb[0].mxu0
    %1137 = vmatprep.mubr.f32.mxu0 0.0
    %1138 = vmatmul.mubr.f32.gmra.mrb[0].mxu0 %v942
    %v1139 = vpop.f32.mrb[0].mxu0
    %v1140 = vadd.f32 %v976, %v1139
    %v1141 = vpop.f32.mrb[0].mxu0
    %1142 = vmatprep.mubr.f32.mxu0 0.0
    %1143 = vmatmul.mubr.f32.gmra.mrb[0].mxu0 %v943
    %v1144 = vpop.f32.mrb[0].mxu0
    %v1145 = vadd.f32 %v976, %v1144
    %v1146 = vpop.f32.mrb[0].mxu0
    %1147 = vmatprep.mubr.f32.mxu0 0.0
    %1148 = vmatmul.mubr.f32.gmra.mrb[0].mxu0 %v944
    %v1149 = vpop.f32.mrb[0].mxu0
    %v1150 = vadd.f32 %v976, %v1149
    %v1151 = vpop.f32.mrb[0].mxu0
    %1152 = vmatprep.mubr.f32.mxu0 0.0
    %1153 = vmatmul.mubr.f32.gmra.mrb[0].mxu0 %v945
    %v1154 = vpop.f32.mrb[0].mxu0
    %v1155 = vadd.f32 %v976, %v1154
    %v1156 = vpop.f32.mrb[0].mxu0
    %1157 = vmatprep.mubr.f32.mxu0 0.0
    %1158 = vmatmul.mubr.f32.gmra.mrb[0].mxu0 %v946
    %v1159 = vpop.f32.mrb[0].mxu0
    %v1160 = vadd.f32 %v976, %v1159
    %v1161 = vpop.f32.mrb[0].mxu0
    %1162 = vmatprep.mubr.f32.mxu0 0.0
    %1163 = vmatmul.mubr.f32.gmra.mrb[0].mxu0 %v947
    %v1164 = vpop.f32.mrb[0].mxu0
    %v1165 = vadd.f32 %v976, %v1164
    %v1166 = vpop.f32.mrb[0].mxu0
    %1167 = vmatprep.mubr.f32.mxu0 0.0
    %1168 = vmatmul.mubr.f32.gmra.mrb[0].mxu0 %v948
    %v1169 = vpop.f32.mrb[0].mxu0
    %v1170 = vadd.f32 %v976, %v1169
    %v1171 = vpop.f32.mrb[0].mxu0
    %1172 = vmatprep.mubr.f32.mxu0 0.0
    %1173 = vmatmul.mubr.f32.gmra.mrb[0].mxu0 %v949
    %v1174 = vpop.f32.mrb[0].mxu0
    %v1175 = vadd.f32 %v976, %v1174
    %v1176 = vpop.f32.mrb[0].mxu0
    %1177 = vmatprep.mubr.f32.mxu0 0.0
    %1178 = vmatmul.mubr.f32.gmra.mrb[0].mxu0 %v950
    %v1179 = vpop.f32.mrb[0].mxu0
    %v1180 = vadd.f32 %v976, %v1179
    %v1181 = vpop.f32.mrb[0].mxu0
    %1182 = vmatprep.mubr.f32.mxu0 0.0
    %1183 = vmatmul.mubr.f32.gmra.mrb[0].mxu0 %v951
    %v1184 = vpop.f32.mrb[0].mxu0
    %v1185 = vadd.f32 %v976, %v1184
    %v1186 = vpop.f32.mrb[0].mxu0
    %1187 = vmatprep.mubr.f32.mxu0 0.0
    %1188 = vmatmul.mubr.f32.gmra.mrb[0].mxu0 %v952
    %v1189 = vpop.f32.mrb[0].mxu0
    %v1190 = vadd.f32 %v976, %v1189
    %v1191 = vpop.f32.mrb[0].mxu0
    %1192 = vmatprep.mubr.f32.mxu0 0.0
    %1193 = vmatmul.mubr.f32.gmra.mrb[0].mxu0 %v953
    %v1194 = vpop.f32.mrb[0].mxu0
    %v1195 = vadd.f32 %v976, %v1194
    %v1196 = vpop.f32.mrb[0].mxu0
    %1197 = vmatprep.mubr.f32.mxu0 0.0
    %1198 = vmatmul.mubr.f32.gmra.mrb[0].mxu0 %v954
    %v1199 = vpop.f32.mrb[0].mxu0
    %v1200 = vadd.f32 %v976, %v1199
    %v1201 = vpop.f32.mrb[0].mxu0
    %1202 = vdwg.mxu0
    %v1203 = vmax.f32 %v1045, 0.0
    %v1204 = vmax.f32 %v1050, 0.0
    %v1205 = vmax.f32 %v1055, 0.0
    %v1206 = vmax.f32 %v1060, 0.0
    %v1207 = vmax.f32 %v1065, 0.0
    %v1208 = vmax.f32 %v1070, 0.0
    %v1209 = vmax.f32 %v1075, 0.0
    %v1210 = vmax.f32 %v1080, 0.0
    %v1211 = vmax.f32 %v1085, 0.0
    %v1212 = vmax.f32 %v1090, 0.0
    %v1213 = vmax.f32 %v1095, 0.0
    %v1214 = vmax.f32 %v1100, 0.0
    %v1215 = vmax.f32 %v1105, 0.0
    %v1216 = vmax.f32 %v1110, 0.0
    %v1217 = vmax.f32 %v1115, 0.0
    %v1218 = vmax.f32 %v1120, 0.0
    %v1219 = vmax.f32 %v1125, 0.0
    %v1220 = vmax.f32 %v1130, 0.0
    %v1221 = vmax.f32 %v1135, 0.0
    %v1222 = vmax.f32 %v1140, 0.0
    %v1223 = vmax.f32 %v1145, 0.0
    %v1224 = vmax.f32 %v1150, 0.0
    %v1225 = vmax.f32 %v1155, 0.0
    %v1226 = vmax.f32 %v1160, 0.0
    %v1227 = vmax.f32 %v1165, 0.0
    %v1228 = vmax.f32 %v1170, 0.0
    %v1229 = vmax.f32 %v1175, 0.0
    %v1230 = vmax.f32 %v1180, 0.0
    %v1231 = vmax.f32 %v1185, 0.0
    %v1232 = vmax.f32 %v1190, 0.0
    %v1233 = vmax.f32 %v1195, 0.0
    %v1234 = vmax.f32 %v1200, 0.0
    %v1235 = vld [vmem:[%s7] sm:$0xff]
    %v1236 = vld [vmem:[%s7 + $0x8] sm:$0xff]
    %v1237 = vld [vmem:[%s7 + $0x10] sm:$0xff]
    %v1238 = vld [vmem:[%s7 + $0x18] sm:$0xff]
    %v1239 = vld [vmem:[%s7 + $0x20] sm:$0xff]
    %v1240 = vld [vmem:[%s7 + $0x28] sm:$0xff]
    %v1241 = vld [vmem:[%s7 + $0x30] sm:$0xff]
    %v1242 = vld [vmem:[%s7 + $0x38] sm:$0xff]
    %v1243 = vld [vmem:[%s7 + $0x40] sm:$0xff]
    %v1244 = vld [vmem:[%s7 + $0x48] sm:$0xff]
    %v1245 = vld [vmem:[%s7 + $0x50] sm:$0xff]
    %v1246 = vld [vmem:[%s7 + $0x58] sm:$0xff]
    %v1247 = vld [vmem:[%s7 + $0x60] sm:$0xff]
    %v1248 = vld [vmem:[%s7 + $0x68] sm:$0xff]
    %v1249 = vld [vmem:[%s7 + $0x70] sm:$0xff]
    %v1250 = vld [vmem:[%s7 + $0x78] sm:$0xff]
    %v1251 = vld [vmem:[%s8] sm:$0x1]
    %v1253 = vlaneseq
    %v1254 = vshrl.u32 %v1253, 7
    %v1255 = vsub.s32 0, %v1254
    %v1256 = vrot.slane %v1251, %v1255
    %1258 = vmatprep.subr.mxu0 0.0
    %1259 = vmatpush1.msra.mxu0 %v1235
    %1260 = vmatprep.subr.mxu0 0.0
    %1261 = vmatpush1.msra.mxu0 %v1236
    %1262 = vmatprep.subr.mxu0 0.0
    %1263 = vmatpush1.msra.mxu0 %v1237
    %1264 = vmatprep.subr.mxu0 0.0
    %1265 = vmatpush1.msra.mxu0 %v1238
    %1266 = vmatprep.subr.mxu0 0.0
    %1267 = vmatpush1.msra.mxu0 %v1239
    %1268 = vmatprep.subr.mxu0 0.0
    %1269 = vmatpush1.msra.mxu0 %v1240
    %1270 = vmatprep.subr.mxu0 0.0
    %1271 = vmatpush1.msra.mxu0 %v1241
    %1272 = vmatprep.subr.mxu0 0.0
    %1273 = vmatpush1.msra.mxu0 %v1242
    %1274 = vmatprep.subr.mxu0 0.0
    %1275 = vmatpush1.msra.mxu0 %v1243
    %1276 = vmatprep.subr.mxu0 0.0
    %1277 = vmatpush1.msra.mxu0 %v1244
    %1278 = vmatprep.subr.mxu0 0.0
    %1279 = vmatpush1.msra.mxu0 %v1245
    %1280 = vmatprep.subr.mxu0 0.0
    %1281 = vmatpush1.msra.mxu0 %v1246
    %1282 = vmatprep.subr.mxu0 0.0
    %1283 = vmatpush1.msra.mxu0 %v1247
    %1284 = vmatprep.subr.mxu0 0.0
    %1285 = vmatpush1.msra.mxu0 %v1248
    %1286 = vmatprep.subr.mxu0 0.0
    %1287 = vmatpush1.msra.mxu0 %v1249
    %1288 = vmatprep.subr.mxu0 0.0
    %1289 = vmatpush1.msra.mxu0 %v1250
    %1290 = vmatprep.subr.mxu0 0.0
    %1291 = vmatpush1.msra.mxu0 0.0
    %1292 = vmatprep.subr.mxu0 0.0
    %1293 = vmatpush1.msra.mxu0 0.0
    %1294 = vmatprep.subr.mxu0 0.0
    %1295 = vmatpush1.msra.mxu0 0.0
    %1296 = vmatprep.subr.mxu0 0.0
    %1297 = vmatpush1.msra.mxu0 0.0
    %1298 = vmatprep.subr.mxu0 0.0
    %1299 = vmatpush1.msra.mxu0 0.0
    %1300 = vmatprep.subr.mxu0 0.0
    %1301 = vmatpush1.msra.mxu0 0.0
    %1302 = vmatprep.subr.mxu0 0.0
    %1303 = vmatpush1.msra.mxu0 0.0
    %1304 = vmatprep.subr.mxu0 0.0
    %1305 = vmatpush1.msra.mxu0 0.0
    %1306 = vmatprep.subr.mxu0 0.0
    %1307 = vmatpush1.msra.mxu0 0.0
    %1308 = vmatprep.subr.mxu0 0.0
    %1309 = vmatpush1.msra.mxu0 0.0
    %1310 = vmatprep.subr.mxu0 0.0
    %1311 = vmatpush1.msra.mxu0 0.0
    %1312 = vmatprep.subr.mxu0 0.0
    %1313 = vmatpush1.msra.mxu0 0.0
    %1314 = vmatprep.subr.mxu0 0.0
    %1315 = vmatpush1.msra.mxu0 0.0
    %1316 = vmatprep.subr.mxu0 0.0
    %1317 = vmatpush1.msra.mxu0 0.0
    %1318 = vmatprep.subr.mxu0 0.0
    %1319 = vmatpush1.msra.mxu0 0.0
    %1320 = vmatprep.subr.mxu0 0.0
    %1321 = vmatpush1.msra.mxu0 0.0
    %1322 = vmatprep.mubr.f32.mxu0 0.0
    %1323 = vmatmul.mubr.f32.gmra.mrb[0].mxu0 %v1203
    %v1324 = vpop.f32.mrb[0].mxu0
    %v1325 = vadd.f32 %v1256, %v1324
    %v1326 = vpop.f32.mrb[0].mxu0
    %1327 = vmatprep.mubr.f32.mxu0 0.0
    %1328 = vmatmul.mubr.f32.gmra.mrb[0].mxu0 %v1204
    %v1329 = vpop.f32.mrb[0].mxu0
    %v1330 = vadd.f32 %v1256, %v1329
    %v1331 = vpop.f32.mrb[0].mxu0
    %1332 = vmatprep.mubr.f32.mxu0 0.0
    %1333 = vmatmul.mubr.f32.gmra.mrb[0].mxu0 %v1205
    %v1334 = vpop.f32.mrb[0].mxu0
    %v1335 = vadd.f32 %v1256, %v1334
    %v1336 = vpop.f32.mrb[0].mxu0
    %1337 = vmatprep.mubr.f32.mxu0 0.0
    %1338 = vmatmul.mubr.f32.gmra.mrb[0].mxu0 %v1206
    %v1339 = vpop.f32.mrb[0].mxu0
    %v1340 = vadd.f32 %v1256, %v1339
    %v1341 = vpop.f32.mrb[0].mxu0
    %1342 = vmatprep.mubr.f32.mxu0 0.0
    %1343 = vmatmul.mubr.f32.gmra.mrb[0].mxu0 %v1207
    %v1344 = vpop.f32.mrb[0].mxu0
    %v1345 = vadd.f32 %v1256, %v1344
    %v1346 = vpop.f32.mrb[0].mxu0
    %1347 = vmatprep.mubr.f32.mxu0 0.0
    %1348 = vmatmul.mubr.f32.gmra.mrb[0].mxu0 %v1208
    %v1349 = vpop.f32.mrb[0].mxu0
    %v1350 = vadd.f32 %v1256, %v1349
    %v1351 = vpop.f32.mrb[0].mxu0
    %1352 = vmatprep.mubr.f32.mxu0 0.0
    %1353 = vmatmul.mubr.f32.gmra.mrb[0].mxu0 %v1209
    %v1354 = vpop.f32.mrb[0].mxu0
    %v1355 = vadd.f32 %v1256, %v1354
    %v1356 = vpop.f32.mrb[0].mxu0
    %1357 = vmatprep.mubr.f32.mxu0 0.0
    %1358 = vmatmul.mubr.f32.gmra.mrb[0].mxu0 %v1210
    %v1359 = vpop.f32.mrb[0].mxu0
    %v1360 = vadd.f32 %v1256, %v1359
    %v1361 = vpop.f32.mrb[0].mxu0
    %1362 = vmatprep.mubr.f32.mxu0 0.0
    %1363 = vmatmul.mubr.f32.gmra.mrb[0].mxu0 %v1211
    %v1364 = vpop.f32.mrb[0].mxu0
    %v1365 = vadd.f32 %v1256, %v1364
    %v1366 = vpop.f32.mrb[0].mxu0
    %1367 = vmatprep.mubr.f32.mxu0 0.0
    %1368 = vmatmul.mubr.f32.gmra.mrb[0].mxu0 %v1212
    %v1369 = vpop.f32.mrb[0].mxu0
    %v1370 = vadd.f32 %v1256, %v1369
    %v1371 = vpop.f32.mrb[0].mxu0
    %1372 = vmatprep.mubr.f32.mxu0 0.0
    %1373 = vmatmul.mubr.f32.gmra.mrb[0].mxu0 %v1213
    %v1374 = vpop.f32.mrb[0].mxu0
    %v1375 = vadd.f32 %v1256, %v1374
    %v1376 = vpop.f32.mrb[0].mxu0
    %1377 = vmatprep.mubr.f32.mxu0 0.0
    %1378 = vmatmul.mubr.f32.gmra.mrb[0].mxu0 %v1214
    %v1379 = vpop.f32.mrb[0].mxu0
    %v1380 = vadd.f32 %v1256, %v1379
    %v1381 = vpop.f32.mrb[0].mxu0
    %1382 = vmatprep.mubr.f32.mxu0 0.0
    %1383 = vmatmul.mubr.f32.gmra.mrb[0].mxu0 %v1215
    %v1384 = vpop.f32.mrb[0].mxu0
    %v1385 = vadd.f32 %v1256, %v1384
    %v1386 = vpop.f32.mrb[0].mxu0
    %1387 = vmatprep.mubr.f32.mxu0 0.0
    %1388 = vmatmul.mubr.f32.gmra.mrb[0].mxu0 %v1216
    %v1389 = vpop.f32.mrb[0].mxu0
    %v1390 = vadd.f32 %v1256, %v1389
    %v1391 = vpop.f32.mrb[0].mxu0
    %1392 = vmatprep.mubr.f32.mxu0 0.0
    %1393 = vmatmul.mubr.f32.gmra.mrb[0].mxu0 %v1217
    %v1394 = vpop.f32.mrb[0].mxu0
    %v1395 = vadd.f32 %v1256, %v1394
    %v1396 = vpop.f32.mrb[0].mxu0
    %1397 = vmatprep.mubr.f32.mxu0 0.0
    %1398 = vmatmul.mubr.f32.gmra.mrb[0].mxu0 %v1218
    %v1399 = vpop.f32.mrb[0].mxu0
    %v1400 = vadd.f32 %v1256, %v1399
    %v1401 = vpop.f32.mrb[0].mxu0
    %1402 = vmatprep.mubr.f32.mxu0 0.0
    %1403 = vmatmul.mubr.f32.gmra.mrb[0].mxu0 %v1219
    %v1404 = vpop.f32.mrb[0].mxu0
    %v1405 = vadd.f32 %v1256, %v1404
    %v1406 = vpop.f32.mrb[0].mxu0
    %1407 = vmatprep.mubr.f32.mxu0 0.0
    %1408 = vmatmul.mubr.f32.gmra.mrb[0].mxu0 %v1220
    %v1409 = vpop.f32.mrb[0].mxu0
    %v1410 = vadd.f32 %v1256, %v1409
    %v1411 = vpop.f32.mrb[0].mxu0
    %1412 = vmatprep.mubr.f32.mxu0 0.0
    %1413 = vmatmul.mubr.f32.gmra.mrb[0].mxu0 %v1221
    %v1414 = vpop.f32.mrb[0].mxu0
    %v1415 = vadd.f32 %v1256, %v1414
    %v1416 = vpop.f32.mrb[0].mxu0
    %1417 = vmatprep.mubr.f32.mxu0 0.0
    %1418 = vmatmul.mubr.f32.gmra.mrb[0].mxu0 %v1222
    %v1419 = vpop.f32.mrb[0].mxu0
    %v1420 = vadd.f32 %v1256, %v1419
    %v1421 = vpop.f32.mrb[0].mxu0
    %1422 = vmatprep.mubr.f32.mxu0 0.0
    %1423 = vmatmul.mubr.f32.gmra.mrb[0].mxu0 %v1223
    %v1424 = vpop.f32.mrb[0].mxu0
    %v1425 = vadd.f32 %v1256, %v1424
    %v1426 = vpop.f32.mrb[0].mxu0
    %1427 = vmatprep.mubr.f32.mxu0 0.0
    %1428 = vmatmul.mubr.f32.gmra.mrb[0].mxu0 %v1224
    %v1429 = vpop.f32.mrb[0].mxu0
    %v1430 = vadd.f32 %v1256, %v1429
    %v1431 = vpop.f32.mrb[0].mxu0
    %1432 = vmatprep.mubr.f32.mxu0 0.0
    %1433 = vmatmul.mubr.f32.gmra.mrb[0].mxu0 %v1225
    %v1434 = vpop.f32.mrb[0].mxu0
    %v1435 = vadd.f32 %v1256, %v1434
    %v1436 = vpop.f32.mrb[0].mxu0
    %1437 = vmatprep.mubr.f32.mxu0 0.0
    %1438 = vmatmul.mubr.f32.gmra.mrb[0].mxu0 %v1226
    %v1439 = vpop.f32.mrb[0].mxu0
    %v1440 = vadd.f32 %v1256, %v1439
    %v1441 = vpop.f32.mrb[0].mxu0
    %1442 = vmatprep.mubr.f32.mxu0 0.0
    %1443 = vmatmul.mubr.f32.gmra.mrb[0].mxu0 %v1227
    %v1444 = vpop.f32.mrb[0].mxu0
    %v1445 = vadd.f32 %v1256, %v1444
    %v1446 = vpop.f32.mrb[0].mxu0
    %1447 = vmatprep.mubr.f32.mxu0 0.0
    %1448 = vmatmul.mubr.f32.gmra.mrb[0].mxu0 %v1228
    %v1449 = vpop.f32.mrb[0].mxu0
    %v1450 = vadd.f32 %v1256, %v1449
    %v1451 = vpop.f32.mrb[0].mxu0
    %1452 = vmatprep.mubr.f32.mxu0 0.0
    %1453 = vmatmul.mubr.f32.gmra.mrb[0].mxu0 %v1229
    %v1454 = vpop.f32.mrb[0].mxu0
    %v1455 = vadd.f32 %v1256, %v1454
    %v1456 = vpop.f32.mrb[0].mxu0
    %1457 = vmatprep.mubr.f32.mxu0 0.0
    %1458 = vmatmul.mubr.f32.gmra.mrb[0].mxu0 %v1230
    %v1459 = vpop.f32.mrb[0].mxu0
    %v1460 = vadd.f32 %v1256, %v1459
    %v1461 = vpop.f32.mrb[0].mxu0
    %1462 = vmatprep.mubr.f32.mxu0 0.0
    %1463 = vmatmul.mubr.f32.gmra.mrb[0].mxu0 %v1231
    %v1464 = vpop.f32.mrb[0].mxu0
    %v1465 = vadd.f32 %v1256, %v1464
    %v1466 = vpop.f32.mrb[0].mxu0
    %1467 = vmatprep.mubr.f32.mxu0 0.0
    %1468 = vmatmul.mubr.f32.gmra.mrb[0].mxu0 %v1232
    %v1469 = vpop.f32.mrb[0].mxu0
    %v1470 = vadd.f32 %v1256, %v1469
    %v1471 = vpop.f32.mrb[0].mxu0
    %1472 = vmatprep.mubr.f32.mxu0 0.0
    %1473 = vmatmul.mubr.f32.gmra.mrb[0].mxu0 %v1233
    %v1474 = vpop.f32.mrb[0].mxu0
    %v1475 = vadd.f32 %v1256, %v1474
    %v1476 = vpop.f32.mrb[0].mxu0
    %1477 = vmatprep.mubr.f32.mxu0 0.0
    %1478 = vmatmul.mubr.f32.gmra.mrb[0].mxu0 %v1234
    %v1479 = vpop.f32.mrb[0].mxu0
    %v1480 = vadd.f32 %v1256, %v1479
    %v1481 = vpop.f32.mrb[0].mxu0
    %1482 = vdwg.mxu0
    %1483 = vst [vmem:[%s9] sm:$0xff] %v1325
    %1484 = vst [vmem:[%s9 + $0x8] sm:$0xff] %v1330
    %1485 = vst [vmem:[%s9 + $0x10] sm:$0xff] %v1335
    %1486 = vst [vmem:[%s9 + $0x18] sm:$0xff] %v1340
    %1487 = vst [vmem:[%s9 + $0x20] sm:$0xff] %v1345
    %1488 = vst [vmem:[%s9 + $0x28] sm:$0xff] %v1350
    %1489 = vst [vmem:[%s9 + $0x30] sm:$0xff] %v1355
    %1490 = vst [vmem:[%s9 + $0x38] sm:$0xff] %v1360
    %1491 = vst [vmem:[%s9 + $0x40] sm:$0xff] %v1365
    %1492 = vst [vmem:[%s9 + $0x48] sm:$0xff] %v1370
    %1493 = vst [vmem:[%s9 + $0x50] sm:$0xff] %v1375
    %1494 = vst [vmem:[%s9 + $0x58] sm:$0xff] %v1380
    %1495 = vst [vmem:[%s9 + $0x60] sm:$0xff] %v1385
    %1496 = vst [vmem:[%s9 + $0x68] sm:$0xff] %v1390
    %1497 = vst [vmem:[%s9 + $0x70] sm:$0xff] %v1395
    %1498 = vst [vmem:[%s9 + $0x78] sm:$0xff] %v1400
    %1499 = vst [vmem:[%s9 + $0x80] sm:$0xff] %v1405
    %1500 = vst [vmem:[%s9 + $0x88] sm:$0xff] %v1410
    %1501 = vst [vmem:[%s9 + $0x90] sm:$0xff] %v1415
    %1502 = vst [vmem:[%s9 + $0x98] sm:$0xff] %v1420
    %1503 = vst [vmem:[%s9 + $0xa0] sm:$0xff] %v1425
    %1504 = vst [vmem:[%s9 + $0xa8] sm:$0xff] %v1430
    %1505 = vst [vmem:[%s9 + $0xb0] sm:$0xff] %v1435
    %1506 = vst [vmem:[%s9 + $0xb8] sm:$0xff] %v1440
    %1507 = vst [vmem:[%s9 + $0xc0] sm:$0xff] %v1445
    %1508 = vst [vmem:[%s9 + $0xc8] sm:$0xff] %v1450
    %1509 = vst [vmem:[%s9 + $0xd0] sm:$0xff] %v1455
    %1510 = vst [vmem:[%s9 + $0xd8] sm:$0xff] %v1460
    %1511 = vst [vmem:[%s9 + $0xe0] sm:$0xff] %v1465
    %1512 = vst [vmem:[%s9 + $0xe8] sm:$0xff] %v1470
    %1513 = vst [vmem:[%s9 + $0xf0] sm:$0xff] %v1475
    %1514 = vst [vmem:[%s9 + $0xf8] sm:$0xff] %v1480
  $region41: #{gnn_node_virtualnode_forward.3} parent=0 // pred_fallthru
    _
  // Predicated region
  $region42: #{gnn_node_virtualnode_forward.3} parent=0 // pred_check
    _
  $region43: #{gnn_node_virtualnode_forward.3} parent=0 // pred_check_branch
    %1516 = sbr.rel (0) target = $region45
  $region44: #{gnn_node_virtualnode_forward.3} parent=0 // pred_region
    _
  $region45: #{gnn_node_virtualnode_forward.3} parent=0 // pred_fallthru
    _
  // Predicated region
  $region46: #{gnn_node_virtualnode_forward.3} parent=0 // pred_check
    _
  $region47: #{gnn_node_virtualnode_forward.3} parent=0 // pred_check_branch
    %1518 = sbr.rel (0) target = $region49
  $region48: #{gnn_node_virtualnode_forward.3} parent=0 // pred_region
    _
  $region49: #{gnn_node_virtualnode_forward.3} parent=0 // pred_fallthru
    _

</llo_original>
